<compile_context>
chip_gen: v6e
topology: v6e:2x2x1
jax: 0.10.0
libtpu: 0.0.40
codegen_flags: <defaults>
</compile_context>

<pallas_src>
import numpy as np
import jax
import jax.numpy as jnp
from jax.experimental import pallas as pl
from jax.experimental.pallas import tpu as pltpu


# ----------------------------------------------------------------------------- kernel
def qnetwork_kernel(xt_ref, iw_ref, f_ref, m_ref, g_ref, wz_ref, out_ref):
    NQ, TB = xt_ref.shape
    D2 = f_ref.shape[1]          # 2 * 2**n_qubits  (re | im stacked along sublanes)
    L = m_ref.shape[0]

    # ---- data-dependent RX half-angles: tanh once per sample, one dense trig pass
    tx = jnp.tanh(xt_ref[...])                                  # (NQ, TB)
    txrep = jnp.concatenate([tx] * L, axis=0)                   # (L*NQ, TB), no extra EUP work
    ang = iw_ref[...] * txrep                                   # 0.5 * input_weights folded into iw_ref
    ca = jnp.cos(ang)
    sa = jnp.sin(ang)

    # ---- |0...0> initial state; column b = [re(psi_b) ; im(psi_b)]  (batch on lanes)
    row = jax.lax.broadcasted_iota(jnp.int32, (D2, TB), 0)
    S = jnp.where(row == 0, 1.0, 0.0).astype(jnp.float32)       # (D2, TB)

    for l in range(L):
        # RX data-reuploading gates on wires 0..NQ-2 (sign-folded flip-and-swap matmuls)
        for j in range(NQ - 1):
            k = l * NQ + j
            c = ca[k:k + 1, :]                                  # (1, TB) sublane broadcast
            s = sa[k:k + 1, :]
            S = c * S + s * jnp.dot(f_ref[j], S, preferred_element_type=jnp.float32)

        # last RX of the layer fused with the RY/RZ/CNOT-ring unitary:
        #   S <- c*(M_l @ S) + s*(G_l @ S),  G_l = M_l @ F_{NQ-1}
        # both matmuls share the same S (independent -> MXU pipelines them back-to-back)
        k = l * NQ + (NQ - 1)
        c = ca[k:k + 1, :]
        s = sa[k:k + 1, :]
        ms = jnp.dot(m_ref[l], S, preferred_element_type=jnp.float32)
        gs = jnp.dot(g_ref[l], S, preferred_element_type=jnp.float32)
        S = c * ms + s * gs

    # ---- <Z_k> * output_weights[k] for k < output_dim (zero-padded, lane-dense store)
    out_ref[...] = jnp.dot(wz_ref[...], S * S, preferred_element_type=jnp.float32)


# ------------------------------------------------------------------- structural consts
def make_constants(input_weights, theta, output_weights, n_qubits, output_dim, out_pad=128):
    """Sign-folded RX flip matrices, fused per-layer unitaries (+ last-RX composition),
    readout matrix, and half-angle input weights — all in column (left-multiply) form."""
    theta = np.asarray(theta, np.float64)
    iw = np.asarray(input_weights, np.float64)
    ow = np.asarray(output_weights, np.float64).reshape(output_dim)
    L = theta.shape[0]
    NQ = n_qubits
    D = 2 ** NQ
    D2 = 2 * D
    idx = np.arange(D)
    bits = (idx[:, None] >> np.arange(NQ)[None, :]) & 1          # (D, NQ), wire j = bit j

    # sign-folded flip-and-swap: (F_j @ S)[t] = (+1 if t<D else -1) * S[t ^ 2^j ^ D]
    t = np.arange(D2)
    sign = np.where(t < D, 1.0, -1.0)
    F = np.zeros((NQ, D2, D2), np.float32)
    for j in range(NQ):
        F[j, t, t ^ (1 << j) ^ D] = sign

    # composed CNOT ring permutation f(s): CNOT(0,1), CNOT(1,2), ..., CNOT(NQ-1,0)
    p = idx.copy()
    for i in range(NQ):
        p = p ^ (((p >> i) & 1) << ((i + 1) % NQ))
    Ring = np.zeros((D, D))
    Ring[p, idx] = 1.0                                            # Ring @ e_s = e_{f(s)}

    def full_1q(U2, wire):
        return np.kron(np.eye(2 ** (NQ - 1 - wire)), np.kron(U2, np.eye(2 ** wire)))

    # per-layer fused unitary U_l = Ring @ prod_i RZ(theta[l,i,1]) RY(theta[l,i,0]),
    # stored as real 2x2 block form M_l (column convention), plus G_l = M_l @ F_{NQ-1}
    M = np.zeros((L, D2, D2), np.float32)
    G = np.zeros((L, D2, D2), np.float32)
    for l in range(L):
        U = np.eye(D, dtype=np.complex128)
        for i in range(NQ):
            a, b = theta[l, i, 0], theta[l, i, 1]
            RY = np.array([[np.cos(a / 2), -np.sin(a / 2)],
                           [np.sin(a / 2),  np.cos(a / 2)]], dtype=np.complex128)
            RZ = np.diag([np.exp(-1j * b / 2), np.exp(1j * b / 2)])
            U = full_1q(RZ @ RY, i) @ U
        U = Ring @ U
        Ml = np.zeros((D2, D2))
        Ml[:D, :D] = U.real
        Ml[:D, D:] = -U.imag
        Ml[D:, :D] = U.imag
        Ml[D:, D:] = U.real
        M[l] = Ml
        G[l] = Ml @ F[NQ - 1].astype(np.float64)

    # readout: out = Wz @ (S*S); |amp|^2 = re^2 + im^2, Z signs and output_weights folded
    Wz = np.zeros((out_pad, D2), np.float32)
    zw = ((1.0 - 2.0 * bits[:, :output_dim]) * ow[None, :]).T     # (output_dim, D)
    Wz[:output_dim, :D] = zw
    Wz[:output_dim, D:] = zw

    # RX half-angle weights with the 1/2 folded in, laid out (L*NQ, 1)
    iw_half = (0.5 * iw).reshape(L * NQ, 1).astype(np.float32)
    return iw_half, F, M, G, Wz


# ------------------------------------------------------------------------------ wrapper
def qnetwork_forward(x, input_weights, theta, output_weights,
                     n_qubits, output_dim, n_layers):
    x = jnp.asarray(x, jnp.float32)
    B, NQ = x.shape
    assert NQ == n_qubits
    L = n_layers
    D2 = 2 * (2 ** n_qubits)
    OUT_PAD = 128

    iw_half, F, M, G, Wz = make_constants(input_weights, theta, output_weights,
                                          n_qubits, output_dim, OUT_PAD)

    # batch on the lane axis: pad to a lane-dense multiple of 128; prefer >=2 grid steps
    # (lets v7x's two TensorCores split the batch) before going to the 256-wide tile.
    B_pad = max(128, ((B + 127) // 128) * 128)
    TB = 256 if (B_pad % 256 == 0 and B_pad // 256 >= 2) else 128
    grid = (B_pad // TB,)

    xt = jnp.zeros((NQ, B_pad), jnp.float32).at[:, :B].set(x.T)

    out = pl.pallas_call(
        qnetwork_kernel,
        out_shape=jax.ShapeDtypeStruct((OUT_PAD, B_pad), jnp.float32),
        grid_spec=pltpu.PrefetchScalarGridSpec(
            num_scalar_prefetch=0,
            grid=grid,
            in_specs=[
                pl.BlockSpec((NQ, TB), lambda b: (0, b)),           # x^T (batch on lanes)
                pl.BlockSpec((L * NQ, 1), lambda b: (0, 0)),        # 0.5*input_weights, flat
                pl.BlockSpec((NQ, D2, D2), lambda b: (0, 0, 0)),    # sign-folded RX flips F_j
                pl.BlockSpec((L, D2, D2), lambda b: (0, 0, 0)),     # fused layer unitaries M_l
                pl.BlockSpec((L, D2, D2), lambda b: (0, 0, 0)),     # G_l = M_l @ F_last
                pl.BlockSpec((OUT_PAD, D2), lambda b: (0, 0)),      # readout matrix
            ],
            out_specs=pl.BlockSpec((OUT_PAD, TB), lambda b: (0, b)),
        ),
        compiler_params=pltpu.CompilerParams(
            dimension_semantics=("parallel",)),
    )(xt, jnp.asarray(iw_half), jnp.asarray(F), jnp.asarray(M),
      jnp.asarray(G), jnp.asarray(Wz))

    return out[:output_dim, :B].T


# -------------------------------------------------------------------- pure-numpy check
def reference_forward(x, iw, theta, ow, n_qubits, output_dim):
    D = 2 ** n_qubits
    tx = np.tanh(np.asarray(x, np.float64))

    def full_1q(U, j):
        return np.kron(np.eye(2 ** (n_qubits - 1 - j)), np.kron(U, np.eye(2 ** j)))

    def cnot_full(ctrl, tgt):
        M = np.zeros((D, D))
        for s in range(D):
            M[s ^ (((s >> ctrl) & 1) << tgt), s] = 1.0
        return M

    outs = []
    for b in range(tx.shape[0]):
        psi = np.zeros(D, np.complex128)
        psi[0] = 1.0
        for l in range(iw.shape[0]):
            for j in range(n_qubits):
                a = float(iw[l, j]) * tx[b, j]
                RX = np.array([[np.cos(a / 2), -1j * np.sin(a / 2)],
                               [-1j * np.sin(a / 2), np.cos(a / 2)]])
                psi = full_1q(RX, j) @ psi
            for i in range(n_qubits):
                a = float(theta[l, i, 0])
                RY = np.array([[np.cos(a / 2), -np.sin(a / 2)],
                               [np.sin(a / 2), np.cos(a / 2)]])
                psi = full_1q(RY, i) @ psi
                a = float(theta[l, i, 1])
                RZ = np.diag([np.exp(-1j * a / 2), np.exp(1j * a / 2)])
                psi = full_1q(RZ, i) @ psi
            for i in range(n_qubits):
                psi = cnot_full(i, (i + 1) % n_qubits) @ psi
        prob = np.abs(psi) ** 2
        bits = (np.arange(D)[:, None] >> np.arange(output_dim)[None, :]) & 1
        outs.append(prob @ (1.0 - 2.0 * bits))
    return np.asarray(ow, np.float64)[None, :] * np.stack(outs)


# --------------------------------------------------------------------------------- main
if __name__ == "__main__":
    n_qubits, output_dim, n_layers = 4, 2, 5
    batch = 4

    k0, k1, k2, k3 = jax.random.split(jax.random.PRNGKey(0), 4)
    input_weights = jax.random.normal(k0, (n_layers, n_qubits), jnp.float32)
    theta = jax.random.normal(k1, (n_layers, n_qubits, 2), jnp.float32)
    output_weights = jax.random.normal(k2, (output_dim,), jnp.float32)
    x = jax.random.normal(k3, (batch, n_qubits), jnp.float32)

    out = qnetwork_forward(x, input_weights, theta, output_weights,
                           n_qubits, output_dim, n_layers)
    out = jax.block_until_ready(out)

    ref = reference_forward(np.asarray(x), np.asarray(input_weights),
                            np.asarray(theta), np.asarray(output_weights),
                            n_qubits, output_dim)
    assert out.shape == (batch, output_dim)
    assert np.allclose(np.asarray(out), ref, atol=1e-4, rtol=1e-4), (out, ref)

    print("KERNEL_OK")
</pallas_src>

<mosaic_0001>
module attributes {stable_mosaic.version = 11 : i64} {
  func.func @qnetwork_kernel(%arg0: i32, %arg1: memref<4x128xf32, #tpu.memory_space<vmem>>, %arg2: memref<20x1xf32, #tpu.memory_space<vmem>>, %arg3: memref<4x32x32xf32, #tpu.memory_space<vmem>>, %arg4: memref<5x32x32xf32, #tpu.memory_space<vmem>>, %arg5: memref<5x32x32xf32, #tpu.memory_space<vmem>>, %arg6: memref<128x32xf32, #tpu.memory_space<vmem>>, %arg7: memref<128x128xf32, #tpu.memory_space<vmem>>) attributes {dimension_semantics = [#tpu.dimension_semantics<parallel>], iteration_bounds = array<i64: 1>, scalar_prefetch = 0 : i64, scratch_operands = 0 : i64, tpu.core_type = #tpu.core_type<tc>, window_params = [{transform_indices = @transform_0, window_bounds = array<i64: 4, 128>}, {pipeline_mode = #tpu.pipeline_mode<synchronous>, transform_indices = @transform_1, window_bounds = array<i64: 20, 1>}, {pipeline_mode = #tpu.pipeline_mode<synchronous>, transform_indices = @transform_2, window_bounds = array<i64: 4, 32, 32>}, {pipeline_mode = #tpu.pipeline_mode<synchronous>, transform_indices = @transform_3, window_bounds = array<i64: 5, 32, 32>}, {pipeline_mode = #tpu.pipeline_mode<synchronous>, transform_indices = @transform_4, window_bounds = array<i64: 5, 32, 32>}, {pipeline_mode = #tpu.pipeline_mode<synchronous>, transform_indices = @transform_5, window_bounds = array<i64: 128, 32>}, {transform_indices = @transform_6, window_bounds = array<i64: 128, 128>}]} {
    %c0 = arith.constant 0 : index
    %c0_0 = arith.constant 0 : index
    %0 = vector.load %arg1[%c0, %c0_0] : memref<4x128xf32, #tpu.memory_space<vmem>>, vector<4x128xf32>
    %1 = math.tanh %0 : vector<4x128xf32>
    %2 = tpu.concatenate %1, %1, %1, %1, %1 in 0 : vector<4x128xf32>, vector<4x128xf32>, vector<4x128xf32>, vector<4x128xf32>, vector<4x128xf32> -> vector<20x128xf32>
    %c0_1 = arith.constant 0 : index
    %c0_2 = arith.constant 0 : index
    %3 = vector.load %arg2[%c0_1, %c0_2] : memref<20x1xf32, #tpu.memory_space<vmem>>, vector<20x1xf32>
    %4 = vector.broadcast %3 : vector<20x1xf32> to vector<20x128xf32>
    %5 = arith.mulf %4, %2 : vector<20x128xf32>
    %6 = math.cos %5 : vector<20x128xf32>
    %7 = math.sin %5 : vector<20x128xf32>
    %8 = tpu.iota {dimensions = array<i32: 0>} : vector<32x128xi32>
    %c0_i32 = arith.constant 0 : i32
    %9 = vector.broadcast %c0_i32 : i32 to vector<32x128xi32>
    %10 = arith.cmpi eq, %8, %9 : vector<32x128xi32>
    %cst = arith.constant 1.000000e+00 : f32
    %cst_3 = arith.constant 0.000000e+00 : f32
    %11 = vector.broadcast %cst : f32 to vector<32x128xf32>
    %12 = vector.broadcast %cst_3 : f32 to vector<32x128xf32>
    %13 = arith.select %10, %11, %12 : vector<32x128xi1>, vector<32x128xf32>
    %14 = vector.extract_strided_slice %6 {offsets = [0, 0], sizes = [1, 128], strides = [1, 1]} : vector<20x128xf32> to vector<1x128xf32>
    %15 = vector.extract_strided_slice %7 {offsets = [0, 0], sizes = [1, 128], strides = [1, 1]} : vector<20x128xf32> to vector<1x128xf32>
    %16 = vector.broadcast %14 : vector<1x128xf32> to vector<32x128xf32>
    %17 = arith.mulf %16, %13 : vector<32x128xf32>
    %c0_4 = arith.constant 0 : index
    %c0_5 = arith.constant 0 : index
    %c0_6 = arith.constant 0 : index
    %18 = vector.load %arg3[%c0_4, %c0_5, %c0_6] : memref<4x32x32xf32, #tpu.memory_space<vmem>>, vector<1x32x32xf32>
    %19 = vector.shape_cast %18 : vector<1x32x32xf32> to vector<32x32xf32>
    %cst_7 = arith.constant dense<0.000000e+00> : vector<32x128xf32>
    %20 = tpu.matmul %19, %13, %cst_7 {dimension_numbers = #tpu.dot_dimension_numbers<[1], [0], [0], [1], [0, 0, 1, 1], [], []>} : vector<32x32xf32>, vector<32x128xf32>, vector<32x128xf32> -> vector<32x128xf32>
    %21 = vector.broadcast %15 : vector<1x128xf32> to vector<32x128xf32>
    %22 = arith.mulf %21, %20 : vector<32x128xf32>
    %23 = arith.addf %17, %22 : vector<32x128xf32>
    %24 = vector.extract_strided_slice %6 {offsets = [1, 0], sizes = [1, 128], strides = [1, 1]} : vector<20x128xf32> to vector<1x128xf32>
    %25 = vector.extract_strided_slice %7 {offsets = [1, 0], sizes = [1, 128], strides = [1, 1]} : vector<20x128xf32> to vector<1x128xf32>
    %26 = vector.broadcast %24 : vector<1x128xf32> to vector<32x128xf32>
    %27 = arith.mulf %26, %23 : vector<32x128xf32>
    %c1 = arith.constant 1 : index
    %c0_8 = arith.constant 0 : index
    %c0_9 = arith.constant 0 : index
    %28 = vector.load %arg3[%c1, %c0_8, %c0_9] : memref<4x32x32xf32, #tpu.memory_space<vmem>>, vector<1x32x32xf32>
    %29 = vector.shape_cast %28 : vector<1x32x32xf32> to vector<32x32xf32>
    %cst_10 = arith.constant dense<0.000000e+00> : vector<32x128xf32>
    %30 = tpu.matmul %29, %23, %cst_10 {dimension_numbers = #tpu.dot_dimension_numbers<[1], [0], [0], [1], [0, 0, 1, 1], [], []>} : vector<32x32xf32>, vector<32x128xf32>, vector<32x128xf32> -> vector<32x128xf32>
    %31 = vector.broadcast %25 : vector<1x128xf32> to vector<32x128xf32>
    %32 = arith.mulf %31, %30 : vector<32x128xf32>
    %33 = arith.addf %27, %32 : vector<32x128xf32>
    %34 = vector.extract_strided_slice %6 {offsets = [2, 0], sizes = [1, 128], strides = [1, 1]} : vector<20x128xf32> to vector<1x128xf32>
    %35 = vector.extract_strided_slice %7 {offsets = [2, 0], sizes = [1, 128], strides = [1, 1]} : vector<20x128xf32> to vector<1x128xf32>
    %36 = vector.broadcast %34 : vector<1x128xf32> to vector<32x128xf32>
    %37 = arith.mulf %36, %33 : vector<32x128xf32>
    %c2 = arith.constant 2 : index
    %c0_11 = arith.constant 0 : index
    %c0_12 = arith.constant 0 : index
    %38 = vector.load %arg3[%c2, %c0_11, %c0_12] : memref<4x32x32xf32, #tpu.memory_space<vmem>>, vector<1x32x32xf32>
    %39 = vector.shape_cast %38 : vector<1x32x32xf32> to vector<32x32xf32>
    %cst_13 = arith.constant dense<0.000000e+00> : vector<32x128xf32>
    %40 = tpu.matmul %39, %33, %cst_13 {dimension_numbers = #tpu.dot_dimension_numbers<[1], [0], [0], [1], [0, 0, 1, 1], [], []>} : vector<32x32xf32>, vector<32x128xf32>, vector<32x128xf32> -> vector<32x128xf32>
    %41 = vector.broadcast %35 : vector<1x128xf32> to vector<32x128xf32>
    %42 = arith.mulf %41, %40 : vector<32x128xf32>
    %43 = arith.addf %37, %42 : vector<32x128xf32>
    %44 = vector.extract_strided_slice %6 {offsets = [3, 0], sizes = [1, 128], strides = [1, 1]} : vector<20x128xf32> to vector<1x128xf32>
    %45 = vector.extract_strided_slice %7 {offsets = [3, 0], sizes = [1, 128], strides = [1, 1]} : vector<20x128xf32> to vector<1x128xf32>
    %c0_14 = arith.constant 0 : index
    %c0_15 = arith.constant 0 : index
    %c0_16 = arith.constant 0 : index
    %46 = vector.load %arg4[%c0_14, %c0_15, %c0_16] : memref<5x32x32xf32, #tpu.memory_space<vmem>>, vector<1x32x32xf32>
    %47 = vector.shape_cast %46 : vector<1x32x32xf32> to vector<32x32xf32>
    %cst_17 = arith.constant dense<0.000000e+00> : vector<32x128xf32>
    %48 = tpu.matmul %47, %43, %cst_17 {dimension_numbers = #tpu.dot_dimension_numbers<[1], [0], [0], [1], [0, 0, 1, 1], [], []>} : vector<32x32xf32>, vector<32x128xf32>, vector<32x128xf32> -> vector<32x128xf32>
    %c0_18 = arith.constant 0 : index
    %c0_19 = arith.constant 0 : index
    %c0_20 = arith.constant 0 : index
    %49 = vector.load %arg5[%c0_18, %c0_19, %c0_20] : memref<5x32x32xf32, #tpu.memory_space<vmem>>, vector<1x32x32xf32>
    %50 = vector.shape_cast %49 : vector<1x32x32xf32> to vector<32x32xf32>
    %cst_21 = arith.constant dense<0.000000e+00> : vector<32x128xf32>
    %51 = tpu.matmul %50, %43, %cst_21 {dimension_numbers = #tpu.dot_dimension_numbers<[1], [0], [0], [1], [0, 0, 1, 1], [], []>} : vector<32x32xf32>, vector<32x128xf32>, vector<32x128xf32> -> vector<32x128xf32>
    %52 = vector.broadcast %44 : vector<1x128xf32> to vector<32x128xf32>
    %53 = arith.mulf %52, %48 : vector<32x128xf32>
    %54 = vector.broadcast %45 : vector<1x128xf32> to vector<32x128xf32>
    %55 = arith.mulf %54, %51 : vector<32x128xf32>
    %56 = arith.addf %53, %55 : vector<32x128xf32>
    %57 = vector.extract_strided_slice %6 {offsets = [4, 0], sizes = [1, 128], strides = [1, 1]} : vector<20x128xf32> to vector<1x128xf32>
    %58 = vector.extract_strided_slice %7 {offsets = [4, 0], sizes = [1, 128], strides = [1, 1]} : vector<20x128xf32> to vector<1x128xf32>
    %59 = vector.broadcast %57 : vector<1x128xf32> to vector<32x128xf32>
    %60 = arith.mulf %59, %56 : vector<32x128xf32>
    %c0_22 = arith.constant 0 : index
    %c0_23 = arith.constant 0 : index
    %c0_24 = arith.constant 0 : index
    %61 = vector.load %arg3[%c0_22, %c0_23, %c0_24] : memref<4x32x32xf32, #tpu.memory_space<vmem>>, vector<1x32x32xf32>
    %62 = vector.shape_cast %61 : vector<1x32x32xf32> to vector<32x32xf32>
    %cst_25 = arith.constant dense<0.000000e+00> : vector<32x128xf32>
    %63 = tpu.matmul %62, %56, %cst_25 {dimension_numbers = #tpu.dot_dimension_numbers<[1], [0], [0], [1], [0, 0, 1, 1], [], []>} : vector<32x32xf32>, vector<32x128xf32>, vector<32x128xf32> -> vector<32x128xf32>
    %64 = vector.broadcast %58 : vector<1x128xf32> to vector<32x128xf32>
    %65 = arith.mulf %64, %63 : vector<32x128xf32>
    %66 = arith.addf %60, %65 : vector<32x128xf32>
    %67 = vector.extract_strided_slice %6 {offsets = [5, 0], sizes = [1, 128], strides = [1, 1]} : vector<20x128xf32> to vector<1x128xf32>
    %68 = vector.extract_strided_slice %7 {offsets = [5, 0], sizes = [1, 128], strides = [1, 1]} : vector<20x128xf32> to vector<1x128xf32>
    %69 = vector.broadcast %67 : vector<1x128xf32> to vector<32x128xf32>
    %70 = arith.mulf %69, %66 : vector<32x128xf32>
    %c1_26 = arith.constant 1 : index
    %c0_27 = arith.constant 0 : index
    %c0_28 = arith.constant 0 : index
    %71 = vector.load %arg3[%c1_26, %c0_27, %c0_28] : memref<4x32x32xf32, #tpu.memory_space<vmem>>, vector<1x32x32xf32>
    %72 = vector.shape_cast %71 : vector<1x32x32xf32> to vector<32x32xf32>
    %cst_29 = arith.constant dense<0.000000e+00> : vector<32x128xf32>
    %73 = tpu.matmul %72, %66, %cst_29 {dimension_numbers = #tpu.dot_dimension_numbers<[1], [0], [0], [1], [0, 0, 1, 1], [], []>} : vector<32x32xf32>, vector<32x128xf32>, vector<32x128xf32> -> vector<32x128xf32>
    %74 = vector.broadcast %68 : vector<1x128xf32> to vector<32x128xf32>
    %75 = arith.mulf %74, %73 : vector<32x128xf32>
    %76 = arith.addf %70, %75 : vector<32x128xf32>
    %77 = vector.extract_strided_slice %6 {offsets = [6, 0], sizes = [1, 128], strides = [1, 1]} : vector<20x128xf32> to vector<1x128xf32>
    %78 = vector.extract_strided_slice %7 {offsets = [6, 0], sizes = [1, 128], strides = [1, 1]} : vector<20x128xf32> to vector<1x128xf32>
    %79 = vector.broadcast %77 : vector<1x128xf32> to vector<32x128xf32>
    %80 = arith.mulf %79, %76 : vector<32x128xf32>
    %c2_30 = arith.constant 2 : index
    %c0_31 = arith.constant 0 : index
    %c0_32 = arith.constant 0 : index
    %81 = vector.load %arg3[%c2_30, %c0_31, %c0_32] : memref<4x32x32xf32, #tpu.memory_space<vmem>>, vector<1x32x32xf32>
    %82 = vector.shape_cast %81 : vector<1x32x32xf32> to vector<32x32xf32>
    %cst_33 = arith.constant dense<0.000000e+00> : vector<32x128xf32>
    %83 = tpu.matmul %82, %76, %cst_33 {dimension_numbers = #tpu.dot_dimension_numbers<[1], [0], [0], [1], [0, 0, 1, 1], [], []>} : vector<32x32xf32>, vector<32x128xf32>, vector<32x128xf32> -> vector<32x128xf32>
    %84 = vector.broadcast %78 : vector<1x128xf32> to vector<32x128xf32>
    %85 = arith.mulf %84, %83 : vector<32x128xf32>
    %86 = arith.addf %80, %85 : vector<32x128xf32>
    %87 = vector.extract_strided_slice %6 {offsets = [7, 0], sizes = [1, 128], strides = [1, 1]} : vector<20x128xf32> to vector<1x128xf32>
    %88 = vector.extract_strided_slice %7 {offsets = [7, 0], sizes = [1, 128], strides = [1, 1]} : vector<20x128xf32> to vector<1x128xf32>
    %c1_34 = arith.constant 1 : index
    %c0_35 = arith.constant 0 : index
    %c0_36 = arith.constant 0 : index
    %89 = vector.load %arg4[%c1_34, %c0_35, %c0_36] : memref<5x32x32xf32, #tpu.memory_space<vmem>>, vector<1x32x32xf32>
    %90 = vector.shape_cast %89 : vector<1x32x32xf32> to vector<32x32xf32>
    %cst_37 = arith.constant dense<0.000000e+00> : vector<32x128xf32>
    %91 = tpu.matmul %90, %86, %cst_37 {dimension_numbers = #tpu.dot_dimension_numbers<[1], [0], [0], [1], [0, 0, 1, 1], [], []>} : vector<32x32xf32>, vector<32x128xf32>, vector<32x128xf32> -> vector<32x128xf32>
    %c1_38 = arith.constant 1 : index
    %c0_39 = arith.constant 0 : index
    %c0_40 = arith.constant 0 : index
    %92 = vector.load %arg5[%c1_38, %c0_39, %c0_40] : memref<5x32x32xf32, #tpu.memory_space<vmem>>, vector<1x32x32xf32>
    %93 = vector.shape_cast %92 : vector<1x32x32xf32> to vector<32x32xf32>
    %cst_41 = arith.constant dense<0.000000e+00> : vector<32x128xf32>
    %94 = tpu.matmul %93, %86, %cst_41 {dimension_numbers = #tpu.dot_dimension_numbers<[1], [0], [0], [1], [0, 0, 1, 1], [], []>} : vector<32x32xf32>, vector<32x128xf32>, vector<32x128xf32> -> vector<32x128xf32>
    %95 = vector.broadcast %87 : vector<1x128xf32> to vector<32x128xf32>
    %96 = arith.mulf %95, %91 : vector<32x128xf32>
    %97 = vector.broadcast %88 : vector<1x128xf32> to vector<32x128xf32>
    %98 = arith.mulf %97, %94 : vector<32x128xf32>
    %99 = arith.addf %96, %98 : vector<32x128xf32>
    %100 = vector.extract_strided_slice %6 {offsets = [8, 0], sizes = [1, 128], strides = [1, 1]} : vector<20x128xf32> to vector<1x128xf32>
    %101 = vector.extract_strided_slice %7 {offsets = [8, 0], sizes = [1, 128], strides = [1, 1]} : vector<20x128xf32> to vector<1x128xf32>
    %102 = vector.broadcast %100 : vector<1x128xf32> to vector<32x128xf32>
    %103 = arith.mulf %102, %99 : vector<32x128xf32>
    %c0_42 = arith.constant 0 : index
    %c0_43 = arith.constant 0 : index
    %c0_44 = arith.constant 0 : index
    %104 = vector.load %arg3[%c0_42, %c0_43, %c0_44] : memref<4x32x32xf32, #tpu.memory_space<vmem>>, vector<1x32x32xf32>
    %105 = vector.shape_cast %104 : vector<1x32x32xf32> to vector<32x32xf32>
    %cst_45 = arith.constant dense<0.000000e+00> : vector<32x128xf32>
    %106 = tpu.matmul %105, %99, %cst_45 {dimension_numbers = #tpu.dot_dimension_numbers<[1], [0], [0], [1], [0, 0, 1, 1], [], []>} : vector<32x32xf32>, vector<32x128xf32>, vector<32x128xf32> -> vector<32x128xf32>
    %107 = vector.broadcast %101 : vector<1x128xf32> to vector<32x128xf32>
    %108 = arith.mulf %107, %106 : vector<32x128xf32>
    %109 = arith.addf %103, %108 : vector<32x128xf32>
    %110 = vector.extract_strided_slice %6 {offsets = [9, 0], sizes = [1, 128], strides = [1, 1]} : vector<20x128xf32> to vector<1x128xf32>
    %111 = vector.extract_strided_slice %7 {offsets = [9, 0], sizes = [1, 128], strides = [1, 1]} : vector<20x128xf32> to vector<1x128xf32>
    %112 = vector.broadcast %110 : vector<1x128xf32> to vector<32x128xf32>
    %113 = arith.mulf %112, %109 : vector<32x128xf32>
    %c1_46 = arith.constant 1 : index
    %c0_47 = arith.constant 0 : index
    %c0_48 = arith.constant 0 : index
    %114 = vector.load %arg3[%c1_46, %c0_47, %c0_48] : memref<4x32x32xf32, #tpu.memory_space<vmem>>, vector<1x32x32xf32>
    %115 = vector.shape_cast %114 : vector<1x32x32xf32> to vector<32x32xf32>
    %cst_49 = arith.constant dense<0.000000e+00> : vector<32x128xf32>
    %116 = tpu.matmul %115, %109, %cst_49 {dimension_numbers = #tpu.dot_dimension_numbers<[1], [0], [0], [1], [0, 0, 1, 1], [], []>} : vector<32x32xf32>, vector<32x128xf32>, vector<32x128xf32> -> vector<32x128xf32>
    %117 = vector.broadcast %111 : vector<1x128xf32> to vector<32x128xf32>
    %118 = arith.mulf %117, %116 : vector<32x128xf32>
    %119 = arith.addf %113, %118 : vector<32x128xf32>
    %120 = vector.extract_strided_slice %6 {offsets = [10, 0], sizes = [1, 128], strides = [1, 1]} : vector<20x128xf32> to vector<1x128xf32>
    %121 = vector.extract_strided_slice %7 {offsets = [10, 0], sizes = [1, 128], strides = [1, 1]} : vector<20x128xf32> to vector<1x128xf32>
    %122 = vector.broadcast %120 : vector<1x128xf32> to vector<32x128xf32>
    %123 = arith.mulf %122, %119 : vector<32x128xf32>
    %c2_50 = arith.constant 2 : index
    %c0_51 = arith.constant 0 : index
    %c0_52 = arith.constant 0 : index
    %124 = vector.load %arg3[%c2_50, %c0_51, %c0_52] : memref<4x32x32xf32, #tpu.memory_space<vmem>>, vector<1x32x32xf32>
    %125 = vector.shape_cast %124 : vector<1x32x32xf32> to vector<32x32xf32>
    %cst_53 = arith.constant dense<0.000000e+00> : vector<32x128xf32>
    %126 = tpu.matmul %125, %119, %cst_53 {dimension_numbers = #tpu.dot_dimension_numbers<[1], [0], [0], [1], [0, 0, 1, 1], [], []>} : vector<32x32xf32>, vector<32x128xf32>, vector<32x128xf32> -> vector<32x128xf32>
    %127 = vector.broadcast %121 : vector<1x128xf32> to vector<32x128xf32>
    %128 = arith.mulf %127, %126 : vector<32x128xf32>
    %129 = arith.addf %123, %128 : vector<32x128xf32>
    %130 = vector.extract_strided_slice %6 {offsets = [11, 0], sizes = [1, 128], strides = [1, 1]} : vector<20x128xf32> to vector<1x128xf32>
    %131 = vector.extract_strided_slice %7 {offsets = [11, 0], sizes = [1, 128], strides = [1, 1]} : vector<20x128xf32> to vector<1x128xf32>
    %c2_54 = arith.constant 2 : index
    %c0_55 = arith.constant 0 : index
    %c0_56 = arith.constant 0 : index
    %132 = vector.load %arg4[%c2_54, %c0_55, %c0_56] : memref<5x32x32xf32, #tpu.memory_space<vmem>>, vector<1x32x32xf32>
    %133 = vector.shape_cast %132 : vector<1x32x32xf32> to vector<32x32xf32>
    %cst_57 = arith.constant dense<0.000000e+00> : vector<32x128xf32>
    %134 = tpu.matmul %133, %129, %cst_57 {dimension_numbers = #tpu.dot_dimension_numbers<[1], [0], [0], [1], [0, 0, 1, 1], [], []>} : vector<32x32xf32>, vector<32x128xf32>, vector<32x128xf32> -> vector<32x128xf32>
    %c2_58 = arith.constant 2 : index
    %c0_59 = arith.constant 0 : index
    %c0_60 = arith.constant 0 : index
    %135 = vector.load %arg5[%c2_58, %c0_59, %c0_60] : memref<5x32x32xf32, #tpu.memory_space<vmem>>, vector<1x32x32xf32>
    %136 = vector.shape_cast %135 : vector<1x32x32xf32> to vector<32x32xf32>
    %cst_61 = arith.constant dense<0.000000e+00> : vector<32x128xf32>
    %137 = tpu.matmul %136, %129, %cst_61 {dimension_numbers = #tpu.dot_dimension_numbers<[1], [0], [0], [1], [0, 0, 1, 1], [], []>} : vector<32x32xf32>, vector<32x128xf32>, vector<32x128xf32> -> vector<32x128xf32>
    %138 = vector.broadcast %130 : vector<1x128xf32> to vector<32x128xf32>
    %139 = arith.mulf %138, %134 : vector<32x128xf32>
    %140 = vector.broadcast %131 : vector<1x128xf32> to vector<32x128xf32>
    %141 = arith.mulf %140, %137 : vector<32x128xf32>
    %142 = arith.addf %139, %141 : vector<32x128xf32>
    %143 = vector.extract_strided_slice %6 {offsets = [12, 0], sizes = [1, 128], strides = [1, 1]} : vector<20x128xf32> to vector<1x128xf32>
    %144 = vector.extract_strided_slice %7 {offsets = [12, 0], sizes = [1, 128], strides = [1, 1]} : vector<20x128xf32> to vector<1x128xf32>
    %145 = vector.broadcast %143 : vector<1x128xf32> to vector<32x128xf32>
    %146 = arith.mulf %145, %142 : vector<32x128xf32>
    %c0_62 = arith.constant 0 : index
    %c0_63 = arith.constant 0 : index
    %c0_64 = arith.constant 0 : index
    %147 = vector.load %arg3[%c0_62, %c0_63, %c0_64] : memref<4x32x32xf32, #tpu.memory_space<vmem>>, vector<1x32x32xf32>
    %148 = vector.shape_cast %147 : vector<1x32x32xf32> to vector<32x32xf32>
    %cst_65 = arith.constant dense<0.000000e+00> : vector<32x128xf32>
    %149 = tpu.matmul %148, %142, %cst_65 {dimension_numbers = #tpu.dot_dimension_numbers<[1], [0], [0], [1], [0, 0, 1, 1], [], []>} : vector<32x32xf32>, vector<32x128xf32>, vector<32x128xf32> -> vector<32x128xf32>
    %150 = vector.broadcast %144 : vector<1x128xf32> to vector<32x128xf32>
    %151 = arith.mulf %150, %149 : vector<32x128xf32>
    %152 = arith.addf %146, %151 : vector<32x128xf32>
    %153 = vector.extract_strided_slice %6 {offsets = [13, 0], sizes = [1, 128], strides = [1, 1]} : vector<20x128xf32> to vector<1x128xf32>
    %154 = vector.extract_strided_slice %7 {offsets = [13, 0], sizes = [1, 128], strides = [1, 1]} : vector<20x128xf32> to vector<1x128xf32>
    %155 = vector.broadcast %153 : vector<1x128xf32> to vector<32x128xf32>
    %156 = arith.mulf %155, %152 : vector<32x128xf32>
    %c1_66 = arith.constant 1 : index
    %c0_67 = arith.constant 0 : index
    %c0_68 = arith.constant 0 : index
    %157 = vector.load %arg3[%c1_66, %c0_67, %c0_68] : memref<4x32x32xf32, #tpu.memory_space<vmem>>, vector<1x32x32xf32>
    %158 = vector.shape_cast %157 : vector<1x32x32xf32> to vector<32x32xf32>
    %cst_69 = arith.constant dense<0.000000e+00> : vector<32x128xf32>
    %159 = tpu.matmul %158, %152, %cst_69 {dimension_numbers = #tpu.dot_dimension_numbers<[1], [0], [0], [1], [0, 0, 1, 1], [], []>} : vector<32x32xf32>, vector<32x128xf32>, vector<32x128xf32> -> vector<32x128xf32>
    %160 = vector.broadcast %154 : vector<1x128xf32> to vector<32x128xf32>
    %161 = arith.mulf %160, %159 : vector<32x128xf32>
    %162 = arith.addf %156, %161 : vector<32x128xf32>
    %163 = vector.extract_strided_slice %6 {offsets = [14, 0], sizes = [1, 128], strides = [1, 1]} : vector<20x128xf32> to vector<1x128xf32>
    %164 = vector.extract_strided_slice %7 {offsets = [14, 0], sizes = [1, 128], strides = [1, 1]} : vector<20x128xf32> to vector<1x128xf32>
    %165 = vector.broadcast %163 : vector<1x128xf32> to vector<32x128xf32>
    %166 = arith.mulf %165, %162 : vector<32x128xf32>
    %c2_70 = arith.constant 2 : index
    %c0_71 = arith.constant 0 : index
    %c0_72 = arith.constant 0 : index
    %167 = vector.load %arg3[%c2_70, %c0_71, %c0_72] : memref<4x32x32xf32, #tpu.memory_space<vmem>>, vector<1x32x32xf32>
    %168 = vector.shape_cast %167 : vector<1x32x32xf32> to vector<32x32xf32>
    %cst_73 = arith.constant dense<0.000000e+00> : vector<32x128xf32>
    %169 = tpu.matmul %168, %162, %cst_73 {dimension_numbers = #tpu.dot_dimension_numbers<[1], [0], [0], [1], [0, 0, 1, 1], [], []>} : vector<32x32xf32>, vector<32x128xf32>, vector<32x128xf32> -> vector<32x128xf32>
    %170 = vector.broadcast %164 : vector<1x128xf32> to vector<32x128xf32>
    %171 = arith.mulf %170, %169 : vector<32x128xf32>
    %172 = arith.addf %166, %171 : vector<32x128xf32>
    %173 = vector.extract_strided_slice %6 {offsets = [15, 0], sizes = [1, 128], strides = [1, 1]} : vector<20x128xf32> to vector<1x128xf32>
    %174 = vector.extract_strided_slice %7 {offsets = [15, 0], sizes = [1, 128], strides = [1, 1]} : vector<20x128xf32> to vector<1x128xf32>
    %c3 = arith.constant 3 : index
    %c0_74 = arith.constant 0 : index
    %c0_75 = arith.constant 0 : index
    %175 = vector.load %arg4[%c3, %c0_74, %c0_75] : memref<5x32x32xf32, #tpu.memory_space<vmem>>, vector<1x32x32xf32>
    %176 = vector.shape_cast %175 : vector<1x32x32xf32> to vector<32x32xf32>
    %cst_76 = arith.constant dense<0.000000e+00> : vector<32x128xf32>
    %177 = tpu.matmul %176, %172, %cst_76 {dimension_numbers = #tpu.dot_dimension_numbers<[1], [0], [0], [1], [0, 0, 1, 1], [], []>} : vector<32x32xf32>, vector<32x128xf32>, vector<32x128xf32> -> vector<32x128xf32>
    %c3_77 = arith.constant 3 : index
    %c0_78 = arith.constant 0 : index
    %c0_79 = arith.constant 0 : index
    %178 = vector.load %arg5[%c3_77, %c0_78, %c0_79] : memref<5x32x32xf32, #tpu.memory_space<vmem>>, vector<1x32x32xf32>
    %179 = vector.shape_cast %178 : vector<1x32x32xf32> to vector<32x32xf32>
    %cst_80 = arith.constant dense<0.000000e+00> : vector<32x128xf32>
    %180 = tpu.matmul %179, %172, %cst_80 {dimension_numbers = #tpu.dot_dimension_numbers<[1], [0], [0], [1], [0, 0, 1, 1], [], []>} : vector<32x32xf32>, vector<32x128xf32>, vector<32x128xf32> -> vector<32x128xf32>
    %181 = vector.broadcast %173 : vector<1x128xf32> to vector<32x128xf32>
    %182 = arith.mulf %181, %177 : vector<32x128xf32>
    %183 = vector.broadcast %174 : vector<1x128xf32> to vector<32x128xf32>
    %184 = arith.mulf %183, %180 : vector<32x128xf32>
    %185 = arith.addf %182, %184 : vector<32x128xf32>
    %186 = vector.extract_strided_slice %6 {offsets = [16, 0], sizes = [1, 128], strides = [1, 1]} : vector<20x128xf32> to vector<1x128xf32>
    %187 = vector.extract_strided_slice %7 {offsets = [16, 0], sizes = [1, 128], strides = [1, 1]} : vector<20x128xf32> to vector<1x128xf32>
    %188 = vector.broadcast %186 : vector<1x128xf32> to vector<32x128xf32>
    %189 = arith.mulf %188, %185 : vector<32x128xf32>
    %c0_81 = arith.constant 0 : index
    %c0_82 = arith.constant 0 : index
    %c0_83 = arith.constant 0 : index
    %190 = vector.load %arg3[%c0_81, %c0_82, %c0_83] : memref<4x32x32xf32, #tpu.memory_space<vmem>>, vector<1x32x32xf32>
    %191 = vector.shape_cast %190 : vector<1x32x32xf32> to vector<32x32xf32>
    %cst_84 = arith.constant dense<0.000000e+00> : vector<32x128xf32>
    %192 = tpu.matmul %191, %185, %cst_84 {dimension_numbers = #tpu.dot_dimension_numbers<[1], [0], [0], [1], [0, 0, 1, 1], [], []>} : vector<32x32xf32>, vector<32x128xf32>, vector<32x128xf32> -> vector<32x128xf32>
    %193 = vector.broadcast %187 : vector<1x128xf32> to vector<32x128xf32>
    %194 = arith.mulf %193, %192 : vector<32x128xf32>
    %195 = arith.addf %189, %194 : vector<32x128xf32>
    %196 = vector.extract_strided_slice %6 {offsets = [17, 0], sizes = [1, 128], strides = [1, 1]} : vector<20x128xf32> to vector<1x128xf32>
    %197 = vector.extract_strided_slice %7 {offsets = [17, 0], sizes = [1, 128], strides = [1, 1]} : vector<20x128xf32> to vector<1x128xf32>
    %198 = vector.broadcast %196 : vector<1x128xf32> to vector<32x128xf32>
    %199 = arith.mulf %198, %195 : vector<32x128xf32>
    %c1_85 = arith.constant 1 : index
    %c0_86 = arith.constant 0 : index
    %c0_87 = arith.constant 0 : index
    %200 = vector.load %arg3[%c1_85, %c0_86, %c0_87] : memref<4x32x32xf32, #tpu.memory_space<vmem>>, vector<1x32x32xf32>
    %201 = vector.shape_cast %200 : vector<1x32x32xf32> to vector<32x32xf32>
    %cst_88 = arith.constant dense<0.000000e+00> : vector<32x128xf32>
    %202 = tpu.matmul %201, %195, %cst_88 {dimension_numbers = #tpu.dot_dimension_numbers<[1], [0], [0], [1], [0, 0, 1, 1], [], []>} : vector<32x32xf32>, vector<32x128xf32>, vector<32x128xf32> -> vector<32x128xf32>
    %203 = vector.broadcast %197 : vector<1x128xf32> to vector<32x128xf32>
    %204 = arith.mulf %203, %202 : vector<32x128xf32>
    %205 = arith.addf %199, %204 : vector<32x128xf32>
    %206 = vector.extract_strided_slice %6 {offsets = [18, 0], sizes = [1, 128], strides = [1, 1]} : vector<20x128xf32> to vector<1x128xf32>
    %207 = vector.extract_strided_slice %7 {offsets = [18, 0], sizes = [1, 128], strides = [1, 1]} : vector<20x128xf32> to vector<1x128xf32>
    %208 = vector.broadcast %206 : vector<1x128xf32> to vector<32x128xf32>
    %209 = arith.mulf %208, %205 : vector<32x128xf32>
    %c2_89 = arith.constant 2 : index
    %c0_90 = arith.constant 0 : index
    %c0_91 = arith.constant 0 : index
    %210 = vector.load %arg3[%c2_89, %c0_90, %c0_91] : memref<4x32x32xf32, #tpu.memory_space<vmem>>, vector<1x32x32xf32>
    %211 = vector.shape_cast %210 : vector<1x32x32xf32> to vector<32x32xf32>
    %cst_92 = arith.constant dense<0.000000e+00> : vector<32x128xf32>
    %212 = tpu.matmul %211, %205, %cst_92 {dimension_numbers = #tpu.dot_dimension_numbers<[1], [0], [0], [1], [0, 0, 1, 1], [], []>} : vector<32x32xf32>, vector<32x128xf32>, vector<32x128xf32> -> vector<32x128xf32>
    %213 = vector.broadcast %207 : vector<1x128xf32> to vector<32x128xf32>
    %214 = arith.mulf %213, %212 : vector<32x128xf32>
    %215 = arith.addf %209, %214 : vector<32x128xf32>
    %216 = vector.extract_strided_slice %6 {offsets = [19, 0], sizes = [1, 128], strides = [1, 1]} : vector<20x128xf32> to vector<1x128xf32>
    %217 = vector.extract_strided_slice %7 {offsets = [19, 0], sizes = [1, 128], strides = [1, 1]} : vector<20x128xf32> to vector<1x128xf32>
    %c4 = arith.constant 4 : index
    %c0_93 = arith.constant 0 : index
    %c0_94 = arith.constant 0 : index
    %218 = vector.load %arg4[%c4, %c0_93, %c0_94] : memref<5x32x32xf32, #tpu.memory_space<vmem>>, vector<1x32x32xf32>
    %219 = vector.shape_cast %218 : vector<1x32x32xf32> to vector<32x32xf32>
    %cst_95 = arith.constant dense<0.000000e+00> : vector<32x128xf32>
    %220 = tpu.matmul %219, %215, %cst_95 {dimension_numbers = #tpu.dot_dimension_numbers<[1], [0], [0], [1], [0, 0, 1, 1], [], []>} : vector<32x32xf32>, vector<32x128xf32>, vector<32x128xf32> -> vector<32x128xf32>
    %c4_96 = arith.constant 4 : index
    %c0_97 = arith.constant 0 : index
    %c0_98 = arith.constant 0 : index
    %221 = vector.load %arg5[%c4_96, %c0_97, %c0_98] : memref<5x32x32xf32, #tpu.memory_space<vmem>>, vector<1x32x32xf32>
    %222 = vector.shape_cast %221 : vector<1x32x32xf32> to vector<32x32xf32>
    %cst_99 = arith.constant dense<0.000000e+00> : vector<32x128xf32>
    %223 = tpu.matmul %222, %215, %cst_99 {dimension_numbers = #tpu.dot_dimension_numbers<[1], [0], [0], [1], [0, 0, 1, 1], [], []>} : vector<32x32xf32>, vector<32x128xf32>, vector<32x128xf32> -> vector<32x128xf32>
    %224 = vector.broadcast %216 : vector<1x128xf32> to vector<32x128xf32>
    %225 = arith.mulf %224, %220 : vector<32x128xf32>
    %226 = vector.broadcast %217 : vector<1x128xf32> to vector<32x128xf32>
    %227 = arith.mulf %226, %223 : vector<32x128xf32>
    %228 = arith.addf %225, %227 : vector<32x128xf32>
    %c0_100 = arith.constant 0 : index
    %c0_101 = arith.constant 0 : index
    %229 = vector.load %arg6[%c0_100, %c0_101] : memref<128x32xf32, #tpu.memory_space<vmem>>, vector<128x32xf32>
    %230 = arith.mulf %228, %228 : vector<32x128xf32>
    %cst_102 = arith.constant dense<0.000000e+00> : vector<128x128xf32>
    %231 = tpu.matmul %229, %230, %cst_102 {dimension_numbers = #tpu.dot_dimension_numbers<[1], [0], [0], [1], [0, 0, 1, 1], [], []>} : vector<128x32xf32>, vector<32x128xf32>, vector<128x128xf32> -> vector<128x128xf32>
    %c0_103 = arith.constant 0 : index
    %c0_104 = arith.constant 0 : index
    %232 = vector.load %arg7[%c0_103, %c0_104] : memref<128x128xf32, #tpu.memory_space<vmem>>, vector<128x128xf32>
    tpu.vector_store %arg7[%c0_103, %c0_104], %231 {strides = array<i32>} : memref<128x128xf32, #tpu.memory_space<vmem>>, vector<128x128xf32>,
    return
  }
  func.func @transform_0(%arg0: i32) -> (i32, i32) {
    %c0_i32 = arith.constant 0 : i32
    %c0_i32_0 = arith.constant 0 : i32
    return %c0_i32, %arg0 : i32, i32
  }
  func.func @transform_1(%arg0: i32) -> (i32, i32) {
    %c0_i32 = arith.constant 0 : i32
    %c0_i32_0 = arith.constant 0 : i32
    %c0_i32_1 = arith.constant 0 : i32
    return %c0_i32, %c0_i32_0 : i32, i32
  }
  func.func @transform_2(%arg0: i32) -> (i32, i32, i32) {
    %c0_i32 = arith.constant 0 : i32
    %c0_i32_0 = arith.constant 0 : i32
    %c0_i32_1 = arith.constant 0 : i32
    %c0_i32_2 = arith.constant 0 : i32
    return %c0_i32, %c0_i32_0, %c0_i32_1 : i32, i32, i32
  }
  func.func @transform_3(%arg0: i32) -> (i32, i32, i32) {
    %c0_i32 = arith.constant 0 : i32
    %c0_i32_0 = arith.constant 0 : i32
    %c0_i32_1 = arith.constant 0 : i32
    %c0_i32_2 = arith.constant 0 : i32
    return %c0_i32, %c0_i32_0, %c0_i32_1 : i32, i32, i32
  }
  func.func @transform_4(%arg0: i32) -> (i32, i32, i32) {
    %c0_i32 = arith.constant 0 : i32
    %c0_i32_0 = arith.constant 0 : i32
    %c0_i32_1 = arith.constant 0 : i32
    %c0_i32_2 = arith.constant 0 : i32
    return %c0_i32, %c0_i32_0, %c0_i32_1 : i32, i32, i32
  }
  func.func @transform_5(%arg0: i32) -> (i32, i32) {
    %c0_i32 = arith.constant 0 : i32
    %c0_i32_0 = arith.constant 0 : i32
    %c0_i32_1 = arith.constant 0 : i32
    return %c0_i32, %c0_i32_0 : i32, i32
  }
  func.func @transform_6(%arg0: i32) -> (i32, i32) {
    %c0_i32 = arith.constant 0 : i32
    %c0_i32_0 = arith.constant 0 : i32
    return %c0_i32, %arg0 : i32, i32
  }
}

</mosaic_0001>

<llo_original>
// kernel: tpu_custom_call.1
$region0: #{tpu_custom_call.1}
  #allocation0 [shape = 'u32[]', space=smem, size = 0x4, offset = 0x4, fixed_abs, tag = 'smem constant byte address 0x4 - core index']
  #allocation1 [shape = 'u32[144,128]{1,0:T(1,128)}', space=vmem, size = 0x12000, scoped, tag = 'internal scratch']
  %s0 = inlined_call_operand.hbm [shape: f32[4,128], index: 0, kind: input, shape index: {}]
  %s1 = inlined_call_operand.vmem [shape: f32[20,1], index: 1, kind: input, shape index: {}]
  %s2 = inlined_call_operand.hbm [shape: f32[4,32,32], index: 2, kind: input, shape index: {}]
  %s3 = inlined_call_operand.vmem [shape: f32[5,32,32], index: 3, kind: input, shape index: {}]
  %s4 = inlined_call_operand.hbm [shape: f32[5,32,32], index: 4, kind: input, shape index: {}]
  %s5 = inlined_call_operand.vmem [shape: f32[128,32], index: 5, kind: input, shape index: {}]
  %s6 = inlined_call_operand.hbm [shape: f32[128,128], index: 6, kind: output, shape index: {}]
  %s7 = sld [smem:[#allocation0]]
  $region46: #{tpu_custom_call.1} parent=0
    _
  %s9 = ssub.s32 1, %s7
  %s10 = scalar_select 0, %s9, %s7
  $region1: #{tpu_custom_call.1} parent=0
    #allocation2 [shape = 'u8[2048]{0}', space=vmem, size = 0x800, scoped, tag = 'input window, operand 0, single buffered']
    #allocation3 [shape = 's32[1]{0}', space=sflag, size = 0x4, scoped, tag = 'scoped memory for tpu_custom_call.1']
    #allocation4 [shape = 's32[1]{0}', space=sflag, size = 0x4, scoped, tag = 'scoped memory for tpu_custom_call.1']
    #allocation5 [shape = 'u8[65536]{0}', space=vmem, size = 0x10000, scoped, tag = 'input window, operand 2, single buffered']
    #allocation6 [shape = 's32[1]{0}', space=sflag, size = 0x4, scoped, tag = 'scoped memory for tpu_custom_call.1']
    #allocation7 [shape = 'u8[81920]{0}', space=vmem, size = 0x14000, scoped, tag = 'input window, operand 4, single buffered']
    #allocation8 [shape = 'u8[65536]{0}', space=vmem, size = 0x10000, scoped, tag = 'output window, operand 0, single buffered']
    %11 = vsyncpa [#allocation3], 0
    %12 = vsyncpa [#allocation6], 0
    %13 = vsyncpa [#allocation4], 0
    // Predicated region
    $region2: #{tpu_custom_call.1} parent=1 // pred_check
      _
    $region3: #{tpu_custom_call.1} parent=1 // pred_check_branch
      %15 = sbr.rel (0) target = $region5
    $region4: #{tpu_custom_call.1} parent=1 // pred_region
      %s17 = ssub.s32 64, 64
      %18 = vsyncadd [#allocation3], %s17
      %s20 = sshll.u32 [#allocation2], 4
      %s21 = int_to_ptr.vmem [resolvable:$true] %s20
      %23 = dma.hbm_to_vmem [thread:$0]  %s0, 64, %s21, [#allocation3]
    $region5: #{tpu_custom_call.1} parent=1 // pred_fallthru
      _
    // Predicated region
    $region6: #{tpu_custom_call.1} parent=1 // pred_check
      _
    $region7: #{tpu_custom_call.1} parent=1 // pred_check_branch
      %25 = sbr.rel (0) target = $region9
    $region8: #{tpu_custom_call.1} parent=1 // pred_region
      _
    $region9: #{tpu_custom_call.1} parent=1 // pred_fallthru
      _
    // Predicated region
    $region10: #{tpu_custom_call.1} parent=1 // pred_check
      _
    $region11: #{tpu_custom_call.1} parent=1 // pred_check_branch
      %27 = sbr.rel (0) target = $region13
    $region12: #{tpu_custom_call.1} parent=1 // pred_region
      %s29 = ssub.s32 2048, 2048
      %30 = vsyncadd [#allocation6], %s29
      %s31 = sshll.u32 [#allocation5], 4
      %s32 = int_to_ptr.vmem [resolvable:$true] %s31
      %37 = dma.hbm_to_vmem [thread:$0]  %s2, 2048, %s32, [#allocation6], 128, 128, 8
    $region13: #{tpu_custom_call.1} parent=1 // pred_fallthru
      _
    // Predicated region
    $region14: #{tpu_custom_call.1} parent=1 // pred_check
      _
    $region15: #{tpu_custom_call.1} parent=1 // pred_check_branch
      %39 = sbr.rel (0) target = $region17
    $region16: #{tpu_custom_call.1} parent=1 // pred_region
      _
    $region17: #{tpu_custom_call.1} parent=1 // pred_fallthru
      _
    // Predicated region
    $region18: #{tpu_custom_call.1} parent=1 // pred_check
      _
    $region19: #{tpu_custom_call.1} parent=1 // pred_check_branch
      %41 = sbr.rel (0) target = $region21
    $region20: #{tpu_custom_call.1} parent=1 // pred_region
      %s43 = ssub.s32 2560, 2560
      %44 = vsyncadd [#allocation6], %s43
      %s45 = sshll.u32 [#allocation7], 4
      %s46 = int_to_ptr.vmem [resolvable:$true] %s45
      %51 = dma.hbm_to_vmem [thread:$0]  %s4, 2560, %s46, [#allocation6], 128, 128, 8
    $region21: #{tpu_custom_call.1} parent=1 // pred_fallthru
      _
    // Predicated region
    $region22: #{tpu_custom_call.1} parent=1 // pred_check
      _
    $region23: #{tpu_custom_call.1} parent=1 // pred_check_branch
      %53 = sbr.rel (0) target = $region25
    $region24: #{tpu_custom_call.1} parent=1 // pred_region
      _
    $region25: #{tpu_custom_call.1} parent=1 // pred_fallthru
      _
    // Predicated region
    $region26: #{tpu_custom_call.1} parent=1 // pred_check
      _
    $region27: #{tpu_custom_call.1} parent=1 // pred_check_branch
      %55 = sbr.rel (0) target = $region29
    $region28: #{tpu_custom_call.1} parent=1 // pred_region
      %56 = dma.done [#allocation3], 64
    $region29: #{tpu_custom_call.1} parent=1 // pred_fallthru
      _
    // Predicated region
    $region30: #{tpu_custom_call.1} parent=1 // pred_check
      _
    $region31: #{tpu_custom_call.1} parent=1 // pred_check_branch
      %58 = sbr.rel (0) target = $region33
    $region32: #{tpu_custom_call.1} parent=1 // pred_region
      %59 = dma.done [#allocation6], 2048
    $region33: #{tpu_custom_call.1} parent=1 // pred_fallthru
      _
    // Predicated region
    $region34: #{tpu_custom_call.1} parent=1 // pred_check
      _
    $region35: #{tpu_custom_call.1} parent=1 // pred_check_branch
      %61 = sbr.rel (0) target = $region37
    $region36: #{tpu_custom_call.1} parent=1 // pred_region
      %62 = dma.done [#allocation6], 2560
    $region37: #{tpu_custom_call.1} parent=1 // pred_fallthru
      _
    %v63 = vld [vmem:[#allocation2] sm:$0xf]
    %v64 = vtanh.pop %v63
    %v66 = vrot.slane %v64, 4
    %vm68 = vcmask 1043456
    %v69 = vsel %vm68, %v64, %v66
    %v70 = vld [vmem:[%s1] sm:$0xff]
    %v71 = vld [vmem:[%s1 + $0x8] sm:$0xff]
    %v72 = vld [vmem:[%s1 + $0x10] sm:$0xf]
    %74 = vset.pattern.permute.xlu0 0
    %75 = vperm.xlu0 %74, %v70
    %v76 = vpop.permute.xlu0 %75
    %79 = vset.pattern.permute.xlu0 0
    %80 = vperm.xlu0 %79, %v71
    %v81 = vpop.permute.xlu0 %80
    %84 = vset.pattern.permute.xlu0 0
    %85 = vperm.xlu0 %84, %v72
    %v86 = vpop.permute.xlu0 %85
    %v88 = vmul.f32 %v76, %v69
    %v89 = vmul.f32 %v81, %v69
    %v90 = vmul.f32 %v86, %v64
    %v91 = vand.u32 2147483647, %v88
    %vm92 = vcmp.le.f32.partialorder %v91, 0.7853982
    %vm93 = vcmp.lt.s32.totalorder %v88, 0
    %v94 = vand.u32 %v88, 2139095040
    %v95 = vshrl.u32 %v94, 23
    %v96 = vsub.s32 %v95, 127
    %v97 = vand.u32 2147483647, %v88
    %v98 = vand.u32 %v97, 8388607
    %v99 = vor.u32 %v98, 8388608
    %v100 = vsub.s32 0, %v99
    %v101 = vadd.s32 %v96, 1
    %vm102 = vcmp.gt.s32.totalorder %v101, 0
    %v103 = vsel %vm102, %v101, 0
    %v104 = vshrl.u32 %v103, 5
    %v105 = vand.u32 %v103, 31
    %v106 = vsub.s32 32, %v105
    %v107 = vshrl.u32 683565275, %v106
    %v108 = vshll.u32 683565275, %v105
    %v109 = vshrl.u32 2475754826, %v106
    %v110 = vor.u32 %v108, %v109
    %v111 = vshll.u32 2475754826, %v105
    %v112 = vshrl.u32 2131351028, %v106
    %v113 = vor.u32 %v111, %v112
    %v114 = vshll.u32 2131351028, %v105
    %v115 = vshrl.u32 2102212464, %v106
    %v116 = vor.u32 %v114, %v115
    %v117 = vshll.u32 2102212464, %v105
    %v118 = vshrl.u32 920167782, %v106
    %v119 = vor.u32 %v117, %v118
    %v120 = vshll.u32 920167782, %v105
    %v121 = vshrl.u32 1326507024, %v106
    %v122 = vor.u32 %v120, %v121
    %vm123 = vcmp.lt.s32.totalorder %v104, 1
    %vm124 = vcmp.lt.s32.totalorder %v104, 2
    %vm125 = vcmp.lt.s32.totalorder %v104, 3
    %vm126 = vcmp.lt.s32.totalorder %v104, 4
    %v127 = vsel %vm123, %v107, %v110
    %v128 = vsel %vm126, %v116, 2102212464
    %v129 = vsel %vm125, %v113, %v128
    %v130 = vsel %vm124, %v127, %v129
    %v131 = vsel %vm123, %v110, %v113
    %v132 = vsel %vm126, %v119, 920167782
    %v133 = vsel %vm125, %v116, %v132
    %v134 = vsel %vm124, %v131, %v133
    %v135 = vsel %vm123, %v113, %v116
    %v136 = vsel %vm126, %v122, 1326507024
    %v137 = vsel %vm125, %v119, %v136
    %v138 = vsel %vm124, %v135, %v137
    %v139 = vshll.u32 %v99, 8
    %v140 = vmul.u32.u64.compose %v139, %v138
    %v141 = vextract.low.u32 %v140
    %v142 = vextract.high.u32 %v140
    %v143 = vmul.u32.u64.compose %v139, %v134
    %v144 = vextract.low.u32 %v143
    %v145 = vextract.high.u32 %v143
    %v146 = vmul.u32 %v139, %v130
    %v147 = vadd.s32 %v142, %v144
    %vm148 = vc.u32 %v142, %v144
    %v149 = vadd.s32 %v145, 1
    %v150 = vsel %vm148, %v149, %v145
    %v151 = vadd.s32 %v146, %v150
    %v152 = vadd.s32 %v151, 536870912
    %v153 = vshrl.u32 %v152, 30
    %v154 = vshll.u32 %v153, 30
    %v155 = vsub.s32 %v151, %v154
    %vm156 = vcmp.lt.s32.totalorder %v155, 0
    %v157 = vsub.s32 0, %v155
    %v158 = vsel %vm156, %v157, %v155
    %v159 = vclz %v158
    %v160 = vsub.s32 %v159, 2
    %vm161 = vcmp.gt.s32.totalorder 0, %v160
    %v162 = vsel %vm161, 0, %v160
    %v163 = vsub.s32 32, %v162
    %v164 = vshll.u32 %v155, %v162
    %v165 = vshrl.u32 %v147, %v163
    %v166 = vor.u32 %v164, %v165
    %v167 = vsub.s32 4294967266, %v162
    %v168 = vadd.s32 %v167, 127
    %v169 = vshll.u32 %v168, 23
    %v170 = vor.u32 4788187, %v169
    %v171 = vand.u32 2147483647, %v170
    %v173 = vcvt.s32.f32 %v166
    %v174 = vmul.f32 %v173, %v171
    %v175 = vxor.u32 %v174, 2147483648
    %v176 = vsel %vm93, %v175, %v174
    %v177 = vsub.s32 4, %v153
    %v178 = vsel %vm93, %v177, %v153
    %v179 = vsel %vm92, %v88, %v176
    %v180 = vsel %vm92, 0, %v178
    %v181 = vcosq.f32.pop %v179
    %v182 = vsinq.f32.pop %v179
    %vm183 = vweird.f32 %v88
    %v184 = vand.u32 %v180, 3
    %vm185 = vcmp.lt.s32.totalorder %v184, 2
    %vm186 = vcmp.eq.s32.totalorder %v184, 0
    %v187 = vxor.u32 %v182, 2147483648
    %v188 = vsel %vm186, %v181, %v187
    %vm189 = vcmp.eq.s32.totalorder %v184, 2
    %v190 = vxor.u32 %v181, 2147483648
    %v191 = vsel %vm189, %v190, %v182
    %v192 = vsel %vm185, %v188, %v191
    %v193 = vsel %vm183, nan, %v192
    %v194 = vand.u32 2147483647, %v89
    %vm195 = vcmp.le.f32.partialorder %v194, 0.7853982
    %vm196 = vcmp.lt.s32.totalorder %v89, 0
    %v197 = vand.u32 %v89, 2139095040
    %v198 = vshrl.u32 %v197, 23
    %v199 = vsub.s32 %v198, 127
    %v200 = vand.u32 2147483647, %v89
    %v201 = vand.u32 %v200, 8388607
    %v202 = vor.u32 %v201, 8388608
    %v203 = vsub.s32 0, %v202
    %v204 = vadd.s32 %v199, 1
    %vm205 = vcmp.gt.s32.totalorder %v204, 0
    %v206 = vsel %vm205, %v204, 0
    %v207 = vshrl.u32 %v206, 5
    %v208 = vand.u32 %v206, 31
    %v209 = vsub.s32 32, %v208
    %v210 = vshrl.u32 683565275, %v209
    %v211 = vshll.u32 683565275, %v208
    %v212 = vshrl.u32 2475754826, %v209
    %v213 = vor.u32 %v211, %v212
    %v214 = vshll.u32 2475754826, %v208
    %v215 = vshrl.u32 2131351028, %v209
    %v216 = vor.u32 %v214, %v215
    %v217 = vshll.u32 2131351028, %v208
    %v218 = vshrl.u32 2102212464, %v209
    %v219 = vor.u32 %v217, %v218
    %v220 = vshll.u32 2102212464, %v208
    %v221 = vshrl.u32 920167782, %v209
    %v222 = vor.u32 %v220, %v221
    %v223 = vshll.u32 920167782, %v208
    %v224 = vshrl.u32 1326507024, %v209
    %v225 = vor.u32 %v223, %v224
    %vm226 = vcmp.lt.s32.totalorder %v207, 1
    %vm227 = vcmp.lt.s32.totalorder %v207, 2
    %vm228 = vcmp.lt.s32.totalorder %v207, 3
    %vm229 = vcmp.lt.s32.totalorder %v207, 4
    %v230 = vsel %vm226, %v210, %v213
    %v231 = vsel %vm229, %v219, 2102212464
    %v232 = vsel %vm228, %v216, %v231
    %v233 = vsel %vm227, %v230, %v232
    %v234 = vsel %vm226, %v213, %v216
    %v235 = vsel %vm229, %v222, 920167782
    %v236 = vsel %vm228, %v219, %v235
    %v237 = vsel %vm227, %v234, %v236
    %v238 = vsel %vm226, %v216, %v219
    %v239 = vsel %vm229, %v225, 1326507024
    %v240 = vsel %vm228, %v222, %v239
    %v241 = vsel %vm227, %v238, %v240
    %v242 = vshll.u32 %v202, 8
    %v243 = vmul.u32.u64.compose %v242, %v241
    %v244 = vextract.low.u32 %v243
    %v245 = vextract.high.u32 %v243
    %v246 = vmul.u32.u64.compose %v242, %v237
    %v247 = vextract.low.u32 %v246
    %v248 = vextract.high.u32 %v246
    %v249 = vmul.u32 %v242, %v233
    %v250 = vadd.s32 %v245, %v247
    %vm251 = vc.u32 %v245, %v247
    %v252 = vadd.s32 %v248, 1
    %v253 = vsel %vm251, %v252, %v248
    %v254 = vadd.s32 %v249, %v253
    %v255 = vadd.s32 %v254, 536870912
    %v256 = vshrl.u32 %v255, 30
    %v257 = vshll.u32 %v256, 30
    %v258 = vsub.s32 %v254, %v257
    %vm259 = vcmp.lt.s32.totalorder %v258, 0
    %v260 = vsub.s32 0, %v258
    %v261 = vsel %vm259, %v260, %v258
    %v262 = vclz %v261
    %v263 = vsub.s32 %v262, 2
    %vm264 = vcmp.gt.s32.totalorder 0, %v263
    %v265 = vsel %vm264, 0, %v263
    %v266 = vsub.s32 32, %v265
    %v267 = vshll.u32 %v258, %v265
    %v268 = vshrl.u32 %v250, %v266
    %v269 = vor.u32 %v267, %v268
    %v270 = vsub.s32 4294967266, %v265
    %v271 = vadd.s32 %v270, 127
    %v272 = vshll.u32 %v271, 23
    %v273 = vor.u32 4788187, %v272
    %v274 = vand.u32 2147483647, %v273
    %v276 = vcvt.s32.f32 %v269
    %v277 = vmul.f32 %v276, %v274
    %v278 = vxor.u32 %v277, 2147483648
    %v279 = vsel %vm196, %v278, %v277
    %v280 = vsub.s32 4, %v256
    %v281 = vsel %vm196, %v280, %v256
    %v282 = vsel %vm195, %v89, %v279
    %v283 = vsel %vm195, 0, %v281
    %v284 = vcosq.f32.pop %v282
    %v285 = vsinq.f32.pop %v282
    %vm286 = vweird.f32 %v89
    %v287 = vand.u32 %v283, 3
    %vm288 = vcmp.lt.s32.totalorder %v287, 2
    %vm289 = vcmp.eq.s32.totalorder %v287, 0
    %v290 = vxor.u32 %v285, 2147483648
    %v291 = vsel %vm289, %v284, %v290
    %vm292 = vcmp.eq.s32.totalorder %v287, 2
    %v293 = vxor.u32 %v284, 2147483648
    %v294 = vsel %vm292, %v293, %v285
    %v295 = vsel %vm288, %v291, %v294
    %v296 = vsel %vm286, nan, %v295
    %v297 = vand.u32 2147483647, %v90
    %vm298 = vcmp.le.f32.partialorder %v297, 0.7853982
    %vm299 = vcmp.lt.s32.totalorder %v90, 0
    %v300 = vand.u32 %v90, 2139095040
    %v301 = vshrl.u32 %v300, 23
    %v302 = vsub.s32 %v301, 127
    %v303 = vand.u32 2147483647, %v90
    %v304 = vand.u32 %v303, 8388607
    %v305 = vor.u32 %v304, 8388608
    %v306 = vsub.s32 0, %v305
    %v307 = vadd.s32 %v302, 1
    %vm308 = vcmp.gt.s32.totalorder %v307, 0
    %v309 = vsel %vm308, %v307, 0
    %v310 = vshrl.u32 %v309, 5
    %v311 = vand.u32 %v309, 31
    %v312 = vsub.s32 32, %v311
    %v313 = vshrl.u32 683565275, %v312
    %v314 = vshll.u32 683565275, %v311
    %v315 = vshrl.u32 2475754826, %v312
    %v316 = vor.u32 %v314, %v315
    %v317 = vshll.u32 2475754826, %v311
    %v318 = vshrl.u32 2131351028, %v312
    %v319 = vor.u32 %v317, %v318
    %v320 = vshll.u32 2131351028, %v311
    %v321 = vshrl.u32 2102212464, %v312
    %v322 = vor.u32 %v320, %v321
    %v323 = vshll.u32 2102212464, %v311
    %v324 = vshrl.u32 920167782, %v312
    %v325 = vor.u32 %v323, %v324
    %v326 = vshll.u32 920167782, %v311
    %v327 = vshrl.u32 1326507024, %v312
    %v328 = vor.u32 %v326, %v327
    %vm329 = vcmp.lt.s32.totalorder %v310, 1
    %vm330 = vcmp.lt.s32.totalorder %v310, 2
    %vm331 = vcmp.lt.s32.totalorder %v310, 3
    %vm332 = vcmp.lt.s32.totalorder %v310, 4
    %v333 = vsel %vm329, %v313, %v316
    %v334 = vsel %vm332, %v322, 2102212464
    %v335 = vsel %vm331, %v319, %v334
    %v336 = vsel %vm330, %v333, %v335
    %v337 = vsel %vm329, %v316, %v319
    %v338 = vsel %vm332, %v325, 920167782
    %v339 = vsel %vm331, %v322, %v338
    %v340 = vsel %vm330, %v337, %v339
    %v341 = vsel %vm329, %v319, %v322
    %v342 = vsel %vm332, %v328, 1326507024
    %v343 = vsel %vm331, %v325, %v342
    %v344 = vsel %vm330, %v341, %v343
    %v345 = vshll.u32 %v305, 8
    %v346 = vmul.u32.u64.compose %v345, %v344
    %v347 = vextract.low.u32 %v346
    %v348 = vextract.high.u32 %v346
    %v349 = vmul.u32.u64.compose %v345, %v340
    %v350 = vextract.low.u32 %v349
    %v351 = vextract.high.u32 %v349
    %v352 = vmul.u32 %v345, %v336
    %v353 = vadd.s32 %v348, %v350
    %vm354 = vc.u32 %v348, %v350
    %v355 = vadd.s32 %v351, 1
    %v356 = vsel %vm354, %v355, %v351
    %v357 = vadd.s32 %v352, %v356
    %v358 = vadd.s32 %v357, 536870912
    %v359 = vshrl.u32 %v358, 30
    %v360 = vshll.u32 %v359, 30
    %v361 = vsub.s32 %v357, %v360
    %vm362 = vcmp.lt.s32.totalorder %v361, 0
    %v363 = vsub.s32 0, %v361
    %v364 = vsel %vm362, %v363, %v361
    %v365 = vclz %v364
    %v366 = vsub.s32 %v365, 2
    %vm367 = vcmp.gt.s32.totalorder 0, %v366
    %v368 = vsel %vm367, 0, %v366
    %v369 = vsub.s32 32, %v368
    %v370 = vshll.u32 %v361, %v368
    %v371 = vshrl.u32 %v353, %v369
    %v372 = vor.u32 %v370, %v371
    %v373 = vsub.s32 4294967266, %v368
    %v374 = vadd.s32 %v373, 127
    %v375 = vshll.u32 %v374, 23
    %v376 = vor.u32 4788187, %v375
    %v377 = vand.u32 2147483647, %v376
    %v379 = vcvt.s32.f32 %v372
    %v380 = vmul.f32 %v379, %v377
    %v381 = vxor.u32 %v380, 2147483648
    %v382 = vsel %vm299, %v381, %v380
    %v383 = vsub.s32 4, %v359
    %v384 = vsel %vm299, %v383, %v359
    %v385 = vsel %vm298, %v90, %v382
    %v386 = vsel %vm298, 0, %v384
    %v387 = vcosq.f32.pop %v385
    %v388 = vsinq.f32.pop %v385
    %vm389 = vweird.f32 %v90
    %v390 = vand.u32 %v386, 3
    %vm391 = vcmp.lt.s32.totalorder %v390, 2
    %vm392 = vcmp.eq.s32.totalorder %v390, 0
    %v393 = vxor.u32 %v388, 2147483648
    %v394 = vsel %vm392, %v387, %v393
    %vm395 = vcmp.eq.s32.totalorder %v390, 2
    %v396 = vxor.u32 %v387, 2147483648
    %v397 = vsel %vm395, %v396, %v388
    %v398 = vsel %vm391, %v394, %v397
    %v399 = vsel %vm389, nan, %v398
    %v400 = vand.u32 2147483647, %v88
    %vm401 = vcmp.le.f32.partialorder %v400, 0.7853982
    %vm402 = vcmp.lt.s32.totalorder %v88, 0
    %v403 = vand.u32 %v88, 2139095040
    %v404 = vshrl.u32 %v403, 23
    %v405 = vsub.s32 %v404, 127
    %v406 = vand.u32 2147483647, %v88
    %v407 = vand.u32 %v406, 8388607
    %v408 = vor.u32 %v407, 8388608
    %v409 = vsub.s32 0, %v408
    %v410 = vadd.s32 %v405, 1
    %vm411 = vcmp.gt.s32.totalorder %v410, 0
    %v412 = vsel %vm411, %v410, 0
    %v413 = vshrl.u32 %v412, 5
    %v414 = vand.u32 %v412, 31
    %v415 = vsub.s32 32, %v414
    %v416 = vshrl.u32 683565275, %v415
    %v417 = vshll.u32 683565275, %v414
    %v418 = vshrl.u32 2475754826, %v415
    %v419 = vor.u32 %v417, %v418
    %v420 = vshll.u32 2475754826, %v414
    %v421 = vshrl.u32 2131351028, %v415
    %v422 = vor.u32 %v420, %v421
    %v423 = vshll.u32 2131351028, %v414
    %v424 = vshrl.u32 2102212464, %v415
    %v425 = vor.u32 %v423, %v424
    %v426 = vshll.u32 2102212464, %v414
    %v427 = vshrl.u32 920167782, %v415
    %v428 = vor.u32 %v426, %v427
    %v429 = vshll.u32 920167782, %v414
    %v430 = vshrl.u32 1326507024, %v415
    %v431 = vor.u32 %v429, %v430
    %vm432 = vcmp.lt.s32.totalorder %v413, 1
    %vm433 = vcmp.lt.s32.totalorder %v413, 2
    %vm434 = vcmp.lt.s32.totalorder %v413, 3
    %vm435 = vcmp.lt.s32.totalorder %v413, 4
    %v436 = vsel %vm432, %v416, %v419
    %v437 = vsel %vm435, %v425, 2102212464
    %v438 = vsel %vm434, %v422, %v437
    %v439 = vsel %vm433, %v436, %v438
    %v440 = vsel %vm432, %v419, %v422
    %v441 = vsel %vm435, %v428, 920167782
    %v442 = vsel %vm434, %v425, %v441
    %v443 = vsel %vm433, %v440, %v442
    %v444 = vsel %vm432, %v422, %v425
    %v445 = vsel %vm435, %v431, 1326507024
    %v446 = vsel %vm434, %v428, %v445
    %v447 = vsel %vm433, %v444, %v446
    %v448 = vshll.u32 %v408, 8
    %v449 = vmul.u32.u64.compose %v448, %v447
    %v450 = vextract.low.u32 %v449
    %v451 = vextract.high.u32 %v449
    %v452 = vmul.u32.u64.compose %v448, %v443
    %v453 = vextract.low.u32 %v452
    %v454 = vextract.high.u32 %v452
    %v455 = vmul.u32 %v448, %v439
    %v456 = vadd.s32 %v451, %v453
    %vm457 = vc.u32 %v451, %v453
    %v458 = vadd.s32 %v454, 1
    %v459 = vsel %vm457, %v458, %v454
    %v460 = vadd.s32 %v455, %v459
    %v461 = vadd.s32 %v460, 536870912
    %v462 = vshrl.u32 %v461, 30
    %v463 = vshll.u32 %v462, 30
    %v464 = vsub.s32 %v460, %v463
    %vm465 = vcmp.lt.s32.totalorder %v464, 0
    %v466 = vsub.s32 0, %v464
    %v467 = vsel %vm465, %v466, %v464
    %v468 = vclz %v467
    %v469 = vsub.s32 %v468, 2
    %vm470 = vcmp.gt.s32.totalorder 0, %v469
    %v471 = vsel %vm470, 0, %v469
    %v472 = vsub.s32 32, %v471
    %v473 = vshll.u32 %v464, %v471
    %v474 = vshrl.u32 %v456, %v472
    %v475 = vor.u32 %v473, %v474
    %v476 = vsub.s32 4294967266, %v471
    %v477 = vadd.s32 %v476, 127
    %v478 = vshll.u32 %v477, 23
    %v479 = vor.u32 4788187, %v478
    %v480 = vand.u32 2147483647, %v479
    %v482 = vcvt.s32.f32 %v475
    %v483 = vmul.f32 %v482, %v480
    %v484 = vxor.u32 %v483, 2147483648
    %v485 = vsel %vm402, %v484, %v483
    %v486 = vsub.s32 4, %v462
    %v487 = vsel %vm402, %v486, %v462
    %v488 = vsel %vm401, %v88, %v485
    %v489 = vsel %vm401, 0, %v487
    %v490 = vcosq.f32.pop %v488
    %v491 = vsinq.f32.pop %v488
    %vm492 = vweird.f32 %v88
    %v493 = vadd.s32 %v489, 3
    %v494 = vand.u32 %v493, 3
    %vm495 = vcmp.lt.s32.totalorder %v494, 2
    %vm496 = vcmp.eq.s32.totalorder %v494, 0
    %v497 = vxor.u32 %v491, 2147483648
    %v498 = vsel %vm496, %v490, %v497
    %vm499 = vcmp.eq.s32.totalorder %v494, 2
    %v500 = vxor.u32 %v490, 2147483648
    %v501 = vsel %vm499, %v500, %v491
    %v502 = vsel %vm495, %v498, %v501
    %v503 = vsel %vm492, nan, %v502
    %v504 = vand.u32 2147483647, %v89
    %vm505 = vcmp.le.f32.partialorder %v504, 0.7853982
    %vm506 = vcmp.lt.s32.totalorder %v89, 0
    %v507 = vand.u32 %v89, 2139095040
    %v508 = vshrl.u32 %v507, 23
    %v509 = vsub.s32 %v508, 127
    %v510 = vand.u32 2147483647, %v89
    %v511 = vand.u32 %v510, 8388607
    %v512 = vor.u32 %v511, 8388608
    %v513 = vsub.s32 0, %v512
    %v514 = vadd.s32 %v509, 1
    %vm515 = vcmp.gt.s32.totalorder %v514, 0
    %v516 = vsel %vm515, %v514, 0
    %v517 = vshrl.u32 %v516, 5
    %v518 = vand.u32 %v516, 31
    %v519 = vsub.s32 32, %v518
    %v520 = vshrl.u32 683565275, %v519
    %v521 = vshll.u32 683565275, %v518
    %v522 = vshrl.u32 2475754826, %v519
    %v523 = vor.u32 %v521, %v522
    %v524 = vshll.u32 2475754826, %v518
    %v525 = vshrl.u32 2131351028, %v519
    %v526 = vor.u32 %v524, %v525
    %v527 = vshll.u32 2131351028, %v518
    %v528 = vshrl.u32 2102212464, %v519
    %v529 = vor.u32 %v527, %v528
    %v530 = vshll.u32 2102212464, %v518
    %v531 = vshrl.u32 920167782, %v519
    %v532 = vor.u32 %v530, %v531
    %v533 = vshll.u32 920167782, %v518
    %v534 = vshrl.u32 1326507024, %v519
    %v535 = vor.u32 %v533, %v534
    %vm536 = vcmp.lt.s32.totalorder %v517, 1
    %vm537 = vcmp.lt.s32.totalorder %v517, 2
    %vm538 = vcmp.lt.s32.totalorder %v517, 3
    %vm539 = vcmp.lt.s32.totalorder %v517, 4
    %v540 = vsel %vm536, %v520, %v523
    %v541 = vsel %vm539, %v529, 2102212464
    %v542 = vsel %vm538, %v526, %v541
    %v543 = vsel %vm537, %v540, %v542
    %v544 = vsel %vm536, %v523, %v526
    %v545 = vsel %vm539, %v532, 920167782
    %v546 = vsel %vm538, %v529, %v545
    %v547 = vsel %vm537, %v544, %v546
    %v548 = vsel %vm536, %v526, %v529
    %v549 = vsel %vm539, %v535, 1326507024
    %v550 = vsel %vm538, %v532, %v549
    %v551 = vsel %vm537, %v548, %v550
    %v552 = vshll.u32 %v512, 8
    %v553 = vmul.u32.u64.compose %v552, %v551
    %v554 = vextract.low.u32 %v553
    %v555 = vextract.high.u32 %v553
    %v556 = vmul.u32.u64.compose %v552, %v547
    %v557 = vextract.low.u32 %v556
    %v558 = vextract.high.u32 %v556
    %v559 = vmul.u32 %v552, %v543
    %v560 = vadd.s32 %v555, %v557
    %vm561 = vc.u32 %v555, %v557
    %v562 = vadd.s32 %v558, 1
    %v563 = vsel %vm561, %v562, %v558
    %v564 = vadd.s32 %v559, %v563
    %v565 = vadd.s32 %v564, 536870912
    %v566 = vshrl.u32 %v565, 30
    %v567 = vshll.u32 %v566, 30
    %v568 = vsub.s32 %v564, %v567
    %vm569 = vcmp.lt.s32.totalorder %v568, 0
    %v570 = vsub.s32 0, %v568
    %v571 = vsel %vm569, %v570, %v568
    %v572 = vclz %v571
    %v573 = vsub.s32 %v572, 2
    %vm574 = vcmp.gt.s32.totalorder 0, %v573
    %v575 = vsel %vm574, 0, %v573
    %v576 = vsub.s32 32, %v575
    %v577 = vshll.u32 %v568, %v575
    %v578 = vshrl.u32 %v560, %v576
    %v579 = vor.u32 %v577, %v578
    %v580 = vsub.s32 4294967266, %v575
    %v581 = vadd.s32 %v580, 127
    %v582 = vshll.u32 %v581, 23
    %v583 = vor.u32 4788187, %v582
    %v584 = vand.u32 2147483647, %v583
    %v586 = vcvt.s32.f32 %v579
    %v587 = vmul.f32 %v586, %v584
    %v588 = vxor.u32 %v587, 2147483648
    %v589 = vsel %vm506, %v588, %v587
    %v590 = vsub.s32 4, %v566
    %v591 = vsel %vm506, %v590, %v566
    %v592 = vsel %vm505, %v89, %v589
    %v593 = vsel %vm505, 0, %v591
    %v594 = vcosq.f32.pop %v592
    %v595 = vsinq.f32.pop %v592
    %vm596 = vweird.f32 %v89
    %v597 = vadd.s32 %v593, 3
    %v598 = vand.u32 %v597, 3
    %vm599 = vcmp.lt.s32.totalorder %v598, 2
    %vm600 = vcmp.eq.s32.totalorder %v598, 0
    %v601 = vxor.u32 %v595, 2147483648
    %v602 = vsel %vm600, %v594, %v601
    %vm603 = vcmp.eq.s32.totalorder %v598, 2
    %v604 = vxor.u32 %v594, 2147483648
    %v605 = vsel %vm603, %v604, %v595
    %v606 = vsel %vm599, %v602, %v605
    %v607 = vsel %vm596, nan, %v606
    %v608 = vand.u32 2147483647, %v90
    %vm609 = vcmp.le.f32.partialorder %v608, 0.7853982
    %vm610 = vcmp.lt.s32.totalorder %v90, 0
    %v611 = vand.u32 %v90, 2139095040
    %v612 = vshrl.u32 %v611, 23
    %v613 = vsub.s32 %v612, 127
    %v614 = vand.u32 2147483647, %v90
    %v615 = vand.u32 %v614, 8388607
    %v616 = vor.u32 %v615, 8388608
    %v617 = vsub.s32 0, %v616
    %v618 = vadd.s32 %v613, 1
    %vm619 = vcmp.gt.s32.totalorder %v618, 0
    %v620 = vsel %vm619, %v618, 0
    %v621 = vshrl.u32 %v620, 5
    %v622 = vand.u32 %v620, 31
    %v623 = vsub.s32 32, %v622
    %v624 = vshrl.u32 683565275, %v623
    %v625 = vshll.u32 683565275, %v622
    %v626 = vshrl.u32 2475754826, %v623
    %v627 = vor.u32 %v625, %v626
    %v628 = vshll.u32 2475754826, %v622
    %v629 = vshrl.u32 2131351028, %v623
    %v630 = vor.u32 %v628, %v629
    %v631 = vshll.u32 2131351028, %v622
    %v632 = vshrl.u32 2102212464, %v623
    %v633 = vor.u32 %v631, %v632
    %v634 = vshll.u32 2102212464, %v622
    %v635 = vshrl.u32 920167782, %v623
    %v636 = vor.u32 %v634, %v635
    %v637 = vshll.u32 920167782, %v622
    %v638 = vshrl.u32 1326507024, %v623
    %v639 = vor.u32 %v637, %v638
    %vm640 = vcmp.lt.s32.totalorder %v621, 1
    %vm641 = vcmp.lt.s32.totalorder %v621, 2
    %vm642 = vcmp.lt.s32.totalorder %v621, 3
    %vm643 = vcmp.lt.s32.totalorder %v621, 4
    %v644 = vsel %vm640, %v624, %v627
    %v645 = vsel %vm643, %v633, 2102212464
    %v646 = vsel %vm642, %v630, %v645
    %v647 = vsel %vm641, %v644, %v646
    %v648 = vsel %vm640, %v627, %v630
    %v649 = vsel %vm643, %v636, 920167782
    %v650 = vsel %vm642, %v633, %v649
    %v651 = vsel %vm641, %v648, %v650
    %v652 = vsel %vm640, %v630, %v633
    %v653 = vsel %vm643, %v639, 1326507024
    %v654 = vsel %vm642, %v636, %v653
    %v655 = vsel %vm641, %v652, %v654
    %v656 = vshll.u32 %v616, 8
    %v657 = vmul.u32.u64.compose %v656, %v655
    %v658 = vextract.low.u32 %v657
    %v659 = vextract.high.u32 %v657
    %v660 = vmul.u32.u64.compose %v656, %v651
    %v661 = vextract.low.u32 %v660
    %v662 = vextract.high.u32 %v660
    %v663 = vmul.u32 %v656, %v647
    %v664 = vadd.s32 %v659, %v661
    %vm665 = vc.u32 %v659, %v661
    %v666 = vadd.s32 %v662, 1
    %v667 = vsel %vm665, %v666, %v662
    %v668 = vadd.s32 %v663, %v667
    %v669 = vadd.s32 %v668, 536870912
    %v670 = vshrl.u32 %v669, 30
    %v671 = vshll.u32 %v670, 30
    %v672 = vsub.s32 %v668, %v671
    %vm673 = vcmp.lt.s32.totalorder %v672, 0
    %v674 = vsub.s32 0, %v672
    %v675 = vsel %vm673, %v674, %v672
    %v676 = vclz %v675
    %v677 = vsub.s32 %v676, 2
    %vm678 = vcmp.gt.s32.totalorder 0, %v677
    %v679 = vsel %vm678, 0, %v677
    %v680 = vsub.s32 32, %v679
    %v681 = vshll.u32 %v672, %v679
    %v682 = vshrl.u32 %v664, %v680
    %v683 = vor.u32 %v681, %v682
    %v684 = vsub.s32 4294967266, %v679
    %v685 = vadd.s32 %v684, 127
    %v686 = vshll.u32 %v685, 23
    %v687 = vor.u32 4788187, %v686
    %v688 = vand.u32 2147483647, %v687
    %v690 = vcvt.s32.f32 %v683
    %v691 = vmul.f32 %v690, %v688
    %v692 = vxor.u32 %v691, 2147483648
    %v693 = vsel %vm610, %v692, %v691
    %v694 = vsub.s32 4, %v670
    %v695 = vsel %vm610, %v694, %v670
    %v696 = vsel %vm609, %v90, %v693
    %v697 = vsel %vm609, 0, %v695
    %v698 = vcosq.f32.pop %v696
    %v699 = vsinq.f32.pop %v696
    %vm700 = vweird.f32 %v90
    %v701 = vadd.s32 %v697, 3
    %v702 = vand.u32 %v701, 3
    %vm703 = vcmp.lt.s32.totalorder %v702, 2
    %vm704 = vcmp.eq.s32.totalorder %v702, 0
    %v705 = vxor.u32 %v699, 2147483648
    %v706 = vsel %vm704, %v698, %v705
    %vm707 = vcmp.eq.s32.totalorder %v702, 2
    %v708 = vxor.u32 %v698, 2147483648
    %v709 = vsel %vm707, %v708, %v699
    %v710 = vsel %vm703, %v706, %v709
    %v711 = vsel %vm700, nan, %v710
    %v712 = vlaneseq
    %v713 = vshrl.u32 %v712, 7
    %v714 = vadd.s32 %v713, 8
    %v715 = vadd.s32 %v713, 16
    %v716 = vadd.s32 %v713, 24
    %vm717 = vcmp.eq.s32.totalorder %v713, 0
    %vm718 = vcmp.eq.s32.totalorder %v714, 0
    %vm719 = vcmp.eq.s32.totalorder %v715, 0
    %vm720 = vcmp.eq.s32.totalorder %v716, 0
    %v721 = vsel %vm717, 1.0, 0.0
    %v722 = vsel %vm718, 1.0, 0.0
    %v723 = vsel %vm719, 1.0, 0.0
    %v724 = vsel %vm720, 1.0, 0.0
    %v725 = vlaneseq
    %v726 = vshrl.u32 %v725, 7
    %v727 = vsub.s32 0, %v726
    %v728 = vrot.slane %v193, %v727
    %v729 = vmul.f32 %v728, %v721
    %v730 = vmul.f32 %v728, %v722
    %v731 = vmul.f32 %v728, %v723
    %v732 = vmul.f32 %v728, %v724
    %v733 = vld [vmem:[#allocation5] sm:$0xff]
    %v734 = vld [vmem:[#allocation5 + $0x8] sm:$0xff]
    %v735 = vld [vmem:[#allocation5 + $0x10] sm:$0xff]
    %v736 = vld [vmem:[#allocation5 + $0x18] sm:$0xff]
    %vm737 = vcmask 261120
    %v739 = vsel %vm737, %v733, 0
    %v742 = vsel %vm737, %v734, 0
    %v745 = vsel %vm737, %v735, 0
    %v748 = vsel %vm737, %v736, 0
    %750 = vmatprep.subr.mxu0 0.0
    %751 = vmatpush1.msra.mxu0 0.0
    %752 = vmatprep.subr.mxu0 0.0
    %753 = vmatpush1.msra.mxu0 0.0
    %754 = vmatprep.subr.mxu0 0.0
    %755 = vmatpush1.msra.mxu0 0.0
    %756 = vmatprep.subr.mxu0 0.0
    %757 = vmatpush1.msra.mxu0 0.0
    %758 = vmatprep.subr.mxu0 0.0
    %759 = vmatpush1.msra.mxu0 0.0
    %760 = vmatprep.subr.mxu0 0.0
    %761 = vmatpush1.msra.mxu0 0.0
    %762 = vmatprep.subr.mxu0 0.0
    %763 = vmatpush1.msra.mxu0 0.0
    %764 = vmatprep.subr.mxu0 0.0
    %765 = vmatpush1.msra.mxu0 0.0
    %766 = vmatprep.subr.mxu0 0.0
    %767 = vmatpush1.msra.mxu0 0.0
    %768 = vmatprep.subr.mxu0 0.0
    %769 = vmatpush1.msra.mxu0 0.0
    %770 = vmatprep.subr.mxu0 0.0
    %771 = vmatpush1.msra.mxu0 0.0
    %772 = vmatprep.subr.mxu0 0.0
    %773 = vmatpush1.msra.mxu0 0.0
    %774 = vmatprep.subr.mxu0 0.0
    %775 = vmatpush1.msra.mxu0 %v724
    %776 = vmatprep.subr.mxu0 0.0
    %777 = vmatpush1.msra.mxu0 %v723
    %778 = vmatprep.subr.mxu0 0.0
    %779 = vmatpush1.msra.mxu0 %v722
    %780 = vmatprep.subr.mxu0 0.0
    %781 = vmatpush1.msra.mxu0 %v721
    %782 = vmatprep.subr.mxu0 0.0
    %783 = vmatpush2.msra.mxu0 0.0
    %784 = vmatprep.subr.mxu0 0.0
    %785 = vmatpush2.msra.mxu0 0.0
    %786 = vmatprep.subr.mxu0 0.0
    %787 = vmatpush2.msra.mxu0 0.0
    %788 = vmatprep.subr.mxu0 0.0
    %789 = vmatpush2.msra.mxu0 0.0
    %790 = vmatprep.subr.mxu0 0.0
    %791 = vmatpush2.msra.mxu0 0.0
    %792 = vmatprep.subr.mxu0 0.0
    %793 = vmatpush2.msra.mxu0 0.0
    %794 = vmatprep.subr.mxu0 0.0
    %795 = vmatpush2.msra.mxu0 0.0
    %796 = vmatprep.subr.mxu0 0.0
    %797 = vmatpush2.msra.mxu0 0.0
    %798 = vmatprep.subr.mxu0 0.0
    %799 = vmatpush2.msra.mxu0 0.0
    %800 = vmatprep.subr.mxu0 0.0
    %801 = vmatpush2.msra.mxu0 0.0
    %802 = vmatprep.subr.mxu0 0.0
    %803 = vmatpush2.msra.mxu0 0.0
    %804 = vmatprep.subr.mxu0 0.0
    %805 = vmatpush2.msra.mxu0 0.0
    %806 = vmatprep.subr.mxu0 0.0
    %807 = vmatpush2.msra.mxu0 0.0
    %808 = vmatprep.subr.mxu0 0.0
    %809 = vmatpush2.msra.mxu0 0.0
    %810 = vmatprep.subr.mxu0 0.0
    %811 = vmatpush2.msra.mxu0 0.0
    %812 = vmatprep.subr.mxu0 0.0
    %813 = vmatpush2.msra.mxu0 0.0
    %814 = vmatprep.mubr.f32.mxu0 0.0
    %815 = vmatmul.mubr.f32.gmra.mxu0 %v739
    %v816 = vpop.f32.mrf.mxu0
    %v817 = vadd.f32 0.0, %v816
    %v818 = vpop.f32.mrf.mxu0
    %819 = vmatprep.mubr.f32.mxu0 0.0
    %820 = vmatmul.mubr.f32.gmra.mxu0 %v742
    %v821 = vpop.f32.mrf.mxu0
    %v822 = vadd.f32 0.0, %v821
    %v823 = vpop.f32.mrf.mxu0
    %824 = vmatprep.mubr.f32.mxu0 0.0
    %825 = vmatmul.mubr.f32.gmra.mxu0 %v745
    %v826 = vpop.f32.mrf.mxu0
    %v827 = vadd.f32 0.0, %v826
    %v828 = vpop.f32.mrf.mxu0
    %829 = vmatprep.mubr.f32.mxu0 0.0
    %830 = vmatmul.mubr.f32.gmra.mxu0 %v748
    %v831 = vpop.f32.mrf.mxu0
    %v832 = vadd.f32 0.0, %v831
    %v833 = vpop.f32.mrf.mxu0
    %834 = vdwg.mxu0
    %v835 = vlaneseq
    %v836 = vshrl.u32 %v835, 7
    %v837 = vsub.s32 0, %v836
    %v838 = vrot.slane %v503, %v837
    %v839 = vmul.f32 %v838, %v817
    %v840 = vmul.f32 %v838, %v822
    %v841 = vmul.f32 %v838, %v827
    %v842 = vmul.f32 %v838, %v832
    %v843 = vadd.f32 %v729, %v839
    %v844 = vadd.f32 %v730, %v840
    %v845 = vadd.f32 %v731, %v841
    %v846 = vadd.f32 %v732, %v842
    %v847 = vlaneseq
    %v848 = vshrl.u32 %v847, 7
    %v849 = vsub.s32 1, %v848
    %v850 = vrot.slane %v193, %v849
    %v851 = vmul.f32 %v850, %v843
    %v852 = vmul.f32 %v850, %v844
    %v853 = vmul.f32 %v850, %v845
    %v854 = vmul.f32 %v850, %v846
    %s855 = scalar_lea.vmem [#allocation5], 32
    %v856 = vld [vmem:[%s855] sm:$0xff]
    %v857 = vld [vmem:[%s855 + $0x8] sm:$0xff]
    %v858 = vld [vmem:[%s855 + $0x10] sm:$0xff]
    %v859 = vld [vmem:[%s855 + $0x18] sm:$0xff]
    %v861 = vsel %vm737, %v856, 0
    %v864 = vsel %vm737, %v857, 0
    %v867 = vsel %vm737, %v858, 0
    %v870 = vsel %vm737, %v859, 0
    %872 = vmatprep.subr.mxu0 0.0
    %873 = vmatpush1.msra.mxu0 0.0
    %874 = vmatprep.subr.mxu0 0.0
    %875 = vmatpush1.msra.mxu0 0.0
    %876 = vmatprep.subr.mxu0 0.0
    %877 = vmatpush1.msra.mxu0 0.0
    %878 = vmatprep.subr.mxu0 0.0
    %879 = vmatpush1.msra.mxu0 0.0
    %880 = vmatprep.subr.mxu0 0.0
    %881 = vmatpush1.msra.mxu0 0.0
    %882 = vmatprep.subr.mxu0 0.0
    %883 = vmatpush1.msra.mxu0 0.0
    %884 = vmatprep.subr.mxu0 0.0
    %885 = vmatpush1.msra.mxu0 0.0
    %886 = vmatprep.subr.mxu0 0.0
    %887 = vmatpush1.msra.mxu0 0.0
    %888 = vmatprep.subr.mxu0 0.0
    %889 = vmatpush1.msra.mxu0 0.0
    %890 = vmatprep.subr.mxu0 0.0
    %891 = vmatpush1.msra.mxu0 0.0
    %892 = vmatprep.subr.mxu0 0.0
    %893 = vmatpush1.msra.mxu0 0.0
    %894 = vmatprep.subr.mxu0 0.0
    %895 = vmatpush1.msra.mxu0 0.0
    %896 = vmatprep.subr.mxu0 0.0
    %897 = vmatpush1.msra.mxu0 %v846
    %898 = vmatprep.subr.mxu0 0.0
    %899 = vmatpush1.msra.mxu0 %v845
    %900 = vmatprep.subr.mxu0 0.0
    %901 = vmatpush1.msra.mxu0 %v844
    %902 = vmatprep.subr.mxu0 0.0
    %903 = vmatpush1.msra.mxu0 %v843
    %904 = vmatprep.subr.mxu0 0.0
    %905 = vmatpush2.msra.mxu0 0.0
    %906 = vmatprep.subr.mxu0 0.0
    %907 = vmatpush2.msra.mxu0 0.0
    %908 = vmatprep.subr.mxu0 0.0
    %909 = vmatpush2.msra.mxu0 0.0
    %910 = vmatprep.subr.mxu0 0.0
    %911 = vmatpush2.msra.mxu0 0.0
    %912 = vmatprep.subr.mxu0 0.0
    %913 = vmatpush2.msra.mxu0 0.0
    %914 = vmatprep.subr.mxu0 0.0
    %915 = vmatpush2.msra.mxu0 0.0
    %916 = vmatprep.subr.mxu0 0.0
    %917 = vmatpush2.msra.mxu0 0.0
    %918 = vmatprep.subr.mxu0 0.0
    %919 = vmatpush2.msra.mxu0 0.0
    %920 = vmatprep.subr.mxu0 0.0
    %921 = vmatpush2.msra.mxu0 0.0
    %922 = vmatprep.subr.mxu0 0.0
    %923 = vmatpush2.msra.mxu0 0.0
    %924 = vmatprep.subr.mxu0 0.0
    %925 = vmatpush2.msra.mxu0 0.0
    %926 = vmatprep.subr.mxu0 0.0
    %927 = vmatpush2.msra.mxu0 0.0
    %928 = vmatprep.subr.mxu0 0.0
    %929 = vmatpush2.msra.mxu0 0.0
    %930 = vmatprep.subr.mxu0 0.0
    %931 = vmatpush2.msra.mxu0 0.0
    %932 = vmatprep.subr.mxu0 0.0
    %933 = vmatpush2.msra.mxu0 0.0
    %934 = vmatprep.subr.mxu0 0.0
    %935 = vmatpush2.msra.mxu0 0.0
    %936 = vmatprep.mubr.f32.mxu0 0.0
    %937 = vmatmul.mubr.f32.gmra.mxu0 %v861
    %v938 = vpop.f32.mrf.mxu0
    %v939 = vadd.f32 0.0, %v938
    %v940 = vpop.f32.mrf.mxu0
    %941 = vmatprep.mubr.f32.mxu0 0.0
    %942 = vmatmul.mubr.f32.gmra.mxu0 %v864
    %v943 = vpop.f32.mrf.mxu0
    %v944 = vadd.f32 0.0, %v943
    %v945 = vpop.f32.mrf.mxu0
    %946 = vmatprep.mubr.f32.mxu0 0.0
    %947 = vmatmul.mubr.f32.gmra.mxu0 %v867
    %v948 = vpop.f32.mrf.mxu0
    %v949 = vadd.f32 0.0, %v948
    %v950 = vpop.f32.mrf.mxu0
    %951 = vmatprep.mubr.f32.mxu0 0.0
    %952 = vmatmul.mubr.f32.gmra.mxu0 %v870
    %v953 = vpop.f32.mrf.mxu0
    %v954 = vadd.f32 0.0, %v953
    %v955 = vpop.f32.mrf.mxu0
    %956 = vdwg.mxu0
    %v957 = vlaneseq
    %v958 = vshrl.u32 %v957, 7
    %v959 = vsub.s32 1, %v958
    %v960 = vrot.slane %v503, %v959
    %v961 = vmul.f32 %v960, %v939
    %v962 = vmul.f32 %v960, %v944
    %v963 = vmul.f32 %v960, %v949
    %v964 = vmul.f32 %v960, %v954
    %v965 = vadd.f32 %v851, %v961
    %v966 = vadd.f32 %v852, %v962
    %v967 = vadd.f32 %v853, %v963
    %v968 = vadd.f32 %v854, %v964
    %v969 = vlaneseq
    %v970 = vshrl.u32 %v969, 7
    %v971 = vsub.s32 2, %v970
    %v972 = vrot.slane %v193, %v971
    %v973 = vmul.f32 %v972, %v965
    %v974 = vmul.f32 %v972, %v966
    %v975 = vmul.f32 %v972, %v967
    %v976 = vmul.f32 %v972, %v968
    %s977 = scalar_lea.vmem [#allocation5], 64
    %v978 = vld [vmem:[%s977] sm:$0xff]
    %v979 = vld [vmem:[%s977 + $0x8] sm:$0xff]
    %v980 = vld [vmem:[%s977 + $0x10] sm:$0xff]
    %v981 = vld [vmem:[%s977 + $0x18] sm:$0xff]
    %v983 = vsel %vm737, %v978, 0
    %v986 = vsel %vm737, %v979, 0
    %v989 = vsel %vm737, %v980, 0
    %v992 = vsel %vm737, %v981, 0
    %994 = vmatprep.subr.mxu0 0.0
    %995 = vmatpush1.msra.mxu0 0.0
    %996 = vmatprep.subr.mxu0 0.0
    %997 = vmatpush1.msra.mxu0 0.0
    %998 = vmatprep.subr.mxu0 0.0
    %999 = vmatpush1.msra.mxu0 0.0
    %1000 = vmatprep.subr.mxu0 0.0
    %1001 = vmatpush1.msra.mxu0 0.0
    %1002 = vmatprep.subr.mxu0 0.0
    %1003 = vmatpush1.msra.mxu0 0.0
    %1004 = vmatprep.subr.mxu0 0.0
    %1005 = vmatpush1.msra.mxu0 0.0
    %1006 = vmatprep.subr.mxu0 0.0
    %1007 = vmatpush1.msra.mxu0 0.0
    %1008 = vmatprep.subr.mxu0 0.0
    %1009 = vmatpush1.msra.mxu0 0.0
    %1010 = vmatprep.subr.mxu0 0.0
    %1011 = vmatpush1.msra.mxu0 0.0
    %1012 = vmatprep.subr.mxu0 0.0
    %1013 = vmatpush1.msra.mxu0 0.0
    %1014 = vmatprep.subr.mxu0 0.0
    %1015 = vmatpush1.msra.mxu0 0.0
    %1016 = vmatprep.subr.mxu0 0.0
    %1017 = vmatpush1.msra.mxu0 0.0
    %1018 = vmatprep.subr.mxu0 0.0
    %1019 = vmatpush1.msra.mxu0 %v968
    %1020 = vmatprep.subr.mxu0 0.0
    %1021 = vmatpush1.msra.mxu0 %v967
    %1022 = vmatprep.subr.mxu0 0.0
    %1023 = vmatpush1.msra.mxu0 %v966
    %1024 = vmatprep.subr.mxu0 0.0
    %1025 = vmatpush1.msra.mxu0 %v965
    %1026 = vmatprep.subr.mxu0 0.0
    %1027 = vmatpush2.msra.mxu0 0.0
    %1028 = vmatprep.subr.mxu0 0.0
    %1029 = vmatpush2.msra.mxu0 0.0
    %1030 = vmatprep.subr.mxu0 0.0
    %1031 = vmatpush2.msra.mxu0 0.0
    %1032 = vmatprep.subr.mxu0 0.0
    %1033 = vmatpush2.msra.mxu0 0.0
    %1034 = vmatprep.subr.mxu0 0.0
    %1035 = vmatpush2.msra.mxu0 0.0
    %1036 = vmatprep.subr.mxu0 0.0
    %1037 = vmatpush2.msra.mxu0 0.0
    %1038 = vmatprep.subr.mxu0 0.0
    %1039 = vmatpush2.msra.mxu0 0.0
    %1040 = vmatprep.subr.mxu0 0.0
    %1041 = vmatpush2.msra.mxu0 0.0
    %1042 = vmatprep.subr.mxu0 0.0
    %1043 = vmatpush2.msra.mxu0 0.0
    %1044 = vmatprep.subr.mxu0 0.0
    %1045 = vmatpush2.msra.mxu0 0.0
    %1046 = vmatprep.subr.mxu0 0.0
    %1047 = vmatpush2.msra.mxu0 0.0
    %1048 = vmatprep.subr.mxu0 0.0
    %1049 = vmatpush2.msra.mxu0 0.0
    %1050 = vmatprep.subr.mxu0 0.0
    %1051 = vmatpush2.msra.mxu0 0.0
    %1052 = vmatprep.subr.mxu0 0.0
    %1053 = vmatpush2.msra.mxu0 0.0
    %1054 = vmatprep.subr.mxu0 0.0
    %1055 = vmatpush2.msra.mxu0 0.0
    %1056 = vmatprep.subr.mxu0 0.0
    %1057 = vmatpush2.msra.mxu0 0.0
    %1058 = vmatprep.mubr.f32.mxu0 0.0
    %1059 = vmatmul.mubr.f32.gmra.mxu0 %v983
    %v1060 = vpop.f32.mrf.mxu0
    %v1061 = vadd.f32 0.0, %v1060
    %v1062 = vpop.f32.mrf.mxu0
    %1063 = vmatprep.mubr.f32.mxu0 0.0
    %1064 = vmatmul.mubr.f32.gmra.mxu0 %v986
    %v1065 = vpop.f32.mrf.mxu0
    %v1066 = vadd.f32 0.0, %v1065
    %v1067 = vpop.f32.mrf.mxu0
    %1068 = vmatprep.mubr.f32.mxu0 0.0
    %1069 = vmatmul.mubr.f32.gmra.mxu0 %v989
    %v1070 = vpop.f32.mrf.mxu0
    %v1071 = vadd.f32 0.0, %v1070
    %v1072 = vpop.f32.mrf.mxu0
    %1073 = vmatprep.mubr.f32.mxu0 0.0
    %1074 = vmatmul.mubr.f32.gmra.mxu0 %v992
    %v1075 = vpop.f32.mrf.mxu0
    %v1076 = vadd.f32 0.0, %v1075
    %v1077 = vpop.f32.mrf.mxu0
    %1078 = vdwg.mxu0
    %v1079 = vlaneseq
    %v1080 = vshrl.u32 %v1079, 7
    %v1081 = vsub.s32 2, %v1080
    %v1082 = vrot.slane %v503, %v1081
    %v1083 = vmul.f32 %v1082, %v1061
    %v1084 = vmul.f32 %v1082, %v1066
    %v1085 = vmul.f32 %v1082, %v1071
    %v1086 = vmul.f32 %v1082, %v1076
    %v1087 = vadd.f32 %v973, %v1083
    %v1088 = vadd.f32 %v974, %v1084
    %v1089 = vadd.f32 %v975, %v1085
    %v1090 = vadd.f32 %v976, %v1086
    %v1091 = vld [vmem:[%s3] sm:$0xff]
    %v1092 = vld [vmem:[%s3 + $0x8] sm:$0xff]
    %v1093 = vld [vmem:[%s3 + $0x10] sm:$0xff]
    %v1094 = vld [vmem:[%s3 + $0x18] sm:$0xff]
    %v1096 = vsel %vm737, %v1091, 0
    %v1099 = vsel %vm737, %v1092, 0
    %v1102 = vsel %vm737, %v1093, 0
    %v1105 = vsel %vm737, %v1094, 0
    %1107 = vmatprep.subr.mxu0 0.0
    %1108 = vmatpush1.msra.mxu0 0.0
    %1109 = vmatprep.subr.mxu0 0.0
    %1110 = vmatpush1.msra.mxu0 0.0
    %1111 = vmatprep.subr.mxu0 0.0
    %1112 = vmatpush1.msra.mxu0 0.0
    %1113 = vmatprep.subr.mxu0 0.0
    %1114 = vmatpush1.msra.mxu0 0.0
    %1115 = vmatprep.subr.mxu0 0.0
    %1116 = vmatpush1.msra.mxu0 0.0
    %1117 = vmatprep.subr.mxu0 0.0
    %1118 = vmatpush1.msra.mxu0 0.0
    %1119 = vmatprep.subr.mxu0 0.0
    %1120 = vmatpush1.msra.mxu0 0.0
    %1121 = vmatprep.subr.mxu0 0.0
    %1122 = vmatpush1.msra.mxu0 0.0
    %1123 = vmatprep.subr.mxu0 0.0
    %1124 = vmatpush1.msra.mxu0 0.0
    %1125 = vmatprep.subr.mxu0 0.0
    %1126 = vmatpush1.msra.mxu0 0.0
    %1127 = vmatprep.subr.mxu0 0.0
    %1128 = vmatpush1.msra.mxu0 0.0
    %1129 = vmatprep.subr.mxu0 0.0
    %1130 = vmatpush1.msra.mxu0 0.0
    %1131 = vmatprep.subr.mxu0 0.0
    %1132 = vmatpush1.msra.mxu0 %v1090
    %1133 = vmatprep.subr.mxu0 0.0
    %1134 = vmatpush1.msra.mxu0 %v1089
    %1135 = vmatprep.subr.mxu0 0.0
    %1136 = vmatpush1.msra.mxu0 %v1088
    %1137 = vmatprep.subr.mxu0 0.0
    %1138 = vmatpush1.msra.mxu0 %v1087
    %1139 = vmatprep.subr.mxu0 0.0
    %1140 = vmatpush2.msra.mxu0 0.0
    %1141 = vmatprep.subr.mxu0 0.0
    %1142 = vmatpush2.msra.mxu0 0.0
    %1143 = vmatprep.subr.mxu0 0.0
    %1144 = vmatpush2.msra.mxu0 0.0
    %1145 = vmatprep.subr.mxu0 0.0
    %1146 = vmatpush2.msra.mxu0 0.0
    %1147 = vmatprep.subr.mxu0 0.0
    %1148 = vmatpush2.msra.mxu0 0.0
    %1149 = vmatprep.subr.mxu0 0.0
    %1150 = vmatpush2.msra.mxu0 0.0
    %1151 = vmatprep.subr.mxu0 0.0
    %1152 = vmatpush2.msra.mxu0 0.0
    %1153 = vmatprep.subr.mxu0 0.0
    %1154 = vmatpush2.msra.mxu0 0.0
    %1155 = vmatprep.subr.mxu0 0.0
    %1156 = vmatpush2.msra.mxu0 0.0
    %1157 = vmatprep.subr.mxu0 0.0
    %1158 = vmatpush2.msra.mxu0 0.0
    %1159 = vmatprep.subr.mxu0 0.0
    %1160 = vmatpush2.msra.mxu0 0.0
    %1161 = vmatprep.subr.mxu0 0.0
    %1162 = vmatpush2.msra.mxu0 0.0
    %1163 = vmatprep.subr.mxu0 0.0
    %1164 = vmatpush2.msra.mxu0 0.0
    %1165 = vmatprep.subr.mxu0 0.0
    %1166 = vmatpush2.msra.mxu0 0.0
    %1167 = vmatprep.subr.mxu0 0.0
    %1168 = vmatpush2.msra.mxu0 0.0
    %1169 = vmatprep.subr.mxu0 0.0
    %1170 = vmatpush2.msra.mxu0 0.0
    %1171 = vmatprep.mubr.f32.mxu0 0.0
    %1172 = vmatmul.mubr.f32.gmra.mxu0 %v1096
    %v1173 = vpop.f32.mrf.mxu0
    %v1174 = vadd.f32 0.0, %v1173
    %v1175 = vpop.f32.mrf.mxu0
    %1176 = vmatprep.mubr.f32.mxu0 0.0
    %1177 = vmatmul.mubr.f32.gmra.mxu0 %v1099
    %v1178 = vpop.f32.mrf.mxu0
    %v1179 = vadd.f32 0.0, %v1178
    %v1180 = vpop.f32.mrf.mxu0
    %1181 = vmatprep.mubr.f32.mxu0 0.0
    %1182 = vmatmul.mubr.f32.gmra.mxu0 %v1102
    %v1183 = vpop.f32.mrf.mxu0
    %v1184 = vadd.f32 0.0, %v1183
    %v1185 = vpop.f32.mrf.mxu0
    %1186 = vmatprep.mubr.f32.mxu0 0.0
    %1187 = vmatmul.mubr.f32.gmra.mxu0 %v1105
    %v1188 = vpop.f32.mrf.mxu0
    %v1189 = vadd.f32 0.0, %v1188
    %v1190 = vpop.f32.mrf.mxu0
    %1191 = vdwg.mxu0
    %v1192 = vld [vmem:[#allocation7] sm:$0xff]
    %v1193 = vld [vmem:[#allocation7 + $0x8] sm:$0xff]
    %v1194 = vld [vmem:[#allocation7 + $0x10] sm:$0xff]
    %v1195 = vld [vmem:[#allocation7 + $0x18] sm:$0xff]
    %v1197 = vsel %vm737, %v1192, 0
    %v1200 = vsel %vm737, %v1193, 0
    %v1203 = vsel %vm737, %v1194, 0
    %v1206 = vsel %vm737, %v1195, 0
    %1208 = vmatprep.subr.mxu0 0.0
    %1209 = vmatpush1.msra.mxu0 0.0
    %1210 = vmatprep.subr.mxu0 0.0
    %1211 = vmatpush1.msra.mxu0 0.0
    %1212 = vmatprep.subr.mxu0 0.0
    %1213 = vmatpush1.msra.mxu0 0.0
    %1214 = vmatprep.subr.mxu0 0.0
    %1215 = vmatpush1.msra.mxu0 0.0
    %1216 = vmatprep.subr.mxu0 0.0
    %1217 = vmatpush1.msra.mxu0 0.0
    %1218 = vmatprep.subr.mxu0 0.0
    %1219 = vmatpush1.msra.mxu0 0.0
    %1220 = vmatprep.subr.mxu0 0.0
    %1221 = vmatpush1.msra.mxu0 0.0
    %1222 = vmatprep.subr.mxu0 0.0
    %1223 = vmatpush1.msra.mxu0 0.0
    %1224 = vmatprep.subr.mxu0 0.0
    %1225 = vmatpush1.msra.mxu0 0.0
    %1226 = vmatprep.subr.mxu0 0.0
    %1227 = vmatpush1.msra.mxu0 0.0
    %1228 = vmatprep.subr.mxu0 0.0
    %1229 = vmatpush1.msra.mxu0 0.0
    %1230 = vmatprep.subr.mxu0 0.0
    %1231 = vmatpush1.msra.mxu0 0.0
    %1232 = vmatprep.subr.mxu0 0.0
    %1233 = vmatpush1.msra.mxu0 %v1090
    %1234 = vmatprep.subr.mxu0 0.0
    %1235 = vmatpush1.msra.mxu0 %v1089
    %1236 = vmatprep.subr.mxu0 0.0
    %1237 = vmatpush1.msra.mxu0 %v1088
    %1238 = vmatprep.subr.mxu0 0.0
    %1239 = vmatpush1.msra.mxu0 %v1087
    %1240 = vmatprep.subr.mxu0 0.0
    %1241 = vmatpush2.msra.mxu0 0.0
    %1242 = vmatprep.subr.mxu0 0.0
    %1243 = vmatpush2.msra.mxu0 0.0
    %1244 = vmatprep.subr.mxu0 0.0
    %1245 = vmatpush2.msra.mxu0 0.0
    %1246 = vmatprep.subr.mxu0 0.0
    %1247 = vmatpush2.msra.mxu0 0.0
    %1248 = vmatprep.subr.mxu0 0.0
    %1249 = vmatpush2.msra.mxu0 0.0
    %1250 = vmatprep.subr.mxu0 0.0
    %1251 = vmatpush2.msra.mxu0 0.0
    %1252 = vmatprep.subr.mxu0 0.0
    %1253 = vmatpush2.msra.mxu0 0.0
    %1254 = vmatprep.subr.mxu0 0.0
    %1255 = vmatpush2.msra.mxu0 0.0
    %1256 = vmatprep.subr.mxu0 0.0
    %1257 = vmatpush2.msra.mxu0 0.0
    %1258 = vmatprep.subr.mxu0 0.0
    %1259 = vmatpush2.msra.mxu0 0.0
    %1260 = vmatprep.subr.mxu0 0.0
    %1261 = vmatpush2.msra.mxu0 0.0
    %1262 = vmatprep.subr.mxu0 0.0
    %1263 = vmatpush2.msra.mxu0 0.0
    %1264 = vmatprep.subr.mxu0 0.0
    %1265 = vmatpush2.msra.mxu0 0.0
    %1266 = vmatprep.subr.mxu0 0.0
    %1267 = vmatpush2.msra.mxu0 0.0
    %1268 = vmatprep.subr.mxu0 0.0
    %1269 = vmatpush2.msra.mxu0 0.0
    %1270 = vmatprep.subr.mxu0 0.0
    %1271 = vmatpush2.msra.mxu0 0.0
    %1272 = vmatprep.mubr.f32.mxu0 0.0
    %1273 = vmatmul.mubr.f32.gmra.mxu0 %v1197
    %v1274 = vpop.f32.mrf.mxu0
    %v1275 = vadd.f32 0.0, %v1274
    %v1276 = vpop.f32.mrf.mxu0
    %1277 = vmatprep.mubr.f32.mxu0 0.0
    %1278 = vmatmul.mubr.f32.gmra.mxu0 %v1200
    %v1279 = vpop.f32.mrf.mxu0
    %v1280 = vadd.f32 0.0, %v1279
    %v1281 = vpop.f32.mrf.mxu0
    %1282 = vmatprep.mubr.f32.mxu0 0.0
    %1283 = vmatmul.mubr.f32.gmra.mxu0 %v1203
    %v1284 = vpop.f32.mrf.mxu0
    %v1285 = vadd.f32 0.0, %v1284
    %v1286 = vpop.f32.mrf.mxu0
    %1287 = vmatprep.mubr.f32.mxu0 0.0
    %1288 = vmatmul.mubr.f32.gmra.mxu0 %v1206
    %v1289 = vpop.f32.mrf.mxu0
    %v1290 = vadd.f32 0.0, %v1289
    %v1291 = vpop.f32.mrf.mxu0
    %1292 = vdwg.mxu0
    %v1293 = vlaneseq
    %v1294 = vshrl.u32 %v1293, 7
    %v1295 = vsub.s32 3, %v1294
    %v1296 = vrot.slane %v193, %v1295
    %v1297 = vmul.f32 %v1296, %v1174
    %v1298 = vmul.f32 %v1296, %v1179
    %v1299 = vmul.f32 %v1296, %v1184
    %v1300 = vmul.f32 %v1296, %v1189
    %v1301 = vlaneseq
    %v1302 = vshrl.u32 %v1301, 7
    %v1303 = vsub.s32 3, %v1302
    %v1304 = vrot.slane %v503, %v1303
    %v1305 = vmul.f32 %v1304, %v1275
    %v1306 = vmul.f32 %v1304, %v1280
    %v1307 = vmul.f32 %v1304, %v1285
    %v1308 = vmul.f32 %v1304, %v1290
    %v1309 = vadd.f32 %v1297, %v1305
    %v1310 = vadd.f32 %v1298, %v1306
    %v1311 = vadd.f32 %v1299, %v1307
    %v1312 = vadd.f32 %v1300, %v1308
    %v1313 = vlaneseq
    %v1314 = vshrl.u32 %v1313, 7
    %v1315 = vsub.s32 4, %v1314
    %v1316 = vrot.slane %v193, %v1315
    %v1317 = vmul.f32 %v1316, %v1309
    %v1318 = vmul.f32 %v1316, %v1310
    %v1319 = vmul.f32 %v1316, %v1311
    %v1320 = vmul.f32 %v1316, %v1312
    %1321 = vmatprep.subr.mxu0 0.0
    %1322 = vmatpush1.msra.mxu0 0.0
    %1323 = vmatprep.subr.mxu0 0.0
    %1324 = vmatpush1.msra.mxu0 0.0
    %1325 = vmatprep.subr.mxu0 0.0
    %1326 = vmatpush1.msra.mxu0 0.0
    %1327 = vmatprep.subr.mxu0 0.0
    %1328 = vmatpush1.msra.mxu0 0.0
    %1329 = vmatprep.subr.mxu0 0.0
    %1330 = vmatpush1.msra.mxu0 0.0
    %1331 = vmatprep.subr.mxu0 0.0
    %1332 = vmatpush1.msra.mxu0 0.0
    %1333 = vmatprep.subr.mxu0 0.0
    %1334 = vmatpush1.msra.mxu0 0.0
    %1335 = vmatprep.subr.mxu0 0.0
    %1336 = vmatpush1.msra.mxu0 0.0
    %1337 = vmatprep.subr.mxu0 0.0
    %1338 = vmatpush1.msra.mxu0 0.0
    %1339 = vmatprep.subr.mxu0 0.0
    %1340 = vmatpush1.msra.mxu0 0.0
    %1341 = vmatprep.subr.mxu0 0.0
    %1342 = vmatpush1.msra.mxu0 0.0
    %1343 = vmatprep.subr.mxu0 0.0
    %1344 = vmatpush1.msra.mxu0 0.0
    %1345 = vmatprep.subr.mxu0 0.0
    %1346 = vmatpush1.msra.mxu0 %v1312
    %1347 = vmatprep.subr.mxu0 0.0
    %1348 = vmatpush1.msra.mxu0 %v1311
    %1349 = vmatprep.subr.mxu0 0.0
    %1350 = vmatpush1.msra.mxu0 %v1310
    %1351 = vmatprep.subr.mxu0 0.0
    %1352 = vmatpush1.msra.mxu0 %v1309
    %1353 = vmatprep.subr.mxu0 0.0
    %1354 = vmatpush2.msra.mxu0 0.0
    %1355 = vmatprep.subr.mxu0 0.0
    %1356 = vmatpush2.msra.mxu0 0.0
    %1357 = vmatprep.subr.mxu0 0.0
    %1358 = vmatpush2.msra.mxu0 0.0
    %1359 = vmatprep.subr.mxu0 0.0
    %1360 = vmatpush2.msra.mxu0 0.0
    %1361 = vmatprep.subr.mxu0 0.0
    %1362 = vmatpush2.msra.mxu0 0.0
    %1363 = vmatprep.subr.mxu0 0.0
    %1364 = vmatpush2.msra.mxu0 0.0
    %1365 = vmatprep.subr.mxu0 0.0
    %1366 = vmatpush2.msra.mxu0 0.0
    %1367 = vmatprep.subr.mxu0 0.0
    %1368 = vmatpush2.msra.mxu0 0.0
    %1369 = vmatprep.subr.mxu0 0.0
    %1370 = vmatpush2.msra.mxu0 0.0
    %1371 = vmatprep.subr.mxu0 0.0
    %1372 = vmatpush2.msra.mxu0 0.0
    %1373 = vmatprep.subr.mxu0 0.0
    %1374 = vmatpush2.msra.mxu0 0.0
    %1375 = vmatprep.subr.mxu0 0.0
    %1376 = vmatpush2.msra.mxu0 0.0
    %1377 = vmatprep.subr.mxu0 0.0
    %1378 = vmatpush2.msra.mxu0 0.0
    %1379 = vmatprep.subr.mxu0 0.0
    %1380 = vmatpush2.msra.mxu0 0.0
    %1381 = vmatprep.subr.mxu0 0.0
    %1382 = vmatpush2.msra.mxu0 0.0
    %1383 = vmatprep.subr.mxu0 0.0
    %1384 = vmatpush2.msra.mxu0 0.0
    %1385 = vmatprep.mubr.f32.mxu0 0.0
    %1386 = vmatmul.mubr.f32.gmra.mxu0 %v739
    %v1387 = vpop.f32.mrf.mxu0
    %v1388 = vadd.f32 0.0, %v1387
    %v1389 = vpop.f32.mrf.mxu0
    %1390 = vmatprep.mubr.f32.mxu0 0.0
    %1391 = vmatmul.mubr.f32.gmra.mxu0 %v742
    %v1392 = vpop.f32.mrf.mxu0
    %v1393 = vadd.f32 0.0, %v1392
    %v1394 = vpop.f32.mrf.mxu0
    %1395 = vmatprep.mubr.f32.mxu0 0.0
    %1396 = vmatmul.mubr.f32.gmra.mxu0 %v745
    %v1397 = vpop.f32.mrf.mxu0
    %v1398 = vadd.f32 0.0, %v1397
    %v1399 = vpop.f32.mrf.mxu0
    %1400 = vmatprep.mubr.f32.mxu0 0.0
    %1401 = vmatmul.mubr.f32.gmra.mxu0 %v748
    %v1402 = vpop.f32.mrf.mxu0
    %v1403 = vadd.f32 0.0, %v1402
    %v1404 = vpop.f32.mrf.mxu0
    %1405 = vdwg.mxu0
    %v1406 = vlaneseq
    %v1407 = vshrl.u32 %v1406, 7
    %v1408 = vsub.s32 4, %v1407
    %v1409 = vrot.slane %v503, %v1408
    %v1410 = vmul.f32 %v1409, %v1388
    %v1411 = vmul.f32 %v1409, %v1393
    %v1412 = vmul.f32 %v1409, %v1398
    %v1413 = vmul.f32 %v1409, %v1403
    %v1414 = vadd.f32 %v1317, %v1410
    %v1415 = vadd.f32 %v1318, %v1411
    %v1416 = vadd.f32 %v1319, %v1412
    %v1417 = vadd.f32 %v1320, %v1413
    %v1418 = vlaneseq
    %v1419 = vshrl.u32 %v1418, 7
    %v1420 = vsub.s32 5, %v1419
    %v1421 = vrot.slane %v193, %v1420
    %v1422 = vmul.f32 %v1421, %v1414
    %v1423 = vmul.f32 %v1421, %v1415
    %v1424 = vmul.f32 %v1421, %v1416
    %v1425 = vmul.f32 %v1421, %v1417
    %1426 = vmatprep.subr.mxu0 0.0
    %1427 = vmatpush1.msra.mxu0 0.0
    %1428 = vmatprep.subr.mxu0 0.0
    %1429 = vmatpush1.msra.mxu0 0.0
    %1430 = vmatprep.subr.mxu0 0.0
    %1431 = vmatpush1.msra.mxu0 0.0
    %1432 = vmatprep.subr.mxu0 0.0
    %1433 = vmatpush1.msra.mxu0 0.0
    %1434 = vmatprep.subr.mxu0 0.0
    %1435 = vmatpush1.msra.mxu0 0.0
    %1436 = vmatprep.subr.mxu0 0.0
    %1437 = vmatpush1.msra.mxu0 0.0
    %1438 = vmatprep.subr.mxu0 0.0
    %1439 = vmatpush1.msra.mxu0 0.0
    %1440 = vmatprep.subr.mxu0 0.0
    %1441 = vmatpush1.msra.mxu0 0.0
    %1442 = vmatprep.subr.mxu0 0.0
    %1443 = vmatpush1.msra.mxu0 0.0
    %1444 = vmatprep.subr.mxu0 0.0
    %1445 = vmatpush1.msra.mxu0 0.0
    %1446 = vmatprep.subr.mxu0 0.0
    %1447 = vmatpush1.msra.mxu0 0.0
    %1448 = vmatprep.subr.mxu0 0.0
    %1449 = vmatpush1.msra.mxu0 0.0
    %1450 = vmatprep.subr.mxu0 0.0
    %1451 = vmatpush1.msra.mxu0 %v1417
    %1452 = vmatprep.subr.mxu0 0.0
    %1453 = vmatpush1.msra.mxu0 %v1416
    %1454 = vmatprep.subr.mxu0 0.0
    %1455 = vmatpush1.msra.mxu0 %v1415
    %1456 = vmatprep.subr.mxu0 0.0
    %1457 = vmatpush1.msra.mxu0 %v1414
    %1458 = vmatprep.subr.mxu0 0.0
    %1459 = vmatpush2.msra.mxu0 0.0
    %1460 = vmatprep.subr.mxu0 0.0
    %1461 = vmatpush2.msra.mxu0 0.0
    %1462 = vmatprep.subr.mxu0 0.0
    %1463 = vmatpush2.msra.mxu0 0.0
    %1464 = vmatprep.subr.mxu0 0.0
    %1465 = vmatpush2.msra.mxu0 0.0
    %1466 = vmatprep.subr.mxu0 0.0
    %1467 = vmatpush2.msra.mxu0 0.0
    %1468 = vmatprep.subr.mxu0 0.0
    %1469 = vmatpush2.msra.mxu0 0.0
    %1470 = vmatprep.subr.mxu0 0.0
    %1471 = vmatpush2.msra.mxu0 0.0
    %1472 = vmatprep.subr.mxu0 0.0
    %1473 = vmatpush2.msra.mxu0 0.0
    %1474 = vmatprep.subr.mxu0 0.0
    %1475 = vmatpush2.msra.mxu0 0.0
    %1476 = vmatprep.subr.mxu0 0.0
    %1477 = vmatpush2.msra.mxu0 0.0
    %1478 = vmatprep.subr.mxu0 0.0
    %1479 = vmatpush2.msra.mxu0 0.0
    %1480 = vmatprep.subr.mxu0 0.0
    %1481 = vmatpush2.msra.mxu0 0.0
    %1482 = vmatprep.subr.mxu0 0.0
    %1483 = vmatpush2.msra.mxu0 0.0
    %1484 = vmatprep.subr.mxu0 0.0
    %1485 = vmatpush2.msra.mxu0 0.0
    %1486 = vmatprep.subr.mxu0 0.0
    %1487 = vmatpush2.msra.mxu0 0.0
    %1488 = vmatprep.subr.mxu0 0.0
    %1489 = vmatpush2.msra.mxu0 0.0
    %1490 = vmatprep.mubr.f32.mxu0 0.0
    %1491 = vmatmul.mubr.f32.gmra.mxu0 %v861
    %v1492 = vpop.f32.mrf.mxu0
    %v1493 = vadd.f32 0.0, %v1492
    %v1494 = vpop.f32.mrf.mxu0
    %1495 = vmatprep.mubr.f32.mxu0 0.0
    %1496 = vmatmul.mubr.f32.gmra.mxu0 %v864
    %v1497 = vpop.f32.mrf.mxu0
    %v1498 = vadd.f32 0.0, %v1497
    %v1499 = vpop.f32.mrf.mxu0
    %1500 = vmatprep.mubr.f32.mxu0 0.0
    %1501 = vmatmul.mubr.f32.gmra.mxu0 %v867
    %v1502 = vpop.f32.mrf.mxu0
    %v1503 = vadd.f32 0.0, %v1502
    %v1504 = vpop.f32.mrf.mxu0
    %1505 = vmatprep.mubr.f32.mxu0 0.0
    %1506 = vmatmul.mubr.f32.gmra.mxu0 %v870
    %v1507 = vpop.f32.mrf.mxu0
    %v1508 = vadd.f32 0.0, %v1507
    %v1509 = vpop.f32.mrf.mxu0
    %1510 = vdwg.mxu0
    %v1511 = vlaneseq
    %v1512 = vshrl.u32 %v1511, 7
    %v1513 = vsub.s32 5, %v1512
    %v1514 = vrot.slane %v503, %v1513
    %v1515 = vmul.f32 %v1514, %v1493
    %v1516 = vmul.f32 %v1514, %v1498
    %v1517 = vmul.f32 %v1514, %v1503
    %v1518 = vmul.f32 %v1514, %v1508
    %v1519 = vadd.f32 %v1422, %v1515
    %v1520 = vadd.f32 %v1423, %v1516
    %v1521 = vadd.f32 %v1424, %v1517
    %v1522 = vadd.f32 %v1425, %v1518
    %v1523 = vlaneseq
    %v1524 = vshrl.u32 %v1523, 7
    %v1525 = vsub.s32 6, %v1524
    %v1526 = vrot.slane %v193, %v1525
    %v1527 = vmul.f32 %v1526, %v1519
    %v1528 = vmul.f32 %v1526, %v1520
    %v1529 = vmul.f32 %v1526, %v1521
    %v1530 = vmul.f32 %v1526, %v1522
    %1531 = vmatprep.subr.mxu0 0.0
    %1532 = vmatpush1.msra.mxu0 0.0
    %1533 = vmatprep.subr.mxu0 0.0
    %1534 = vmatpush1.msra.mxu0 0.0
    %1535 = vmatprep.subr.mxu0 0.0
    %1536 = vmatpush1.msra.mxu0 0.0
    %1537 = vmatprep.subr.mxu0 0.0
    %1538 = vmatpush1.msra.mxu0 0.0
    %1539 = vmatprep.subr.mxu0 0.0
    %1540 = vmatpush1.msra.mxu0 0.0
    %1541 = vmatprep.subr.mxu0 0.0
    %1542 = vmatpush1.msra.mxu0 0.0
    %1543 = vmatprep.subr.mxu0 0.0
    %1544 = vmatpush1.msra.mxu0 0.0
    %1545 = vmatprep.subr.mxu0 0.0
    %1546 = vmatpush1.msra.mxu0 0.0
    %1547 = vmatprep.subr.mxu0 0.0
    %1548 = vmatpush1.msra.mxu0 0.0
    %1549 = vmatprep.subr.mxu0 0.0
    %1550 = vmatpush1.msra.mxu0 0.0
    %1551 = vmatprep.subr.mxu0 0.0
    %1552 = vmatpush1.msra.mxu0 0.0
    %1553 = vmatprep.subr.mxu0 0.0
    %1554 = vmatpush1.msra.mxu0 0.0
    %1555 = vmatprep.subr.mxu0 0.0
    %1556 = vmatpush1.msra.mxu0 %v1522
    %1557 = vmatprep.subr.mxu0 0.0
    %1558 = vmatpush1.msra.mxu0 %v1521
    %1559 = vmatprep.subr.mxu0 0.0
    %1560 = vmatpush1.msra.mxu0 %v1520
    %1561 = vmatprep.subr.mxu0 0.0
    %1562 = vmatpush1.msra.mxu0 %v1519
    %1563 = vmatprep.subr.mxu0 0.0
    %1564 = vmatpush2.msra.mxu0 0.0
    %1565 = vmatprep.subr.mxu0 0.0
    %1566 = vmatpush2.msra.mxu0 0.0
    %1567 = vmatprep.subr.mxu0 0.0
    %1568 = vmatpush2.msra.mxu0 0.0
    %1569 = vmatprep.subr.mxu0 0.0
    %1570 = vmatpush2.msra.mxu0 0.0
    %1571 = vmatprep.subr.mxu0 0.0
    %1572 = vmatpush2.msra.mxu0 0.0
    %1573 = vmatprep.subr.mxu0 0.0
    %1574 = vmatpush2.msra.mxu0 0.0
    %1575 = vmatprep.subr.mxu0 0.0
    %1576 = vmatpush2.msra.mxu0 0.0
    %1577 = vmatprep.subr.mxu0 0.0
    %1578 = vmatpush2.msra.mxu0 0.0
    %1579 = vmatprep.subr.mxu0 0.0
    %1580 = vmatpush2.msra.mxu0 0.0
    %1581 = vmatprep.subr.mxu0 0.0
    %1582 = vmatpush2.msra.mxu0 0.0
    %1583 = vmatprep.subr.mxu0 0.0
    %1584 = vmatpush2.msra.mxu0 0.0
    %1585 = vmatprep.subr.mxu0 0.0
    %1586 = vmatpush2.msra.mxu0 0.0
    %1587 = vmatprep.subr.mxu0 0.0
    %1588 = vmatpush2.msra.mxu0 0.0
    %1589 = vmatprep.subr.mxu0 0.0
    %1590 = vmatpush2.msra.mxu0 0.0
    %1591 = vmatprep.subr.mxu0 0.0
    %1592 = vmatpush2.msra.mxu0 0.0
    %1593 = vmatprep.subr.mxu0 0.0
    %1594 = vmatpush2.msra.mxu0 0.0
    %1595 = vmatprep.mubr.f32.mxu0 0.0
    %1596 = vmatmul.mubr.f32.gmra.mxu0 %v983
    %v1597 = vpop.f32.mrf.mxu0
    %v1598 = vadd.f32 0.0, %v1597
    %v1599 = vpop.f32.mrf.mxu0
    %1600 = vmatprep.mubr.f32.mxu0 0.0
    %1601 = vmatmul.mubr.f32.gmra.mxu0 %v986
    %v1602 = vpop.f32.mrf.mxu0
    %v1603 = vadd.f32 0.0, %v1602
    %v1604 = vpop.f32.mrf.mxu0
    %1605 = vmatprep.mubr.f32.mxu0 0.0
    %1606 = vmatmul.mubr.f32.gmra.mxu0 %v989
    %v1607 = vpop.f32.mrf.mxu0
    %v1608 = vadd.f32 0.0, %v1607
    %v1609 = vpop.f32.mrf.mxu0
    %1610 = vmatprep.mubr.f32.mxu0 0.0
    %1611 = vmatmul.mubr.f32.gmra.mxu0 %v992
    %v1612 = vpop.f32.mrf.mxu0
    %v1613 = vadd.f32 0.0, %v1612
    %v1614 = vpop.f32.mrf.mxu0
    %1615 = vdwg.mxu0
    %v1616 = vlaneseq
    %v1617 = vshrl.u32 %v1616, 7
    %v1618 = vsub.s32 6, %v1617
    %v1619 = vrot.slane %v503, %v1618
    %v1620 = vmul.f32 %v1619, %v1598
    %v1621 = vmul.f32 %v1619, %v1603
    %v1622 = vmul.f32 %v1619, %v1608
    %v1623 = vmul.f32 %v1619, %v1613
    %v1624 = vadd.f32 %v1527, %v1620
    %v1625 = vadd.f32 %v1528, %v1621
    %v1626 = vadd.f32 %v1529, %v1622
    %v1627 = vadd.f32 %v1530, %v1623
    %s1628 = scalar_lea.vmem %s3, 32
    %v1629 = vld [vmem:[%s1628] sm:$0xff]
    %v1630 = vld [vmem:[%s1628 + $0x8] sm:$0xff]
    %v1631 = vld [vmem:[%s1628 + $0x10] sm:$0xff]
    %v1632 = vld [vmem:[%s1628 + $0x18] sm:$0xff]
    %v1634 = vsel %vm737, %v1629, 0
    %v1637 = vsel %vm737, %v1630, 0
    %v1640 = vsel %vm737, %v1631, 0
    %v1643 = vsel %vm737, %v1632, 0
    %1645 = vmatprep.subr.mxu0 0.0
    %1646 = vmatpush1.msra.mxu0 0.0
    %1647 = vmatprep.subr.mxu0 0.0
    %1648 = vmatpush1.msra.mxu0 0.0
    %1649 = vmatprep.subr.mxu0 0.0
    %1650 = vmatpush1.msra.mxu0 0.0
    %1651 = vmatprep.subr.mxu0 0.0
    %1652 = vmatpush1.msra.mxu0 0.0
    %1653 = vmatprep.subr.mxu0 0.0
    %1654 = vmatpush1.msra.mxu0 0.0
    %1655 = vmatprep.subr.mxu0 0.0
    %1656 = vmatpush1.msra.mxu0 0.0
    %1657 = vmatprep.subr.mxu0 0.0
    %1658 = vmatpush1.msra.mxu0 0.0
    %1659 = vmatprep.subr.mxu0 0.0
    %1660 = vmatpush1.msra.mxu0 0.0
    %1661 = vmatprep.subr.mxu0 0.0
    %1662 = vmatpush1.msra.mxu0 0.0
    %1663 = vmatprep.subr.mxu0 0.0
    %1664 = vmatpush1.msra.mxu0 0.0
    %1665 = vmatprep.subr.mxu0 0.0
    %1666 = vmatpush1.msra.mxu0 0.0
    %1667 = vmatprep.subr.mxu0 0.0
    %1668 = vmatpush1.msra.mxu0 0.0
    %1669 = vmatprep.subr.mxu0 0.0
    %1670 = vmatpush1.msra.mxu0 %v1627
    %1671 = vmatprep.subr.mxu0 0.0
    %1672 = vmatpush1.msra.mxu0 %v1626
    %1673 = vmatprep.subr.mxu0 0.0
    %1674 = vmatpush1.msra.mxu0 %v1625
    %1675 = vmatprep.subr.mxu0 0.0
    %1676 = vmatpush1.msra.mxu0 %v1624
    %1677 = vmatprep.subr.mxu0 0.0
    %1678 = vmatpush2.msra.mxu0 0.0
    %1679 = vmatprep.subr.mxu0 0.0
    %1680 = vmatpush2.msra.mxu0 0.0
    %1681 = vmatprep.subr.mxu0 0.0
    %1682 = vmatpush2.msra.mxu0 0.0
    %1683 = vmatprep.subr.mxu0 0.0
    %1684 = vmatpush2.msra.mxu0 0.0
    %1685 = vmatprep.subr.mxu0 0.0
    %1686 = vmatpush2.msra.mxu0 0.0
    %1687 = vmatprep.subr.mxu0 0.0
    %1688 = vmatpush2.msra.mxu0 0.0
    %1689 = vmatprep.subr.mxu0 0.0
    %1690 = vmatpush2.msra.mxu0 0.0
    %1691 = vmatprep.subr.mxu0 0.0
    %1692 = vmatpush2.msra.mxu0 0.0
    %1693 = vmatprep.subr.mxu0 0.0
    %1694 = vmatpush2.msra.mxu0 0.0
    %1695 = vmatprep.subr.mxu0 0.0
    %1696 = vmatpush2.msra.mxu0 0.0
    %1697 = vmatprep.subr.mxu0 0.0
    %1698 = vmatpush2.msra.mxu0 0.0
    %1699 = vmatprep.subr.mxu0 0.0
    %1700 = vmatpush2.msra.mxu0 0.0
    %1701 = vmatprep.subr.mxu0 0.0
    %1702 = vmatpush2.msra.mxu0 0.0
    %1703 = vmatprep.subr.mxu0 0.0
    %1704 = vmatpush2.msra.mxu0 0.0
    %1705 = vmatprep.subr.mxu0 0.0
    %1706 = vmatpush2.msra.mxu0 0.0
    %1707 = vmatprep.subr.mxu0 0.0
    %1708 = vmatpush2.msra.mxu0 0.0
    %1709 = vmatprep.mubr.f32.mxu0 0.0
    %1710 = vmatmul.mubr.f32.gmra.mxu0 %v1634
    %v1711 = vpop.f32.mrf.mxu0
    %v1712 = vadd.f32 0.0, %v1711
    %v1713 = vpop.f32.mrf.mxu0
    %1714 = vmatprep.mubr.f32.mxu0 0.0
    %1715 = vmatmul.mubr.f32.gmra.mxu0 %v1637
    %v1716 = vpop.f32.mrf.mxu0
    %v1717 = vadd.f32 0.0, %v1716
    %v1718 = vpop.f32.mrf.mxu0
    %1719 = vmatprep.mubr.f32.mxu0 0.0
    %1720 = vmatmul.mubr.f32.gmra.mxu0 %v1640
    %v1721 = vpop.f32.mrf.mxu0
    %v1722 = vadd.f32 0.0, %v1721
    %v1723 = vpop.f32.mrf.mxu0
    %1724 = vmatprep.mubr.f32.mxu0 0.0
    %1725 = vmatmul.mubr.f32.gmra.mxu0 %v1643
    %v1726 = vpop.f32.mrf.mxu0
    %v1727 = vadd.f32 0.0, %v1726
    %v1728 = vpop.f32.mrf.mxu0
    %1729 = vdwg.mxu0
    %s1730 = scalar_lea.vmem [#allocation7], 32
    %v1731 = vld [vmem:[%s1730] sm:$0xff]
    %v1732 = vld [vmem:[%s1730 + $0x8] sm:$0xff]
    %v1733 = vld [vmem:[%s1730 + $0x10] sm:$0xff]
    %v1734 = vld [vmem:[%s1730 + $0x18] sm:$0xff]
    %v1736 = vsel %vm737, %v1731, 0
    %v1739 = vsel %vm737, %v1732, 0
    %v1742 = vsel %vm737, %v1733, 0
    %v1745 = vsel %vm737, %v1734, 0
    %1747 = vmatprep.subr.mxu0 0.0
    %1748 = vmatpush1.msra.mxu0 0.0
    %1749 = vmatprep.subr.mxu0 0.0
    %1750 = vmatpush1.msra.mxu0 0.0
    %1751 = vmatprep.subr.mxu0 0.0
    %1752 = vmatpush1.msra.mxu0 0.0
    %1753 = vmatprep.subr.mxu0 0.0
    %1754 = vmatpush1.msra.mxu0 0.0
    %1755 = vmatprep.subr.mxu0 0.0
    %1756 = vmatpush1.msra.mxu0 0.0
    %1757 = vmatprep.subr.mxu0 0.0
    %1758 = vmatpush1.msra.mxu0 0.0
    %1759 = vmatprep.subr.mxu0 0.0
    %1760 = vmatpush1.msra.mxu0 0.0
    %1761 = vmatprep.subr.mxu0 0.0
    %1762 = vmatpush1.msra.mxu0 0.0
    %1763 = vmatprep.subr.mxu0 0.0
    %1764 = vmatpush1.msra.mxu0 0.0
    %1765 = vmatprep.subr.mxu0 0.0
    %1766 = vmatpush1.msra.mxu0 0.0
    %1767 = vmatprep.subr.mxu0 0.0
    %1768 = vmatpush1.msra.mxu0 0.0
    %1769 = vmatprep.subr.mxu0 0.0
    %1770 = vmatpush1.msra.mxu0 0.0
    %1771 = vmatprep.subr.mxu0 0.0
    %1772 = vmatpush1.msra.mxu0 %v1627
    %1773 = vmatprep.subr.mxu0 0.0
    %1774 = vmatpush1.msra.mxu0 %v1626
    %1775 = vmatprep.subr.mxu0 0.0
    %1776 = vmatpush1.msra.mxu0 %v1625
    %1777 = vmatprep.subr.mxu0 0.0
    %1778 = vmatpush1.msra.mxu0 %v1624
    %1779 = vmatprep.subr.mxu0 0.0
    %1780 = vmatpush2.msra.mxu0 0.0
    %1781 = vmatprep.subr.mxu0 0.0
    %1782 = vmatpush2.msra.mxu0 0.0
    %1783 = vmatprep.subr.mxu0 0.0
    %1784 = vmatpush2.msra.mxu0 0.0
    %1785 = vmatprep.subr.mxu0 0.0
    %1786 = vmatpush2.msra.mxu0 0.0
    %1787 = vmatprep.subr.mxu0 0.0
    %1788 = vmatpush2.msra.mxu0 0.0
    %1789 = vmatprep.subr.mxu0 0.0
    %1790 = vmatpush2.msra.mxu0 0.0
    %1791 = vmatprep.subr.mxu0 0.0
    %1792 = vmatpush2.msra.mxu0 0.0
    %1793 = vmatprep.subr.mxu0 0.0
    %1794 = vmatpush2.msra.mxu0 0.0
    %1795 = vmatprep.subr.mxu0 0.0
    %1796 = vmatpush2.msra.mxu0 0.0
    %1797 = vmatprep.subr.mxu0 0.0
    %1798 = vmatpush2.msra.mxu0 0.0
    %1799 = vmatprep.subr.mxu0 0.0
    %1800 = vmatpush2.msra.mxu0 0.0
    %1801 = vmatprep.subr.mxu0 0.0
    %1802 = vmatpush2.msra.mxu0 0.0
    %1803 = vmatprep.subr.mxu0 0.0
    %1804 = vmatpush2.msra.mxu0 0.0
    %1805 = vmatprep.subr.mxu0 0.0
    %1806 = vmatpush2.msra.mxu0 0.0
    %1807 = vmatprep.subr.mxu0 0.0
    %1808 = vmatpush2.msra.mxu0 0.0
    %1809 = vmatprep.subr.mxu0 0.0
    %1810 = vmatpush2.msra.mxu0 0.0
    %1811 = vmatprep.mubr.f32.mxu0 0.0
    %1812 = vmatmul.mubr.f32.gmra.mxu0 %v1736
    %v1813 = vpop.f32.mrf.mxu0
    %v1814 = vadd.f32 0.0, %v1813
    %v1815 = vpop.f32.mrf.mxu0
    %1816 = vmatprep.mubr.f32.mxu0 0.0
    %1817 = vmatmul.mubr.f32.gmra.mxu0 %v1739
    %v1818 = vpop.f32.mrf.mxu0
    %v1819 = vadd.f32 0.0, %v1818
    %v1820 = vpop.f32.mrf.mxu0
    %1821 = vmatprep.mubr.f32.mxu0 0.0
    %1822 = vmatmul.mubr.f32.gmra.mxu0 %v1742
    %v1823 = vpop.f32.mrf.mxu0
    %v1824 = vadd.f32 0.0, %v1823
    %v1825 = vpop.f32.mrf.mxu0
    %1826 = vmatprep.mubr.f32.mxu0 0.0
    %1827 = vmatmul.mubr.f32.gmra.mxu0 %v1745
    %v1828 = vpop.f32.mrf.mxu0
    %v1829 = vadd.f32 0.0, %v1828
    %v1830 = vpop.f32.mrf.mxu0
    %1831 = vdwg.mxu0
    %v1832 = vlaneseq
    %v1833 = vshrl.u32 %v1832, 7
    %v1834 = vsub.s32 7, %v1833
    %v1835 = vrot.slane %v193, %v1834
    %v1836 = vmul.f32 %v1835, %v1712
    %v1837 = vmul.f32 %v1835, %v1717
    %v1838 = vmul.f32 %v1835, %v1722
    %v1839 = vmul.f32 %v1835, %v1727
    %v1840 = vlaneseq
    %v1841 = vshrl.u32 %v1840, 7
    %v1842 = vsub.s32 7, %v1841
    %v1843 = vrot.slane %v503, %v1842
    %v1844 = vmul.f32 %v1843, %v1814
    %v1845 = vmul.f32 %v1843, %v1819
    %v1846 = vmul.f32 %v1843, %v1824
    %v1847 = vmul.f32 %v1843, %v1829
    %v1848 = vadd.f32 %v1836, %v1844
    %v1849 = vadd.f32 %v1837, %v1845
    %v1850 = vadd.f32 %v1838, %v1846
    %v1851 = vadd.f32 %v1839, %v1847
    %v1852 = vlaneseq
    %v1853 = vshrl.u32 %v1852, 7
    %v1854 = vsub.s32 0, %v1853
    %v1855 = vrot.slane %v296, %v1854
    %v1856 = vmul.f32 %v1855, %v1848
    %v1857 = vmul.f32 %v1855, %v1849
    %v1858 = vmul.f32 %v1855, %v1850
    %v1859 = vmul.f32 %v1855, %v1851
    %1860 = vmatprep.subr.mxu0 0.0
    %1861 = vmatpush1.msra.mxu0 0.0
    %1862 = vmatprep.subr.mxu0 0.0
    %1863 = vmatpush1.msra.mxu0 0.0
    %1864 = vmatprep.subr.mxu0 0.0
    %1865 = vmatpush1.msra.mxu0 0.0
    %1866 = vmatprep.subr.mxu0 0.0
    %1867 = vmatpush1.msra.mxu0 0.0
    %1868 = vmatprep.subr.mxu0 0.0
    %1869 = vmatpush1.msra.mxu0 0.0
    %1870 = vmatprep.subr.mxu0 0.0
    %1871 = vmatpush1.msra.mxu0 0.0
    %1872 = vmatprep.subr.mxu0 0.0
    %1873 = vmatpush1.msra.mxu0 0.0
    %1874 = vmatprep.subr.mxu0 0.0
    %1875 = vmatpush1.msra.mxu0 0.0
    %1876 = vmatprep.subr.mxu0 0.0
    %1877 = vmatpush1.msra.mxu0 0.0
    %1878 = vmatprep.subr.mxu0 0.0
    %1879 = vmatpush1.msra.mxu0 0.0
    %1880 = vmatprep.subr.mxu0 0.0
    %1881 = vmatpush1.msra.mxu0 0.0
    %1882 = vmatprep.subr.mxu0 0.0
    %1883 = vmatpush1.msra.mxu0 0.0
    %1884 = vmatprep.subr.mxu0 0.0
    %1885 = vmatpush1.msra.mxu0 %v1851
    %1886 = vmatprep.subr.mxu0 0.0
    %1887 = vmatpush1.msra.mxu0 %v1850
    %1888 = vmatprep.subr.mxu0 0.0
    %1889 = vmatpush1.msra.mxu0 %v1849
    %1890 = vmatprep.subr.mxu0 0.0
    %1891 = vmatpush1.msra.mxu0 %v1848
    %1892 = vmatprep.subr.mxu0 0.0
    %1893 = vmatpush2.msra.mxu0 0.0
    %1894 = vmatprep.subr.mxu0 0.0
    %1895 = vmatpush2.msra.mxu0 0.0
    %1896 = vmatprep.subr.mxu0 0.0
    %1897 = vmatpush2.msra.mxu0 0.0
    %1898 = vmatprep.subr.mxu0 0.0
    %1899 = vmatpush2.msra.mxu0 0.0
    %1900 = vmatprep.subr.mxu0 0.0
    %1901 = vmatpush2.msra.mxu0 0.0
    %1902 = vmatprep.subr.mxu0 0.0
    %1903 = vmatpush2.msra.mxu0 0.0
    %1904 = vmatprep.subr.mxu0 0.0
    %1905 = vmatpush2.msra.mxu0 0.0
    %1906 = vmatprep.subr.mxu0 0.0
    %1907 = vmatpush2.msra.mxu0 0.0
    %1908 = vmatprep.subr.mxu0 0.0
    %1909 = vmatpush2.msra.mxu0 0.0
    %1910 = vmatprep.subr.mxu0 0.0
    %1911 = vmatpush2.msra.mxu0 0.0
    %1912 = vmatprep.subr.mxu0 0.0
    %1913 = vmatpush2.msra.mxu0 0.0
    %1914 = vmatprep.subr.mxu0 0.0
    %1915 = vmatpush2.msra.mxu0 0.0
    %1916 = vmatprep.subr.mxu0 0.0
    %1917 = vmatpush2.msra.mxu0 0.0
    %1918 = vmatprep.subr.mxu0 0.0
    %1919 = vmatpush2.msra.mxu0 0.0
    %1920 = vmatprep.subr.mxu0 0.0
    %1921 = vmatpush2.msra.mxu0 0.0
    %1922 = vmatprep.subr.mxu0 0.0
    %1923 = vmatpush2.msra.mxu0 0.0
    %1924 = vmatprep.mubr.f32.mxu0 0.0
    %1925 = vmatmul.mubr.f32.gmra.mxu0 %v739
    %v1926 = vpop.f32.mrf.mxu0
    %v1927 = vadd.f32 0.0, %v1926
    %v1928 = vpop.f32.mrf.mxu0
    %1929 = vmatprep.mubr.f32.mxu0 0.0
    %1930 = vmatmul.mubr.f32.gmra.mxu0 %v742
    %v1931 = vpop.f32.mrf.mxu0
    %v1932 = vadd.f32 0.0, %v1931
    %v1933 = vpop.f32.mrf.mxu0
    %1934 = vmatprep.mubr.f32.mxu0 0.0
    %1935 = vmatmul.mubr.f32.gmra.mxu0 %v745
    %v1936 = vpop.f32.mrf.mxu0
    %v1937 = vadd.f32 0.0, %v1936
    %v1938 = vpop.f32.mrf.mxu0
    %1939 = vmatprep.mubr.f32.mxu0 0.0
    %1940 = vmatmul.mubr.f32.gmra.mxu0 %v748
    %v1941 = vpop.f32.mrf.mxu0
    %v1942 = vadd.f32 0.0, %v1941
    %v1943 = vpop.f32.mrf.mxu0
    %1944 = vdwg.mxu0
    %v1945 = vlaneseq
    %v1946 = vshrl.u32 %v1945, 7
    %v1947 = vsub.s32 0, %v1946
    %v1948 = vrot.slane %v607, %v1947
    %v1949 = vmul.f32 %v1948, %v1927
    %v1950 = vmul.f32 %v1948, %v1932
    %v1951 = vmul.f32 %v1948, %v1937
    %v1952 = vmul.f32 %v1948, %v1942
    %v1953 = vadd.f32 %v1856, %v1949
    %v1954 = vadd.f32 %v1857, %v1950
    %v1955 = vadd.f32 %v1858, %v1951
    %v1956 = vadd.f32 %v1859, %v1952
    %v1957 = vlaneseq
    %v1958 = vshrl.u32 %v1957, 7
    %v1959 = vsub.s32 1, %v1958
    %v1960 = vrot.slane %v296, %v1959
    %v1961 = vmul.f32 %v1960, %v1953
    %v1962 = vmul.f32 %v1960, %v1954
    %v1963 = vmul.f32 %v1960, %v1955
    %v1964 = vmul.f32 %v1960, %v1956
    %1965 = vmatprep.subr.mxu0 0.0
    %1966 = vmatpush1.msra.mxu0 0.0
    %1967 = vmatprep.subr.mxu0 0.0
    %1968 = vmatpush1.msra.mxu0 0.0
    %1969 = vmatprep.subr.mxu0 0.0
    %1970 = vmatpush1.msra.mxu0 0.0
    %1971 = vmatprep.subr.mxu0 0.0
    %1972 = vmatpush1.msra.mxu0 0.0
    %1973 = vmatprep.subr.mxu0 0.0
    %1974 = vmatpush1.msra.mxu0 0.0
    %1975 = vmatprep.subr.mxu0 0.0
    %1976 = vmatpush1.msra.mxu0 0.0
    %1977 = vmatprep.subr.mxu0 0.0
    %1978 = vmatpush1.msra.mxu0 0.0
    %1979 = vmatprep.subr.mxu0 0.0
    %1980 = vmatpush1.msra.mxu0 0.0
    %1981 = vmatprep.subr.mxu0 0.0
    %1982 = vmatpush1.msra.mxu0 0.0
    %1983 = vmatprep.subr.mxu0 0.0
    %1984 = vmatpush1.msra.mxu0 0.0
    %1985 = vmatprep.subr.mxu0 0.0
    %1986 = vmatpush1.msra.mxu0 0.0
    %1987 = vmatprep.subr.mxu0 0.0
    %1988 = vmatpush1.msra.mxu0 0.0
    %1989 = vmatprep.subr.mxu0 0.0
    %1990 = vmatpush1.msra.mxu0 %v1956
    %1991 = vmatprep.subr.mxu0 0.0
    %1992 = vmatpush1.msra.mxu0 %v1955
    %1993 = vmatprep.subr.mxu0 0.0
    %1994 = vmatpush1.msra.mxu0 %v1954
    %1995 = vmatprep.subr.mxu0 0.0
    %1996 = vmatpush1.msra.mxu0 %v1953
    %1997 = vmatprep.subr.mxu0 0.0
    %1998 = vmatpush2.msra.mxu0 0.0
    %1999 = vmatprep.subr.mxu0 0.0
    %2000 = vmatpush2.msra.mxu0 0.0
    %2001 = vmatprep.subr.mxu0 0.0
    %2002 = vmatpush2.msra.mxu0 0.0
    %2003 = vmatprep.subr.mxu0 0.0
    %2004 = vmatpush2.msra.mxu0 0.0
    %2005 = vmatprep.subr.mxu0 0.0
    %2006 = vmatpush2.msra.mxu0 0.0
    %2007 = vmatprep.subr.mxu0 0.0
    %2008 = vmatpush2.msra.mxu0 0.0
    %2009 = vmatprep.subr.mxu0 0.0
    %2010 = vmatpush2.msra.mxu0 0.0
    %2011 = vmatprep.subr.mxu0 0.0
    %2012 = vmatpush2.msra.mxu0 0.0
    %2013 = vmatprep.subr.mxu0 0.0
    %2014 = vmatpush2.msra.mxu0 0.0
    %2015 = vmatprep.subr.mxu0 0.0
    %2016 = vmatpush2.msra.mxu0 0.0
    %2017 = vmatprep.subr.mxu0 0.0
    %2018 = vmatpush2.msra.mxu0 0.0
    %2019 = vmatprep.subr.mxu0 0.0
    %2020 = vmatpush2.msra.mxu0 0.0
    %2021 = vmatprep.subr.mxu0 0.0
    %2022 = vmatpush2.msra.mxu0 0.0
    %2023 = vmatprep.subr.mxu0 0.0
    %2024 = vmatpush2.msra.mxu0 0.0
    %2025 = vmatprep.subr.mxu0 0.0
    %2026 = vmatpush2.msra.mxu0 0.0
    %2027 = vmatprep.subr.mxu0 0.0
    %2028 = vmatpush2.msra.mxu0 0.0
    %2029 = vmatprep.mubr.f32.mxu0 0.0
    %2030 = vmatmul.mubr.f32.gmra.mxu0 %v861
    %v2031 = vpop.f32.mrf.mxu0
    %v2032 = vadd.f32 0.0, %v2031
    %v2033 = vpop.f32.mrf.mxu0
    %2034 = vmatprep.mubr.f32.mxu0 0.0
    %2035 = vmatmul.mubr.f32.gmra.mxu0 %v864
    %v2036 = vpop.f32.mrf.mxu0
    %v2037 = vadd.f32 0.0, %v2036
    %v2038 = vpop.f32.mrf.mxu0
    %2039 = vmatprep.mubr.f32.mxu0 0.0
    %2040 = vmatmul.mubr.f32.gmra.mxu0 %v867
    %v2041 = vpop.f32.mrf.mxu0
    %v2042 = vadd.f32 0.0, %v2041
    %v2043 = vpop.f32.mrf.mxu0
    %2044 = vmatprep.mubr.f32.mxu0 0.0
    %2045 = vmatmul.mubr.f32.gmra.mxu0 %v870
    %v2046 = vpop.f32.mrf.mxu0
    %v2047 = vadd.f32 0.0, %v2046
    %v2048 = vpop.f32.mrf.mxu0
    %2049 = vdwg.mxu0
    %v2050 = vlaneseq
    %v2051 = vshrl.u32 %v2050, 7
    %v2052 = vsub.s32 1, %v2051
    %v2053 = vrot.slane %v607, %v2052
    %v2054 = vmul.f32 %v2053, %v2032
    %v2055 = vmul.f32 %v2053, %v2037
    %v2056 = vmul.f32 %v2053, %v2042
    %v2057 = vmul.f32 %v2053, %v2047
    %v2058 = vadd.f32 %v1961, %v2054
    %v2059 = vadd.f32 %v1962, %v2055
    %v2060 = vadd.f32 %v1963, %v2056
    %v2061 = vadd.f32 %v1964, %v2057
    %v2062 = vlaneseq
    %v2063 = vshrl.u32 %v2062, 7
    %v2064 = vsub.s32 2, %v2063
    %v2065 = vrot.slane %v296, %v2064
    %v2066 = vmul.f32 %v2065, %v2058
    %v2067 = vmul.f32 %v2065, %v2059
    %v2068 = vmul.f32 %v2065, %v2060
    %v2069 = vmul.f32 %v2065, %v2061
    %2070 = vmatprep.subr.mxu0 0.0
    %2071 = vmatpush1.msra.mxu0 0.0
    %2072 = vmatprep.subr.mxu0 0.0
    %2073 = vmatpush1.msra.mxu0 0.0
    %2074 = vmatprep.subr.mxu0 0.0
    %2075 = vmatpush1.msra.mxu0 0.0
    %2076 = vmatprep.subr.mxu0 0.0
    %2077 = vmatpush1.msra.mxu0 0.0
    %2078 = vmatprep.subr.mxu0 0.0
    %2079 = vmatpush1.msra.mxu0 0.0
    %2080 = vmatprep.subr.mxu0 0.0
    %2081 = vmatpush1.msra.mxu0 0.0
    %2082 = vmatprep.subr.mxu0 0.0
    %2083 = vmatpush1.msra.mxu0 0.0
    %2084 = vmatprep.subr.mxu0 0.0
    %2085 = vmatpush1.msra.mxu0 0.0
    %2086 = vmatprep.subr.mxu0 0.0
    %2087 = vmatpush1.msra.mxu0 0.0
    %2088 = vmatprep.subr.mxu0 0.0
    %2089 = vmatpush1.msra.mxu0 0.0
    %2090 = vmatprep.subr.mxu0 0.0
    %2091 = vmatpush1.msra.mxu0 0.0
    %2092 = vmatprep.subr.mxu0 0.0
    %2093 = vmatpush1.msra.mxu0 0.0
    %2094 = vmatprep.subr.mxu0 0.0
    %2095 = vmatpush1.msra.mxu0 %v2061
    %2096 = vmatprep.subr.mxu0 0.0
    %2097 = vmatpush1.msra.mxu0 %v2060
    %2098 = vmatprep.subr.mxu0 0.0
    %2099 = vmatpush1.msra.mxu0 %v2059
    %2100 = vmatprep.subr.mxu0 0.0
    %2101 = vmatpush1.msra.mxu0 %v2058
    %2102 = vmatprep.subr.mxu0 0.0
    %2103 = vmatpush2.msra.mxu0 0.0
    %2104 = vmatprep.subr.mxu0 0.0
    %2105 = vmatpush2.msra.mxu0 0.0
    %2106 = vmatprep.subr.mxu0 0.0
    %2107 = vmatpush2.msra.mxu0 0.0
    %2108 = vmatprep.subr.mxu0 0.0
    %2109 = vmatpush2.msra.mxu0 0.0
    %2110 = vmatprep.subr.mxu0 0.0
    %2111 = vmatpush2.msra.mxu0 0.0
    %2112 = vmatprep.subr.mxu0 0.0
    %2113 = vmatpush2.msra.mxu0 0.0
    %2114 = vmatprep.subr.mxu0 0.0
    %2115 = vmatpush2.msra.mxu0 0.0
    %2116 = vmatprep.subr.mxu0 0.0
    %2117 = vmatpush2.msra.mxu0 0.0
    %2118 = vmatprep.subr.mxu0 0.0
    %2119 = vmatpush2.msra.mxu0 0.0
    %2120 = vmatprep.subr.mxu0 0.0
    %2121 = vmatpush2.msra.mxu0 0.0
    %2122 = vmatprep.subr.mxu0 0.0
    %2123 = vmatpush2.msra.mxu0 0.0
    %2124 = vmatprep.subr.mxu0 0.0
    %2125 = vmatpush2.msra.mxu0 0.0
    %2126 = vmatprep.subr.mxu0 0.0
    %2127 = vmatpush2.msra.mxu0 0.0
    %2128 = vmatprep.subr.mxu0 0.0
    %2129 = vmatpush2.msra.mxu0 0.0
    %2130 = vmatprep.subr.mxu0 0.0
    %2131 = vmatpush2.msra.mxu0 0.0
    %2132 = vmatprep.subr.mxu0 0.0
    %2133 = vmatpush2.msra.mxu0 0.0
    %2134 = vmatprep.mubr.f32.mxu0 0.0
    %2135 = vmatmul.mubr.f32.gmra.mxu0 %v983
    %v2136 = vpop.f32.mrf.mxu0
    %v2137 = vadd.f32 0.0, %v2136
    %v2138 = vpop.f32.mrf.mxu0
    %2139 = vmatprep.mubr.f32.mxu0 0.0
    %2140 = vmatmul.mubr.f32.gmra.mxu0 %v986
    %v2141 = vpop.f32.mrf.mxu0
    %v2142 = vadd.f32 0.0, %v2141
    %v2143 = vpop.f32.mrf.mxu0
    %2144 = vmatprep.mubr.f32.mxu0 0.0
    %2145 = vmatmul.mubr.f32.gmra.mxu0 %v989
    %v2146 = vpop.f32.mrf.mxu0
    %v2147 = vadd.f32 0.0, %v2146
    %v2148 = vpop.f32.mrf.mxu0
    %2149 = vmatprep.mubr.f32.mxu0 0.0
    %2150 = vmatmul.mubr.f32.gmra.mxu0 %v992
    %v2151 = vpop.f32.mrf.mxu0
    %v2152 = vadd.f32 0.0, %v2151
    %v2153 = vpop.f32.mrf.mxu0
    %2154 = vdwg.mxu0
    %v2155 = vlaneseq
    %v2156 = vshrl.u32 %v2155, 7
    %v2157 = vsub.s32 2, %v2156
    %v2158 = vrot.slane %v607, %v2157
    %v2159 = vmul.f32 %v2158, %v2137
    %v2160 = vmul.f32 %v2158, %v2142
    %v2161 = vmul.f32 %v2158, %v2147
    %v2162 = vmul.f32 %v2158, %v2152
    %v2163 = vadd.f32 %v2066, %v2159
    %v2164 = vadd.f32 %v2067, %v2160
    %v2165 = vadd.f32 %v2068, %v2161
    %v2166 = vadd.f32 %v2069, %v2162
    %s2167 = scalar_lea.vmem %s3, 64
    %v2168 = vld [vmem:[%s2167] sm:$0xff]
    %v2169 = vld [vmem:[%s2167 + $0x8] sm:$0xff]
    %v2170 = vld [vmem:[%s2167 + $0x10] sm:$0xff]
    %v2171 = vld [vmem:[%s2167 + $0x18] sm:$0xff]
    %v2173 = vsel %vm737, %v2168, 0
    %v2176 = vsel %vm737, %v2169, 0
    %v2179 = vsel %vm737, %v2170, 0
    %v2182 = vsel %vm737, %v2171, 0
    %2184 = vmatprep.subr.mxu0 0.0
    %2185 = vmatpush1.msra.mxu0 0.0
    %2186 = vmatprep.subr.mxu0 0.0
    %2187 = vmatpush1.msra.mxu0 0.0
    %2188 = vmatprep.subr.mxu0 0.0
    %2189 = vmatpush1.msra.mxu0 0.0
    %2190 = vmatprep.subr.mxu0 0.0
    %2191 = vmatpush1.msra.mxu0 0.0
    %2192 = vmatprep.subr.mxu0 0.0
    %2193 = vmatpush1.msra.mxu0 0.0
    %2194 = vmatprep.subr.mxu0 0.0
    %2195 = vmatpush1.msra.mxu0 0.0
    %2196 = vmatprep.subr.mxu0 0.0
    %2197 = vmatpush1.msra.mxu0 0.0
    %2198 = vmatprep.subr.mxu0 0.0
    %2199 = vmatpush1.msra.mxu0 0.0
    %2200 = vmatprep.subr.mxu0 0.0
    %2201 = vmatpush1.msra.mxu0 0.0
    %2202 = vmatprep.subr.mxu0 0.0
    %2203 = vmatpush1.msra.mxu0 0.0
    %2204 = vmatprep.subr.mxu0 0.0
    %2205 = vmatpush1.msra.mxu0 0.0
    %2206 = vmatprep.subr.mxu0 0.0
    %2207 = vmatpush1.msra.mxu0 0.0
    %2208 = vmatprep.subr.mxu0 0.0
    %2209 = vmatpush1.msra.mxu0 %v2166
    %2210 = vmatprep.subr.mxu0 0.0
    %2211 = vmatpush1.msra.mxu0 %v2165
    %2212 = vmatprep.subr.mxu0 0.0
    %2213 = vmatpush1.msra.mxu0 %v2164
    %2214 = vmatprep.subr.mxu0 0.0
    %2215 = vmatpush1.msra.mxu0 %v2163
    %2216 = vmatprep.subr.mxu0 0.0
    %2217 = vmatpush2.msra.mxu0 0.0
    %2218 = vmatprep.subr.mxu0 0.0
    %2219 = vmatpush2.msra.mxu0 0.0
    %2220 = vmatprep.subr.mxu0 0.0
    %2221 = vmatpush2.msra.mxu0 0.0
    %2222 = vmatprep.subr.mxu0 0.0
    %2223 = vmatpush2.msra.mxu0 0.0
    %2224 = vmatprep.subr.mxu0 0.0
    %2225 = vmatpush2.msra.mxu0 0.0
    %2226 = vmatprep.subr.mxu0 0.0
    %2227 = vmatpush2.msra.mxu0 0.0
    %2228 = vmatprep.subr.mxu0 0.0
    %2229 = vmatpush2.msra.mxu0 0.0
    %2230 = vmatprep.subr.mxu0 0.0
    %2231 = vmatpush2.msra.mxu0 0.0
    %2232 = vmatprep.subr.mxu0 0.0
    %2233 = vmatpush2.msra.mxu0 0.0
    %2234 = vmatprep.subr.mxu0 0.0
    %2235 = vmatpush2.msra.mxu0 0.0
    %2236 = vmatprep.subr.mxu0 0.0
    %2237 = vmatpush2.msra.mxu0 0.0
    %2238 = vmatprep.subr.mxu0 0.0
    %2239 = vmatpush2.msra.mxu0 0.0
    %2240 = vmatprep.subr.mxu0 0.0
    %2241 = vmatpush2.msra.mxu0 0.0
    %2242 = vmatprep.subr.mxu0 0.0
    %2243 = vmatpush2.msra.mxu0 0.0
    %2244 = vmatprep.subr.mxu0 0.0
    %2245 = vmatpush2.msra.mxu0 0.0
    %2246 = vmatprep.subr.mxu0 0.0
    %2247 = vmatpush2.msra.mxu0 0.0
    %2248 = vmatprep.mubr.f32.mxu0 0.0
    %2249 = vmatmul.mubr.f32.gmra.mxu0 %v2173
    %v2250 = vpop.f32.mrf.mxu0
    %v2251 = vadd.f32 0.0, %v2250
    %v2252 = vpop.f32.mrf.mxu0
    %2253 = vmatprep.mubr.f32.mxu0 0.0
    %2254 = vmatmul.mubr.f32.gmra.mxu0 %v2176
    %v2255 = vpop.f32.mrf.mxu0
    %v2256 = vadd.f32 0.0, %v2255
    %v2257 = vpop.f32.mrf.mxu0
    %2258 = vmatprep.mubr.f32.mxu0 0.0
    %2259 = vmatmul.mubr.f32.gmra.mxu0 %v2179
    %v2260 = vpop.f32.mrf.mxu0
    %v2261 = vadd.f32 0.0, %v2260
    %v2262 = vpop.f32.mrf.mxu0
    %2263 = vmatprep.mubr.f32.mxu0 0.0
    %2264 = vmatmul.mubr.f32.gmra.mxu0 %v2182
    %v2265 = vpop.f32.mrf.mxu0
    %v2266 = vadd.f32 0.0, %v2265
    %v2267 = vpop.f32.mrf.mxu0
    %2268 = vdwg.mxu0
    %s2269 = scalar_lea.vmem [#allocation7], 64
    %v2270 = vld [vmem:[%s2269] sm:$0xff]
    %v2271 = vld [vmem:[%s2269 + $0x8] sm:$0xff]
    %v2272 = vld [vmem:[%s2269 + $0x10] sm:$0xff]
    %v2273 = vld [vmem:[%s2269 + $0x18] sm:$0xff]
    %v2275 = vsel %vm737, %v2270, 0
    %v2278 = vsel %vm737, %v2271, 0
    %v2281 = vsel %vm737, %v2272, 0
    %v2284 = vsel %vm737, %v2273, 0
    %2286 = vmatprep.subr.mxu0 0.0
    %2287 = vmatpush1.msra.mxu0 0.0
    %2288 = vmatprep.subr.mxu0 0.0
    %2289 = vmatpush1.msra.mxu0 0.0
    %2290 = vmatprep.subr.mxu0 0.0
    %2291 = vmatpush1.msra.mxu0 0.0
    %2292 = vmatprep.subr.mxu0 0.0
    %2293 = vmatpush1.msra.mxu0 0.0
    %2294 = vmatprep.subr.mxu0 0.0
    %2295 = vmatpush1.msra.mxu0 0.0
    %2296 = vmatprep.subr.mxu0 0.0
    %2297 = vmatpush1.msra.mxu0 0.0
    %2298 = vmatprep.subr.mxu0 0.0
    %2299 = vmatpush1.msra.mxu0 0.0
    %2300 = vmatprep.subr.mxu0 0.0
    %2301 = vmatpush1.msra.mxu0 0.0
    %2302 = vmatprep.subr.mxu0 0.0
    %2303 = vmatpush1.msra.mxu0 0.0
    %2304 = vmatprep.subr.mxu0 0.0
    %2305 = vmatpush1.msra.mxu0 0.0
    %2306 = vmatprep.subr.mxu0 0.0
    %2307 = vmatpush1.msra.mxu0 0.0
    %2308 = vmatprep.subr.mxu0 0.0
    %2309 = vmatpush1.msra.mxu0 0.0
    %2310 = vmatprep.subr.mxu0 0.0
    %2311 = vmatpush1.msra.mxu0 %v2166
    %2312 = vmatprep.subr.mxu0 0.0
    %2313 = vmatpush1.msra.mxu0 %v2165
    %2314 = vmatprep.subr.mxu0 0.0
    %2315 = vmatpush1.msra.mxu0 %v2164
    %2316 = vmatprep.subr.mxu0 0.0
    %2317 = vmatpush1.msra.mxu0 %v2163
    %2318 = vmatprep.subr.mxu0 0.0
    %2319 = vmatpush2.msra.mxu0 0.0
    %2320 = vmatprep.subr.mxu0 0.0
    %2321 = vmatpush2.msra.mxu0 0.0
    %2322 = vmatprep.subr.mxu0 0.0
    %2323 = vmatpush2.msra.mxu0 0.0
    %2324 = vmatprep.subr.mxu0 0.0
    %2325 = vmatpush2.msra.mxu0 0.0
    %2326 = vmatprep.subr.mxu0 0.0
    %2327 = vmatpush2.msra.mxu0 0.0
    %2328 = vmatprep.subr.mxu0 0.0
    %2329 = vmatpush2.msra.mxu0 0.0
    %2330 = vmatprep.subr.mxu0 0.0
    %2331 = vmatpush2.msra.mxu0 0.0
    %2332 = vmatprep.subr.mxu0 0.0
    %2333 = vmatpush2.msra.mxu0 0.0
    %2334 = vmatprep.subr.mxu0 0.0
    %2335 = vmatpush2.msra.mxu0 0.0
    %2336 = vmatprep.subr.mxu0 0.0
    %2337 = vmatpush2.msra.mxu0 0.0
    %2338 = vmatprep.subr.mxu0 0.0
    %2339 = vmatpush2.msra.mxu0 0.0
    %2340 = vmatprep.subr.mxu0 0.0
    %2341 = vmatpush2.msra.mxu0 0.0
    %2342 = vmatprep.subr.mxu0 0.0
    %2343 = vmatpush2.msra.mxu0 0.0
    %2344 = vmatprep.subr.mxu0 0.0
    %2345 = vmatpush2.msra.mxu0 0.0
    %2346 = vmatprep.subr.mxu0 0.0
    %2347 = vmatpush2.msra.mxu0 0.0
    %2348 = vmatprep.subr.mxu0 0.0
    %2349 = vmatpush2.msra.mxu0 0.0
    %2350 = vmatprep.mubr.f32.mxu0 0.0
    %2351 = vmatmul.mubr.f32.gmra.mxu0 %v2275
    %v2352 = vpop.f32.mrf.mxu0
    %v2353 = vadd.f32 0.0, %v2352
    %v2354 = vpop.f32.mrf.mxu0
    %2355 = vmatprep.mubr.f32.mxu0 0.0
    %2356 = vmatmul.mubr.f32.gmra.mxu0 %v2278
    %v2357 = vpop.f32.mrf.mxu0
    %v2358 = vadd.f32 0.0, %v2357
    %v2359 = vpop.f32.mrf.mxu0
    %2360 = vmatprep.mubr.f32.mxu0 0.0
    %2361 = vmatmul.mubr.f32.gmra.mxu0 %v2281
    %v2362 = vpop.f32.mrf.mxu0
    %v2363 = vadd.f32 0.0, %v2362
    %v2364 = vpop.f32.mrf.mxu0
    %2365 = vmatprep.mubr.f32.mxu0 0.0
    %2366 = vmatmul.mubr.f32.gmra.mxu0 %v2284
    %v2367 = vpop.f32.mrf.mxu0
    %v2368 = vadd.f32 0.0, %v2367
    %v2369 = vpop.f32.mrf.mxu0
    %2370 = vdwg.mxu0
    %v2371 = vlaneseq
    %v2372 = vshrl.u32 %v2371, 7
    %v2373 = vsub.s32 3, %v2372
    %v2374 = vrot.slane %v296, %v2373
    %v2375 = vmul.f32 %v2374, %v2251
    %v2376 = vmul.f32 %v2374, %v2256
    %v2377 = vmul.f32 %v2374, %v2261
    %v2378 = vmul.f32 %v2374, %v2266
    %v2379 = vlaneseq
    %v2380 = vshrl.u32 %v2379, 7
    %v2381 = vsub.s32 3, %v2380
    %v2382 = vrot.slane %v607, %v2381
    %v2383 = vmul.f32 %v2382, %v2353
    %v2384 = vmul.f32 %v2382, %v2358
    %v2385 = vmul.f32 %v2382, %v2363
    %v2386 = vmul.f32 %v2382, %v2368
    %v2387 = vadd.f32 %v2375, %v2383
    %v2388 = vadd.f32 %v2376, %v2384
    %v2389 = vadd.f32 %v2377, %v2385
    %v2390 = vadd.f32 %v2378, %v2386
    %v2391 = vlaneseq
    %v2392 = vshrl.u32 %v2391, 7
    %v2393 = vsub.s32 4, %v2392
    %v2394 = vrot.slane %v296, %v2393
    %v2395 = vmul.f32 %v2394, %v2387
    %v2396 = vmul.f32 %v2394, %v2388
    %v2397 = vmul.f32 %v2394, %v2389
    %v2398 = vmul.f32 %v2394, %v2390
    %2399 = vmatprep.subr.mxu0 0.0
    %2400 = vmatpush1.msra.mxu0 0.0
    %2401 = vmatprep.subr.mxu0 0.0
    %2402 = vmatpush1.msra.mxu0 0.0
    %2403 = vmatprep.subr.mxu0 0.0
    %2404 = vmatpush1.msra.mxu0 0.0
    %2405 = vmatprep.subr.mxu0 0.0
    %2406 = vmatpush1.msra.mxu0 0.0
    %2407 = vmatprep.subr.mxu0 0.0
    %2408 = vmatpush1.msra.mxu0 0.0
    %2409 = vmatprep.subr.mxu0 0.0
    %2410 = vmatpush1.msra.mxu0 0.0
    %2411 = vmatprep.subr.mxu0 0.0
    %2412 = vmatpush1.msra.mxu0 0.0
    %2413 = vmatprep.subr.mxu0 0.0
    %2414 = vmatpush1.msra.mxu0 0.0
    %2415 = vmatprep.subr.mxu0 0.0
    %2416 = vmatpush1.msra.mxu0 0.0
    %2417 = vmatprep.subr.mxu0 0.0
    %2418 = vmatpush1.msra.mxu0 0.0
    %2419 = vmatprep.subr.mxu0 0.0
    %2420 = vmatpush1.msra.mxu0 0.0
    %2421 = vmatprep.subr.mxu0 0.0
    %2422 = vmatpush1.msra.mxu0 0.0
    %2423 = vmatprep.subr.mxu0 0.0
    %2424 = vmatpush1.msra.mxu0 %v2390
    %2425 = vmatprep.subr.mxu0 0.0
    %2426 = vmatpush1.msra.mxu0 %v2389
    %2427 = vmatprep.subr.mxu0 0.0
    %2428 = vmatpush1.msra.mxu0 %v2388
    %2429 = vmatprep.subr.mxu0 0.0
    %2430 = vmatpush1.msra.mxu0 %v2387
    %2431 = vmatprep.subr.mxu0 0.0
    %2432 = vmatpush2.msra.mxu0 0.0
    %2433 = vmatprep.subr.mxu0 0.0
    %2434 = vmatpush2.msra.mxu0 0.0
    %2435 = vmatprep.subr.mxu0 0.0
    %2436 = vmatpush2.msra.mxu0 0.0
    %2437 = vmatprep.subr.mxu0 0.0
    %2438 = vmatpush2.msra.mxu0 0.0
    %2439 = vmatprep.subr.mxu0 0.0
    %2440 = vmatpush2.msra.mxu0 0.0
    %2441 = vmatprep.subr.mxu0 0.0
    %2442 = vmatpush2.msra.mxu0 0.0
    %2443 = vmatprep.subr.mxu0 0.0
    %2444 = vmatpush2.msra.mxu0 0.0
    %2445 = vmatprep.subr.mxu0 0.0
    %2446 = vmatpush2.msra.mxu0 0.0
    %2447 = vmatprep.subr.mxu0 0.0
    %2448 = vmatpush2.msra.mxu0 0.0
    %2449 = vmatprep.subr.mxu0 0.0
    %2450 = vmatpush2.msra.mxu0 0.0
    %2451 = vmatprep.subr.mxu0 0.0
    %2452 = vmatpush2.msra.mxu0 0.0
    %2453 = vmatprep.subr.mxu0 0.0
    %2454 = vmatpush2.msra.mxu0 0.0
    %2455 = vmatprep.subr.mxu0 0.0
    %2456 = vmatpush2.msra.mxu0 0.0
    %2457 = vmatprep.subr.mxu0 0.0
    %2458 = vmatpush2.msra.mxu0 0.0
    %2459 = vmatprep.subr.mxu0 0.0
    %2460 = vmatpush2.msra.mxu0 0.0
    %2461 = vmatprep.subr.mxu0 0.0
    %2462 = vmatpush2.msra.mxu0 0.0
    %2463 = vmatprep.mubr.f32.mxu0 0.0
    %2464 = vmatmul.mubr.f32.gmra.mxu0 %v739
    %v2465 = vpop.f32.mrf.mxu0
    %v2466 = vadd.f32 0.0, %v2465
    %v2467 = vpop.f32.mrf.mxu0
    %2468 = vmatprep.mubr.f32.mxu0 0.0
    %2469 = vmatmul.mubr.f32.gmra.mxu0 %v742
    %v2470 = vpop.f32.mrf.mxu0
    %v2471 = vadd.f32 0.0, %v2470
    %v2472 = vpop.f32.mrf.mxu0
    %2473 = vmatprep.mubr.f32.mxu0 0.0
    %2474 = vmatmul.mubr.f32.gmra.mxu0 %v745
    %v2475 = vpop.f32.mrf.mxu0
    %v2476 = vadd.f32 0.0, %v2475
    %v2477 = vpop.f32.mrf.mxu0
    %2478 = vmatprep.mubr.f32.mxu0 0.0
    %2479 = vmatmul.mubr.f32.gmra.mxu0 %v748
    %v2480 = vpop.f32.mrf.mxu0
    %v2481 = vadd.f32 0.0, %v2480
    %v2482 = vpop.f32.mrf.mxu0
    %2483 = vdwg.mxu0
    %v2484 = vlaneseq
    %v2485 = vshrl.u32 %v2484, 7
    %v2486 = vsub.s32 4, %v2485
    %v2487 = vrot.slane %v607, %v2486
    %v2488 = vmul.f32 %v2487, %v2466
    %v2489 = vmul.f32 %v2487, %v2471
    %v2490 = vmul.f32 %v2487, %v2476
    %v2491 = vmul.f32 %v2487, %v2481
    %v2492 = vadd.f32 %v2395, %v2488
    %v2493 = vadd.f32 %v2396, %v2489
    %v2494 = vadd.f32 %v2397, %v2490
    %v2495 = vadd.f32 %v2398, %v2491
    %v2496 = vlaneseq
    %v2497 = vshrl.u32 %v2496, 7
    %v2498 = vsub.s32 5, %v2497
    %v2499 = vrot.slane %v296, %v2498
    %v2500 = vmul.f32 %v2499, %v2492
    %v2501 = vmul.f32 %v2499, %v2493
    %v2502 = vmul.f32 %v2499, %v2494
    %v2503 = vmul.f32 %v2499, %v2495
    %2504 = vmatprep.subr.mxu0 0.0
    %2505 = vmatpush1.msra.mxu0 0.0
    %2506 = vmatprep.subr.mxu0 0.0
    %2507 = vmatpush1.msra.mxu0 0.0
    %2508 = vmatprep.subr.mxu0 0.0
    %2509 = vmatpush1.msra.mxu0 0.0
    %2510 = vmatprep.subr.mxu0 0.0
    %2511 = vmatpush1.msra.mxu0 0.0
    %2512 = vmatprep.subr.mxu0 0.0
    %2513 = vmatpush1.msra.mxu0 0.0
    %2514 = vmatprep.subr.mxu0 0.0
    %2515 = vmatpush1.msra.mxu0 0.0
    %2516 = vmatprep.subr.mxu0 0.0
    %2517 = vmatpush1.msra.mxu0 0.0
    %2518 = vmatprep.subr.mxu0 0.0
    %2519 = vmatpush1.msra.mxu0 0.0
    %2520 = vmatprep.subr.mxu0 0.0
    %2521 = vmatpush1.msra.mxu0 0.0
    %2522 = vmatprep.subr.mxu0 0.0
    %2523 = vmatpush1.msra.mxu0 0.0
    %2524 = vmatprep.subr.mxu0 0.0
    %2525 = vmatpush1.msra.mxu0 0.0
    %2526 = vmatprep.subr.mxu0 0.0
    %2527 = vmatpush1.msra.mxu0 0.0
    %2528 = vmatprep.subr.mxu0 0.0
    %2529 = vmatpush1.msra.mxu0 %v2495
    %2530 = vmatprep.subr.mxu0 0.0
    %2531 = vmatpush1.msra.mxu0 %v2494
    %2532 = vmatprep.subr.mxu0 0.0
    %2533 = vmatpush1.msra.mxu0 %v2493
    %2534 = vmatprep.subr.mxu0 0.0
    %2535 = vmatpush1.msra.mxu0 %v2492
    %2536 = vmatprep.subr.mxu0 0.0
    %2537 = vmatpush2.msra.mxu0 0.0
    %2538 = vmatprep.subr.mxu0 0.0
    %2539 = vmatpush2.msra.mxu0 0.0
    %2540 = vmatprep.subr.mxu0 0.0
    %2541 = vmatpush2.msra.mxu0 0.0
    %2542 = vmatprep.subr.mxu0 0.0
    %2543 = vmatpush2.msra.mxu0 0.0
    %2544 = vmatprep.subr.mxu0 0.0
    %2545 = vmatpush2.msra.mxu0 0.0
    %2546 = vmatprep.subr.mxu0 0.0
    %2547 = vmatpush2.msra.mxu0 0.0
    %2548 = vmatprep.subr.mxu0 0.0
    %2549 = vmatpush2.msra.mxu0 0.0
    %2550 = vmatprep.subr.mxu0 0.0
    %2551 = vmatpush2.msra.mxu0 0.0
    %2552 = vmatprep.subr.mxu0 0.0
    %2553 = vmatpush2.msra.mxu0 0.0
    %2554 = vmatprep.subr.mxu0 0.0
    %2555 = vmatpush2.msra.mxu0 0.0
    %2556 = vmatprep.subr.mxu0 0.0
    %2557 = vmatpush2.msra.mxu0 0.0
    %2558 = vmatprep.subr.mxu0 0.0
    %2559 = vmatpush2.msra.mxu0 0.0
    %2560 = vmatprep.subr.mxu0 0.0
    %2561 = vmatpush2.msra.mxu0 0.0
    %2562 = vmatprep.subr.mxu0 0.0
    %2563 = vmatpush2.msra.mxu0 0.0
    %2564 = vmatprep.subr.mxu0 0.0
    %2565 = vmatpush2.msra.mxu0 0.0
    %2566 = vmatprep.subr.mxu0 0.0
    %2567 = vmatpush2.msra.mxu0 0.0
    %2568 = vmatprep.mubr.f32.mxu0 0.0
    %2569 = vmatmul.mubr.f32.gmra.mxu0 %v861
    %v2570 = vpop.f32.mrf.mxu0
    %v2571 = vadd.f32 0.0, %v2570
    %v2572 = vpop.f32.mrf.mxu0
    %2573 = vmatprep.mubr.f32.mxu0 0.0
    %2574 = vmatmul.mubr.f32.gmra.mxu0 %v864
    %v2575 = vpop.f32.mrf.mxu0
    %v2576 = vadd.f32 0.0, %v2575
    %v2577 = vpop.f32.mrf.mxu0
    %2578 = vmatprep.mubr.f32.mxu0 0.0
    %2579 = vmatmul.mubr.f32.gmra.mxu0 %v867
    %v2580 = vpop.f32.mrf.mxu0
    %v2581 = vadd.f32 0.0, %v2580
    %v2582 = vpop.f32.mrf.mxu0
    %2583 = vmatprep.mubr.f32.mxu0 0.0
    %2584 = vmatmul.mubr.f32.gmra.mxu0 %v870
    %v2585 = vpop.f32.mrf.mxu0
    %v2586 = vadd.f32 0.0, %v2585
    %v2587 = vpop.f32.mrf.mxu0
    %2588 = vdwg.mxu0
    %v2589 = vlaneseq
    %v2590 = vshrl.u32 %v2589, 7
    %v2591 = vsub.s32 5, %v2590
    %v2592 = vrot.slane %v607, %v2591
    %v2593 = vmul.f32 %v2592, %v2571
    %v2594 = vmul.f32 %v2592, %v2576
    %v2595 = vmul.f32 %v2592, %v2581
    %v2596 = vmul.f32 %v2592, %v2586
    %v2597 = vadd.f32 %v2500, %v2593
    %v2598 = vadd.f32 %v2501, %v2594
    %v2599 = vadd.f32 %v2502, %v2595
    %v2600 = vadd.f32 %v2503, %v2596
    %v2601 = vlaneseq
    %v2602 = vshrl.u32 %v2601, 7
    %v2603 = vsub.s32 6, %v2602
    %v2604 = vrot.slane %v296, %v2603
    %v2605 = vmul.f32 %v2604, %v2597
    %v2606 = vmul.f32 %v2604, %v2598
    %v2607 = vmul.f32 %v2604, %v2599
    %v2608 = vmul.f32 %v2604, %v2600
    %2609 = vmatprep.subr.mxu0 0.0
    %2610 = vmatpush1.msra.mxu0 0.0
    %2611 = vmatprep.subr.mxu0 0.0
    %2612 = vmatpush1.msra.mxu0 0.0
    %2613 = vmatprep.subr.mxu0 0.0
    %2614 = vmatpush1.msra.mxu0 0.0
    %2615 = vmatprep.subr.mxu0 0.0
    %2616 = vmatpush1.msra.mxu0 0.0
    %2617 = vmatprep.subr.mxu0 0.0
    %2618 = vmatpush1.msra.mxu0 0.0
    %2619 = vmatprep.subr.mxu0 0.0
    %2620 = vmatpush1.msra.mxu0 0.0
    %2621 = vmatprep.subr.mxu0 0.0
    %2622 = vmatpush1.msra.mxu0 0.0
    %2623 = vmatprep.subr.mxu0 0.0
    %2624 = vmatpush1.msra.mxu0 0.0
    %2625 = vmatprep.subr.mxu0 0.0
    %2626 = vmatpush1.msra.mxu0 0.0
    %2627 = vmatprep.subr.mxu0 0.0
    %2628 = vmatpush1.msra.mxu0 0.0
    %2629 = vmatprep.subr.mxu0 0.0
    %2630 = vmatpush1.msra.mxu0 0.0
    %2631 = vmatprep.subr.mxu0 0.0
    %2632 = vmatpush1.msra.mxu0 0.0
    %2633 = vmatprep.subr.mxu0 0.0
    %2634 = vmatpush1.msra.mxu0 %v2600
    %2635 = vmatprep.subr.mxu0 0.0
    %2636 = vmatpush1.msra.mxu0 %v2599
    %2637 = vmatprep.subr.mxu0 0.0
    %2638 = vmatpush1.msra.mxu0 %v2598
    %2639 = vmatprep.subr.mxu0 0.0
    %2640 = vmatpush1.msra.mxu0 %v2597
    %2641 = vmatprep.subr.mxu0 0.0
    %2642 = vmatpush2.msra.mxu0 0.0
    %2643 = vmatprep.subr.mxu0 0.0
    %2644 = vmatpush2.msra.mxu0 0.0
    %2645 = vmatprep.subr.mxu0 0.0
    %2646 = vmatpush2.msra.mxu0 0.0
    %2647 = vmatprep.subr.mxu0 0.0
    %2648 = vmatpush2.msra.mxu0 0.0
    %2649 = vmatprep.subr.mxu0 0.0
    %2650 = vmatpush2.msra.mxu0 0.0
    %2651 = vmatprep.subr.mxu0 0.0
    %2652 = vmatpush2.msra.mxu0 0.0
    %2653 = vmatprep.subr.mxu0 0.0
    %2654 = vmatpush2.msra.mxu0 0.0
    %2655 = vmatprep.subr.mxu0 0.0
    %2656 = vmatpush2.msra.mxu0 0.0
    %2657 = vmatprep.subr.mxu0 0.0
    %2658 = vmatpush2.msra.mxu0 0.0
    %2659 = vmatprep.subr.mxu0 0.0
    %2660 = vmatpush2.msra.mxu0 0.0
    %2661 = vmatprep.subr.mxu0 0.0
    %2662 = vmatpush2.msra.mxu0 0.0
    %2663 = vmatprep.subr.mxu0 0.0
    %2664 = vmatpush2.msra.mxu0 0.0
    %2665 = vmatprep.subr.mxu0 0.0
    %2666 = vmatpush2.msra.mxu0 0.0
    %2667 = vmatprep.subr.mxu0 0.0
    %2668 = vmatpush2.msra.mxu0 0.0
    %2669 = vmatprep.subr.mxu0 0.0
    %2670 = vmatpush2.msra.mxu0 0.0
    %2671 = vmatprep.subr.mxu0 0.0
    %2672 = vmatpush2.msra.mxu0 0.0
    %2673 = vmatprep.mubr.f32.mxu0 0.0
    %2674 = vmatmul.mubr.f32.gmra.mxu0 %v983
    %v2675 = vpop.f32.mrf.mxu0
    %v2676 = vadd.f32 0.0, %v2675
    %v2677 = vpop.f32.mrf.mxu0
    %2678 = vmatprep.mubr.f32.mxu0 0.0
    %2679 = vmatmul.mubr.f32.gmra.mxu0 %v986
    %v2680 = vpop.f32.mrf.mxu0
    %v2681 = vadd.f32 0.0, %v2680
    %v2682 = vpop.f32.mrf.mxu0
    %2683 = vmatprep.mubr.f32.mxu0 0.0
    %2684 = vmatmul.mubr.f32.gmra.mxu0 %v989
    %v2685 = vpop.f32.mrf.mxu0
    %v2686 = vadd.f32 0.0, %v2685
    %v2687 = vpop.f32.mrf.mxu0
    %2688 = vmatprep.mubr.f32.mxu0 0.0
    %2689 = vmatmul.mubr.f32.gmra.mxu0 %v992
    %v2690 = vpop.f32.mrf.mxu0
    %v2691 = vadd.f32 0.0, %v2690
    %v2692 = vpop.f32.mrf.mxu0
    %2693 = vdwg.mxu0
    %v2694 = vlaneseq
    %v2695 = vshrl.u32 %v2694, 7
    %v2696 = vsub.s32 6, %v2695
    %v2697 = vrot.slane %v607, %v2696
    %v2698 = vmul.f32 %v2697, %v2676
    %v2699 = vmul.f32 %v2697, %v2681
    %v2700 = vmul.f32 %v2697, %v2686
    %v2701 = vmul.f32 %v2697, %v2691
    %v2702 = vadd.f32 %v2605, %v2698
    %v2703 = vadd.f32 %v2606, %v2699
    %v2704 = vadd.f32 %v2607, %v2700
    %v2705 = vadd.f32 %v2608, %v2701
    %s2706 = scalar_lea.vmem %s3, 96
    %v2707 = vld [vmem:[%s2706] sm:$0xff]
    %v2708 = vld [vmem:[%s2706 + $0x8] sm:$0xff]
    %v2709 = vld [vmem:[%s2706 + $0x10] sm:$0xff]
    %v2710 = vld [vmem:[%s2706 + $0x18] sm:$0xff]
    %v2712 = vsel %vm737, %v2707, 0
    %v2715 = vsel %vm737, %v2708, 0
    %v2718 = vsel %vm737, %v2709, 0
    %v2721 = vsel %vm737, %v2710, 0
    %2723 = vmatprep.subr.mxu0 0.0
    %2724 = vmatpush1.msra.mxu0 0.0
    %2725 = vmatprep.subr.mxu0 0.0
    %2726 = vmatpush1.msra.mxu0 0.0
    %2727 = vmatprep.subr.mxu0 0.0
    %2728 = vmatpush1.msra.mxu0 0.0
    %2729 = vmatprep.subr.mxu0 0.0
    %2730 = vmatpush1.msra.mxu0 0.0
    %2731 = vmatprep.subr.mxu0 0.0
    %2732 = vmatpush1.msra.mxu0 0.0
    %2733 = vmatprep.subr.mxu0 0.0
    %2734 = vmatpush1.msra.mxu0 0.0
    %2735 = vmatprep.subr.mxu0 0.0
    %2736 = vmatpush1.msra.mxu0 0.0
    %2737 = vmatprep.subr.mxu0 0.0
    %2738 = vmatpush1.msra.mxu0 0.0
    %2739 = vmatprep.subr.mxu0 0.0
    %2740 = vmatpush1.msra.mxu0 0.0
    %2741 = vmatprep.subr.mxu0 0.0
    %2742 = vmatpush1.msra.mxu0 0.0
    %2743 = vmatprep.subr.mxu0 0.0
    %2744 = vmatpush1.msra.mxu0 0.0
    %2745 = vmatprep.subr.mxu0 0.0
    %2746 = vmatpush1.msra.mxu0 0.0
    %2747 = vmatprep.subr.mxu0 0.0
    %2748 = vmatpush1.msra.mxu0 %v2705
    %2749 = vmatprep.subr.mxu0 0.0
    %2750 = vmatpush1.msra.mxu0 %v2704
    %2751 = vmatprep.subr.mxu0 0.0
    %2752 = vmatpush1.msra.mxu0 %v2703
    %2753 = vmatprep.subr.mxu0 0.0
    %2754 = vmatpush1.msra.mxu0 %v2702
    %2755 = vmatprep.subr.mxu0 0.0
    %2756 = vmatpush2.msra.mxu0 0.0
    %2757 = vmatprep.subr.mxu0 0.0
    %2758 = vmatpush2.msra.mxu0 0.0
    %2759 = vmatprep.subr.mxu0 0.0
    %2760 = vmatpush2.msra.mxu0 0.0
    %2761 = vmatprep.subr.mxu0 0.0
    %2762 = vmatpush2.msra.mxu0 0.0
    %2763 = vmatprep.subr.mxu0 0.0
    %2764 = vmatpush2.msra.mxu0 0.0
    %2765 = vmatprep.subr.mxu0 0.0
    %2766 = vmatpush2.msra.mxu0 0.0
    %2767 = vmatprep.subr.mxu0 0.0
    %2768 = vmatpush2.msra.mxu0 0.0
    %2769 = vmatprep.subr.mxu0 0.0
    %2770 = vmatpush2.msra.mxu0 0.0
    %2771 = vmatprep.subr.mxu0 0.0
    %2772 = vmatpush2.msra.mxu0 0.0
    %2773 = vmatprep.subr.mxu0 0.0
    %2774 = vmatpush2.msra.mxu0 0.0
    %2775 = vmatprep.subr.mxu0 0.0
    %2776 = vmatpush2.msra.mxu0 0.0
    %2777 = vmatprep.subr.mxu0 0.0
    %2778 = vmatpush2.msra.mxu0 0.0
    %2779 = vmatprep.subr.mxu0 0.0
    %2780 = vmatpush2.msra.mxu0 0.0
    %2781 = vmatprep.subr.mxu0 0.0
    %2782 = vmatpush2.msra.mxu0 0.0
    %2783 = vmatprep.subr.mxu0 0.0
    %2784 = vmatpush2.msra.mxu0 0.0
    %2785 = vmatprep.subr.mxu0 0.0
    %2786 = vmatpush2.msra.mxu0 0.0
    %2787 = vmatprep.mubr.f32.mxu0 0.0
    %2788 = vmatmul.mubr.f32.gmra.mxu0 %v2712
    %v2789 = vpop.f32.mrf.mxu0
    %v2790 = vadd.f32 0.0, %v2789
    %v2791 = vpop.f32.mrf.mxu0
    %2792 = vmatprep.mubr.f32.mxu0 0.0
    %2793 = vmatmul.mubr.f32.gmra.mxu0 %v2715
    %v2794 = vpop.f32.mrf.mxu0
    %v2795 = vadd.f32 0.0, %v2794
    %v2796 = vpop.f32.mrf.mxu0
    %2797 = vmatprep.mubr.f32.mxu0 0.0
    %2798 = vmatmul.mubr.f32.gmra.mxu0 %v2718
    %v2799 = vpop.f32.mrf.mxu0
    %v2800 = vadd.f32 0.0, %v2799
    %v2801 = vpop.f32.mrf.mxu0
    %2802 = vmatprep.mubr.f32.mxu0 0.0
    %2803 = vmatmul.mubr.f32.gmra.mxu0 %v2721
    %v2804 = vpop.f32.mrf.mxu0
    %v2805 = vadd.f32 0.0, %v2804
    %v2806 = vpop.f32.mrf.mxu0
    %2807 = vdwg.mxu0
    %s2808 = scalar_lea.vmem [#allocation7], 96
    %v2809 = vld [vmem:[%s2808] sm:$0xff]
    %v2810 = vld [vmem:[%s2808 + $0x8] sm:$0xff]
    %v2811 = vld [vmem:[%s2808 + $0x10] sm:$0xff]
    %v2812 = vld [vmem:[%s2808 + $0x18] sm:$0xff]
    %v2814 = vsel %vm737, %v2809, 0
    %v2817 = vsel %vm737, %v2810, 0
    %v2820 = vsel %vm737, %v2811, 0
    %v2823 = vsel %vm737, %v2812, 0
    %2825 = vmatprep.subr.mxu0 0.0
    %2826 = vmatpush1.msra.mxu0 0.0
    %2827 = vmatprep.subr.mxu0 0.0
    %2828 = vmatpush1.msra.mxu0 0.0
    %2829 = vmatprep.subr.mxu0 0.0
    %2830 = vmatpush1.msra.mxu0 0.0
    %2831 = vmatprep.subr.mxu0 0.0
    %2832 = vmatpush1.msra.mxu0 0.0
    %2833 = vmatprep.subr.mxu0 0.0
    %2834 = vmatpush1.msra.mxu0 0.0
    %2835 = vmatprep.subr.mxu0 0.0
    %2836 = vmatpush1.msra.mxu0 0.0
    %2837 = vmatprep.subr.mxu0 0.0
    %2838 = vmatpush1.msra.mxu0 0.0
    %2839 = vmatprep.subr.mxu0 0.0
    %2840 = vmatpush1.msra.mxu0 0.0
    %2841 = vmatprep.subr.mxu0 0.0
    %2842 = vmatpush1.msra.mxu0 0.0
    %2843 = vmatprep.subr.mxu0 0.0
    %2844 = vmatpush1.msra.mxu0 0.0
    %2845 = vmatprep.subr.mxu0 0.0
    %2846 = vmatpush1.msra.mxu0 0.0
    %2847 = vmatprep.subr.mxu0 0.0
    %2848 = vmatpush1.msra.mxu0 0.0
    %2849 = vmatprep.subr.mxu0 0.0
    %2850 = vmatpush1.msra.mxu0 %v2705
    %2851 = vmatprep.subr.mxu0 0.0
    %2852 = vmatpush1.msra.mxu0 %v2704
    %2853 = vmatprep.subr.mxu0 0.0
    %2854 = vmatpush1.msra.mxu0 %v2703
    %2855 = vmatprep.subr.mxu0 0.0
    %2856 = vmatpush1.msra.mxu0 %v2702
    %2857 = vmatprep.subr.mxu0 0.0
    %2858 = vmatpush2.msra.mxu0 0.0
    %2859 = vmatprep.subr.mxu0 0.0
    %2860 = vmatpush2.msra.mxu0 0.0
    %2861 = vmatprep.subr.mxu0 0.0
    %2862 = vmatpush2.msra.mxu0 0.0
    %2863 = vmatprep.subr.mxu0 0.0
    %2864 = vmatpush2.msra.mxu0 0.0
    %2865 = vmatprep.subr.mxu0 0.0
    %2866 = vmatpush2.msra.mxu0 0.0
    %2867 = vmatprep.subr.mxu0 0.0
    %2868 = vmatpush2.msra.mxu0 0.0
    %2869 = vmatprep.subr.mxu0 0.0
    %2870 = vmatpush2.msra.mxu0 0.0
    %2871 = vmatprep.subr.mxu0 0.0
    %2872 = vmatpush2.msra.mxu0 0.0
    %2873 = vmatprep.subr.mxu0 0.0
    %2874 = vmatpush2.msra.mxu0 0.0
    %2875 = vmatprep.subr.mxu0 0.0
    %2876 = vmatpush2.msra.mxu0 0.0
    %2877 = vmatprep.subr.mxu0 0.0
    %2878 = vmatpush2.msra.mxu0 0.0
    %2879 = vmatprep.subr.mxu0 0.0
    %2880 = vmatpush2.msra.mxu0 0.0
    %2881 = vmatprep.subr.mxu0 0.0
    %2882 = vmatpush2.msra.mxu0 0.0
    %2883 = vmatprep.subr.mxu0 0.0
    %2884 = vmatpush2.msra.mxu0 0.0
    %2885 = vmatprep.subr.mxu0 0.0
    %2886 = vmatpush2.msra.mxu0 0.0
    %2887 = vmatprep.subr.mxu0 0.0
    %2888 = vmatpush2.msra.mxu0 0.0
    %2889 = vmatprep.mubr.f32.mxu0 0.0
    %2890 = vmatmul.mubr.f32.gmra.mxu0 %v2814
    %v2891 = vpop.f32.mrf.mxu0
    %v2892 = vadd.f32 0.0, %v2891
    %v2893 = vpop.f32.mrf.mxu0
    %2894 = vmatprep.mubr.f32.mxu0 0.0
    %2895 = vmatmul.mubr.f32.gmra.mxu0 %v2817
    %v2896 = vpop.f32.mrf.mxu0
    %v2897 = vadd.f32 0.0, %v2896
    %v2898 = vpop.f32.mrf.mxu0
    %2899 = vmatprep.mubr.f32.mxu0 0.0
    %2900 = vmatmul.mubr.f32.gmra.mxu0 %v2820
    %v2901 = vpop.f32.mrf.mxu0
    %v2902 = vadd.f32 0.0, %v2901
    %v2903 = vpop.f32.mrf.mxu0
    %2904 = vmatprep.mubr.f32.mxu0 0.0
    %2905 = vmatmul.mubr.f32.gmra.mxu0 %v2823
    %v2906 = vpop.f32.mrf.mxu0
    %v2907 = vadd.f32 0.0, %v2906
    %v2908 = vpop.f32.mrf.mxu0
    %2909 = vdwg.mxu0
    %v2910 = vlaneseq
    %v2911 = vshrl.u32 %v2910, 7
    %v2912 = vsub.s32 7, %v2911
    %v2913 = vrot.slane %v296, %v2912
    %v2914 = vmul.f32 %v2913, %v2790
    %v2915 = vmul.f32 %v2913, %v2795
    %v2916 = vmul.f32 %v2913, %v2800
    %v2917 = vmul.f32 %v2913, %v2805
    %v2918 = vlaneseq
    %v2919 = vshrl.u32 %v2918, 7
    %v2920 = vsub.s32 7, %v2919
    %v2921 = vrot.slane %v607, %v2920
    %v2922 = vmul.f32 %v2921, %v2892
    %v2923 = vmul.f32 %v2921, %v2897
    %v2924 = vmul.f32 %v2921, %v2902
    %v2925 = vmul.f32 %v2921, %v2907
    %v2926 = vadd.f32 %v2914, %v2922
    %v2927 = vadd.f32 %v2915, %v2923
    %v2928 = vadd.f32 %v2916, %v2924
    %v2929 = vadd.f32 %v2917, %v2925
    %v2930 = vlaneseq
    %v2931 = vshrl.u32 %v2930, 7
    %v2932 = vsub.s32 0, %v2931
    %v2933 = vrot.slane %v399, %v2932
    %v2934 = vmul.f32 %v2933, %v2926
    %v2935 = vmul.f32 %v2933, %v2927
    %v2936 = vmul.f32 %v2933, %v2928
    %v2937 = vmul.f32 %v2933, %v2929
    %2938 = vmatprep.subr.mxu0 0.0
    %2939 = vmatpush1.msra.mxu0 0.0
    %2940 = vmatprep.subr.mxu0 0.0
    %2941 = vmatpush1.msra.mxu0 0.0
    %2942 = vmatprep.subr.mxu0 0.0
    %2943 = vmatpush1.msra.mxu0 0.0
    %2944 = vmatprep.subr.mxu0 0.0
    %2945 = vmatpush1.msra.mxu0 0.0
    %2946 = vmatprep.subr.mxu0 0.0
    %2947 = vmatpush1.msra.mxu0 0.0
    %2948 = vmatprep.subr.mxu0 0.0
    %2949 = vmatpush1.msra.mxu0 0.0
    %2950 = vmatprep.subr.mxu0 0.0
    %2951 = vmatpush1.msra.mxu0 0.0
    %2952 = vmatprep.subr.mxu0 0.0
    %2953 = vmatpush1.msra.mxu0 0.0
    %2954 = vmatprep.subr.mxu0 0.0
    %2955 = vmatpush1.msra.mxu0 0.0
    %2956 = vmatprep.subr.mxu0 0.0
    %2957 = vmatpush1.msra.mxu0 0.0
    %2958 = vmatprep.subr.mxu0 0.0
    %2959 = vmatpush1.msra.mxu0 0.0
    %2960 = vmatprep.subr.mxu0 0.0
    %2961 = vmatpush1.msra.mxu0 0.0
    %2962 = vmatprep.subr.mxu0 0.0
    %2963 = vmatpush1.msra.mxu0 %v2929
    %2964 = vmatprep.subr.mxu0 0.0
    %2965 = vmatpush1.msra.mxu0 %v2928
    %2966 = vmatprep.subr.mxu0 0.0
    %2967 = vmatpush1.msra.mxu0 %v2927
    %2968 = vmatprep.subr.mxu0 0.0
    %2969 = vmatpush1.msra.mxu0 %v2926
    %2970 = vmatprep.subr.mxu0 0.0
    %2971 = vmatpush2.msra.mxu0 0.0
    %2972 = vmatprep.subr.mxu0 0.0
    %2973 = vmatpush2.msra.mxu0 0.0
    %2974 = vmatprep.subr.mxu0 0.0
    %2975 = vmatpush2.msra.mxu0 0.0
    %2976 = vmatprep.subr.mxu0 0.0
    %2977 = vmatpush2.msra.mxu0 0.0
    %2978 = vmatprep.subr.mxu0 0.0
    %2979 = vmatpush2.msra.mxu0 0.0
    %2980 = vmatprep.subr.mxu0 0.0
    %2981 = vmatpush2.msra.mxu0 0.0
    %2982 = vmatprep.subr.mxu0 0.0
    %2983 = vmatpush2.msra.mxu0 0.0
    %2984 = vmatprep.subr.mxu0 0.0
    %2985 = vmatpush2.msra.mxu0 0.0
    %2986 = vmatprep.subr.mxu0 0.0
    %2987 = vmatpush2.msra.mxu0 0.0
    %2988 = vmatprep.subr.mxu0 0.0
    %2989 = vmatpush2.msra.mxu0 0.0
    %2990 = vmatprep.subr.mxu0 0.0
    %2991 = vmatpush2.msra.mxu0 0.0
    %2992 = vmatprep.subr.mxu0 0.0
    %2993 = vmatpush2.msra.mxu0 0.0
    %2994 = vmatprep.subr.mxu0 0.0
    %2995 = vmatpush2.msra.mxu0 0.0
    %2996 = vmatprep.subr.mxu0 0.0
    %2997 = vmatpush2.msra.mxu0 0.0
    %2998 = vmatprep.subr.mxu0 0.0
    %2999 = vmatpush2.msra.mxu0 0.0
    %3000 = vmatprep.subr.mxu0 0.0
    %3001 = vmatpush2.msra.mxu0 0.0
    %3002 = vmatprep.mubr.f32.mxu0 0.0
    %3003 = vmatmul.mubr.f32.gmra.mxu0 %v739
    %v3004 = vpop.f32.mrf.mxu0
    %v3005 = vadd.f32 0.0, %v3004
    %v3006 = vpop.f32.mrf.mxu0
    %3007 = vmatprep.mubr.f32.mxu0 0.0
    %3008 = vmatmul.mubr.f32.gmra.mxu0 %v742
    %v3009 = vpop.f32.mrf.mxu0
    %v3010 = vadd.f32 0.0, %v3009
    %v3011 = vpop.f32.mrf.mxu0
    %3012 = vmatprep.mubr.f32.mxu0 0.0
    %3013 = vmatmul.mubr.f32.gmra.mxu0 %v745
    %v3014 = vpop.f32.mrf.mxu0
    %v3015 = vadd.f32 0.0, %v3014
    %v3016 = vpop.f32.mrf.mxu0
    %3017 = vmatprep.mubr.f32.mxu0 0.0
    %3018 = vmatmul.mubr.f32.gmra.mxu0 %v748
    %v3019 = vpop.f32.mrf.mxu0
    %v3020 = vadd.f32 0.0, %v3019
    %v3021 = vpop.f32.mrf.mxu0
    %3022 = vdwg.mxu0
    %v3023 = vlaneseq
    %v3024 = vshrl.u32 %v3023, 7
    %v3025 = vsub.s32 0, %v3024
    %v3026 = vrot.slane %v711, %v3025
    %v3027 = vmul.f32 %v3026, %v3005
    %v3028 = vmul.f32 %v3026, %v3010
    %v3029 = vmul.f32 %v3026, %v3015
    %v3030 = vmul.f32 %v3026, %v3020
    %v3031 = vadd.f32 %v2934, %v3027
    %v3032 = vadd.f32 %v2935, %v3028
    %v3033 = vadd.f32 %v2936, %v3029
    %v3034 = vadd.f32 %v2937, %v3030
    %v3035 = vlaneseq
    %v3036 = vshrl.u32 %v3035, 7
    %v3037 = vsub.s32 1, %v3036
    %v3038 = vrot.slane %v399, %v3037
    %v3039 = vmul.f32 %v3038, %v3031
    %v3040 = vmul.f32 %v3038, %v3032
    %v3041 = vmul.f32 %v3038, %v3033
    %v3042 = vmul.f32 %v3038, %v3034
    %3043 = vmatprep.subr.mxu0 0.0
    %3044 = vmatpush1.msra.mxu0 0.0
    %3045 = vmatprep.subr.mxu0 0.0
    %3046 = vmatpush1.msra.mxu0 0.0
    %3047 = vmatprep.subr.mxu0 0.0
    %3048 = vmatpush1.msra.mxu0 0.0
    %3049 = vmatprep.subr.mxu0 0.0
    %3050 = vmatpush1.msra.mxu0 0.0
    %3051 = vmatprep.subr.mxu0 0.0
    %3052 = vmatpush1.msra.mxu0 0.0
    %3053 = vmatprep.subr.mxu0 0.0
    %3054 = vmatpush1.msra.mxu0 0.0
    %3055 = vmatprep.subr.mxu0 0.0
    %3056 = vmatpush1.msra.mxu0 0.0
    %3057 = vmatprep.subr.mxu0 0.0
    %3058 = vmatpush1.msra.mxu0 0.0
    %3059 = vmatprep.subr.mxu0 0.0
    %3060 = vmatpush1.msra.mxu0 0.0
    %3061 = vmatprep.subr.mxu0 0.0
    %3062 = vmatpush1.msra.mxu0 0.0
    %3063 = vmatprep.subr.mxu0 0.0
    %3064 = vmatpush1.msra.mxu0 0.0
    %3065 = vmatprep.subr.mxu0 0.0
    %3066 = vmatpush1.msra.mxu0 0.0
    %3067 = vmatprep.subr.mxu0 0.0
    %3068 = vmatpush1.msra.mxu0 %v3034
    %3069 = vmatprep.subr.mxu0 0.0
    %3070 = vmatpush1.msra.mxu0 %v3033
    %3071 = vmatprep.subr.mxu0 0.0
    %3072 = vmatpush1.msra.mxu0 %v3032
    %3073 = vmatprep.subr.mxu0 0.0
    %3074 = vmatpush1.msra.mxu0 %v3031
    %3075 = vmatprep.subr.mxu0 0.0
    %3076 = vmatpush2.msra.mxu0 0.0
    %3077 = vmatprep.subr.mxu0 0.0
    %3078 = vmatpush2.msra.mxu0 0.0
    %3079 = vmatprep.subr.mxu0 0.0
    %3080 = vmatpush2.msra.mxu0 0.0
    %3081 = vmatprep.subr.mxu0 0.0
    %3082 = vmatpush2.msra.mxu0 0.0
    %3083 = vmatprep.subr.mxu0 0.0
    %3084 = vmatpush2.msra.mxu0 0.0
    %3085 = vmatprep.subr.mxu0 0.0
    %3086 = vmatpush2.msra.mxu0 0.0
    %3087 = vmatprep.subr.mxu0 0.0
    %3088 = vmatpush2.msra.mxu0 0.0
    %3089 = vmatprep.subr.mxu0 0.0
    %3090 = vmatpush2.msra.mxu0 0.0
    %3091 = vmatprep.subr.mxu0 0.0
    %3092 = vmatpush2.msra.mxu0 0.0
    %3093 = vmatprep.subr.mxu0 0.0
    %3094 = vmatpush2.msra.mxu0 0.0
    %3095 = vmatprep.subr.mxu0 0.0
    %3096 = vmatpush2.msra.mxu0 0.0
    %3097 = vmatprep.subr.mxu0 0.0
    %3098 = vmatpush2.msra.mxu0 0.0
    %3099 = vmatprep.subr.mxu0 0.0
    %3100 = vmatpush2.msra.mxu0 0.0
    %3101 = vmatprep.subr.mxu0 0.0
    %3102 = vmatpush2.msra.mxu0 0.0
    %3103 = vmatprep.subr.mxu0 0.0
    %3104 = vmatpush2.msra.mxu0 0.0
    %3105 = vmatprep.subr.mxu0 0.0
    %3106 = vmatpush2.msra.mxu0 0.0
    %3107 = vmatprep.mubr.f32.mxu0 0.0
    %3108 = vmatmul.mubr.f32.gmra.mxu0 %v861
    %v3109 = vpop.f32.mrf.mxu0
    %v3110 = vadd.f32 0.0, %v3109
    %v3111 = vpop.f32.mrf.mxu0
    %3112 = vmatprep.mubr.f32.mxu0 0.0
    %3113 = vmatmul.mubr.f32.gmra.mxu0 %v864
    %v3114 = vpop.f32.mrf.mxu0
    %v3115 = vadd.f32 0.0, %v3114
    %v3116 = vpop.f32.mrf.mxu0
    %3117 = vmatprep.mubr.f32.mxu0 0.0
    %3118 = vmatmul.mubr.f32.gmra.mxu0 %v867
    %v3119 = vpop.f32.mrf.mxu0
    %v3120 = vadd.f32 0.0, %v3119
    %v3121 = vpop.f32.mrf.mxu0
    %3122 = vmatprep.mubr.f32.mxu0 0.0
    %3123 = vmatmul.mubr.f32.gmra.mxu0 %v870
    %v3124 = vpop.f32.mrf.mxu0
    %v3125 = vadd.f32 0.0, %v3124
    %v3126 = vpop.f32.mrf.mxu0
    %3127 = vdwg.mxu0
    %v3128 = vlaneseq
    %v3129 = vshrl.u32 %v3128, 7
    %v3130 = vsub.s32 1, %v3129
    %v3131 = vrot.slane %v711, %v3130
    %v3132 = vmul.f32 %v3131, %v3110
    %v3133 = vmul.f32 %v3131, %v3115
    %v3134 = vmul.f32 %v3131, %v3120
    %v3135 = vmul.f32 %v3131, %v3125
    %v3136 = vadd.f32 %v3039, %v3132
    %v3137 = vadd.f32 %v3040, %v3133
    %v3138 = vadd.f32 %v3041, %v3134
    %v3139 = vadd.f32 %v3042, %v3135
    %v3140 = vlaneseq
    %v3141 = vshrl.u32 %v3140, 7
    %v3142 = vsub.s32 2, %v3141
    %v3143 = vrot.slane %v399, %v3142
    %v3144 = vmul.f32 %v3143, %v3136
    %v3145 = vmul.f32 %v3143, %v3137
    %v3146 = vmul.f32 %v3143, %v3138
    %v3147 = vmul.f32 %v3143, %v3139
    %3148 = vmatprep.subr.mxu0 0.0
    %3149 = vmatpush1.msra.mxu0 0.0
    %3150 = vmatprep.subr.mxu0 0.0
    %3151 = vmatpush1.msra.mxu0 0.0
    %3152 = vmatprep.subr.mxu0 0.0
    %3153 = vmatpush1.msra.mxu0 0.0
    %3154 = vmatprep.subr.mxu0 0.0
    %3155 = vmatpush1.msra.mxu0 0.0
    %3156 = vmatprep.subr.mxu0 0.0
    %3157 = vmatpush1.msra.mxu0 0.0
    %3158 = vmatprep.subr.mxu0 0.0
    %3159 = vmatpush1.msra.mxu0 0.0
    %3160 = vmatprep.subr.mxu0 0.0
    %3161 = vmatpush1.msra.mxu0 0.0
    %3162 = vmatprep.subr.mxu0 0.0
    %3163 = vmatpush1.msra.mxu0 0.0
    %3164 = vmatprep.subr.mxu0 0.0
    %3165 = vmatpush1.msra.mxu0 0.0
    %3166 = vmatprep.subr.mxu0 0.0
    %3167 = vmatpush1.msra.mxu0 0.0
    %3168 = vmatprep.subr.mxu0 0.0
    %3169 = vmatpush1.msra.mxu0 0.0
    %3170 = vmatprep.subr.mxu0 0.0
    %3171 = vmatpush1.msra.mxu0 0.0
    %3172 = vmatprep.subr.mxu0 0.0
    %3173 = vmatpush1.msra.mxu0 %v3139
    %3174 = vmatprep.subr.mxu0 0.0
    %3175 = vmatpush1.msra.mxu0 %v3138
    %3176 = vmatprep.subr.mxu0 0.0
    %3177 = vmatpush1.msra.mxu0 %v3137
    %3178 = vmatprep.subr.mxu0 0.0
    %3179 = vmatpush1.msra.mxu0 %v3136
    %3180 = vmatprep.subr.mxu0 0.0
    %3181 = vmatpush2.msra.mxu0 0.0
    %3182 = vmatprep.subr.mxu0 0.0
    %3183 = vmatpush2.msra.mxu0 0.0
    %3184 = vmatprep.subr.mxu0 0.0
    %3185 = vmatpush2.msra.mxu0 0.0
    %3186 = vmatprep.subr.mxu0 0.0
    %3187 = vmatpush2.msra.mxu0 0.0
    %3188 = vmatprep.subr.mxu0 0.0
    %3189 = vmatpush2.msra.mxu0 0.0
    %3190 = vmatprep.subr.mxu0 0.0
    %3191 = vmatpush2.msra.mxu0 0.0
    %3192 = vmatprep.subr.mxu0 0.0
    %3193 = vmatpush2.msra.mxu0 0.0
    %3194 = vmatprep.subr.mxu0 0.0
    %3195 = vmatpush2.msra.mxu0 0.0
    %3196 = vmatprep.subr.mxu0 0.0
    %3197 = vmatpush2.msra.mxu0 0.0
    %3198 = vmatprep.subr.mxu0 0.0
    %3199 = vmatpush2.msra.mxu0 0.0
    %3200 = vmatprep.subr.mxu0 0.0
    %3201 = vmatpush2.msra.mxu0 0.0
    %3202 = vmatprep.subr.mxu0 0.0
    %3203 = vmatpush2.msra.mxu0 0.0
    %3204 = vmatprep.subr.mxu0 0.0
    %3205 = vmatpush2.msra.mxu0 0.0
    %3206 = vmatprep.subr.mxu0 0.0
    %3207 = vmatpush2.msra.mxu0 0.0
    %3208 = vmatprep.subr.mxu0 0.0
    %3209 = vmatpush2.msra.mxu0 0.0
    %3210 = vmatprep.subr.mxu0 0.0
    %3211 = vmatpush2.msra.mxu0 0.0
    %3212 = vmatprep.mubr.f32.mxu0 0.0
    %3213 = vmatmul.mubr.f32.gmra.mxu0 %v983
    %v3214 = vpop.f32.mrf.mxu0
    %v3215 = vadd.f32 0.0, %v3214
    %v3216 = vpop.f32.mrf.mxu0
    %3217 = vmatprep.mubr.f32.mxu0 0.0
    %3218 = vmatmul.mubr.f32.gmra.mxu0 %v986
    %v3219 = vpop.f32.mrf.mxu0
    %v3220 = vadd.f32 0.0, %v3219
    %v3221 = vpop.f32.mrf.mxu0
    %3222 = vmatprep.mubr.f32.mxu0 0.0
    %3223 = vmatmul.mubr.f32.gmra.mxu0 %v989
    %v3224 = vpop.f32.mrf.mxu0
    %v3225 = vadd.f32 0.0, %v3224
    %v3226 = vpop.f32.mrf.mxu0
    %3227 = vmatprep.mubr.f32.mxu0 0.0
    %3228 = vmatmul.mubr.f32.gmra.mxu0 %v992
    %v3229 = vpop.f32.mrf.mxu0
    %v3230 = vadd.f32 0.0, %v3229
    %v3231 = vpop.f32.mrf.mxu0
    %3232 = vdwg.mxu0
    %v3233 = vlaneseq
    %v3234 = vshrl.u32 %v3233, 7
    %v3235 = vsub.s32 2, %v3234
    %v3236 = vrot.slane %v711, %v3235
    %v3237 = vmul.f32 %v3236, %v3215
    %v3238 = vmul.f32 %v3236, %v3220
    %v3239 = vmul.f32 %v3236, %v3225
    %v3240 = vmul.f32 %v3236, %v3230
    %v3241 = vadd.f32 %v3144, %v3237
    %v3242 = vadd.f32 %v3145, %v3238
    %v3243 = vadd.f32 %v3146, %v3239
    %v3244 = vadd.f32 %v3147, %v3240
    %s3245 = scalar_lea.vmem %s3, 128
    %v3246 = vld [vmem:[%s3245] sm:$0xff]
    %v3247 = vld [vmem:[%s3245 + $0x8] sm:$0xff]
    %v3248 = vld [vmem:[%s3245 + $0x10] sm:$0xff]
    %v3249 = vld [vmem:[%s3245 + $0x18] sm:$0xff]
    %v3251 = vsel %vm737, %v3246, 0
    %v3254 = vsel %vm737, %v3247, 0
    %v3257 = vsel %vm737, %v3248, 0
    %v3260 = vsel %vm737, %v3249, 0
    %3262 = vmatprep.subr.mxu0 0.0
    %3263 = vmatpush1.msra.mxu0 0.0
    %3264 = vmatprep.subr.mxu0 0.0
    %3265 = vmatpush1.msra.mxu0 0.0
    %3266 = vmatprep.subr.mxu0 0.0
    %3267 = vmatpush1.msra.mxu0 0.0
    %3268 = vmatprep.subr.mxu0 0.0
    %3269 = vmatpush1.msra.mxu0 0.0
    %3270 = vmatprep.subr.mxu0 0.0
    %3271 = vmatpush1.msra.mxu0 0.0
    %3272 = vmatprep.subr.mxu0 0.0
    %3273 = vmatpush1.msra.mxu0 0.0
    %3274 = vmatprep.subr.mxu0 0.0
    %3275 = vmatpush1.msra.mxu0 0.0
    %3276 = vmatprep.subr.mxu0 0.0
    %3277 = vmatpush1.msra.mxu0 0.0
    %3278 = vmatprep.subr.mxu0 0.0
    %3279 = vmatpush1.msra.mxu0 0.0
    %3280 = vmatprep.subr.mxu0 0.0
    %3281 = vmatpush1.msra.mxu0 0.0
    %3282 = vmatprep.subr.mxu0 0.0
    %3283 = vmatpush1.msra.mxu0 0.0
    %3284 = vmatprep.subr.mxu0 0.0
    %3285 = vmatpush1.msra.mxu0 0.0
    %3286 = vmatprep.subr.mxu0 0.0
    %3287 = vmatpush1.msra.mxu0 %v3244
    %3288 = vmatprep.subr.mxu0 0.0
    %3289 = vmatpush1.msra.mxu0 %v3243
    %3290 = vmatprep.subr.mxu0 0.0
    %3291 = vmatpush1.msra.mxu0 %v3242
    %3292 = vmatprep.subr.mxu0 0.0
    %3293 = vmatpush1.msra.mxu0 %v3241
    %3294 = vmatprep.subr.mxu0 0.0
    %3295 = vmatpush2.msra.mxu0 0.0
    %3296 = vmatprep.subr.mxu0 0.0
    %3297 = vmatpush2.msra.mxu0 0.0
    %3298 = vmatprep.subr.mxu0 0.0
    %3299 = vmatpush2.msra.mxu0 0.0
    %3300 = vmatprep.subr.mxu0 0.0
    %3301 = vmatpush2.msra.mxu0 0.0
    %3302 = vmatprep.subr.mxu0 0.0
    %3303 = vmatpush2.msra.mxu0 0.0
    %3304 = vmatprep.subr.mxu0 0.0
    %3305 = vmatpush2.msra.mxu0 0.0
    %3306 = vmatprep.subr.mxu0 0.0
    %3307 = vmatpush2.msra.mxu0 0.0
    %3308 = vmatprep.subr.mxu0 0.0
    %3309 = vmatpush2.msra.mxu0 0.0
    %3310 = vmatprep.subr.mxu0 0.0
    %3311 = vmatpush2.msra.mxu0 0.0
    %3312 = vmatprep.subr.mxu0 0.0
    %3313 = vmatpush2.msra.mxu0 0.0
    %3314 = vmatprep.subr.mxu0 0.0
    %3315 = vmatpush2.msra.mxu0 0.0
    %3316 = vmatprep.subr.mxu0 0.0
    %3317 = vmatpush2.msra.mxu0 0.0
    %3318 = vmatprep.subr.mxu0 0.0
    %3319 = vmatpush2.msra.mxu0 0.0
    %3320 = vmatprep.subr.mxu0 0.0
    %3321 = vmatpush2.msra.mxu0 0.0
    %3322 = vmatprep.subr.mxu0 0.0
    %3323 = vmatpush2.msra.mxu0 0.0
    %3324 = vmatprep.subr.mxu0 0.0
    %3325 = vmatpush2.msra.mxu0 0.0
    %3326 = vmatprep.mubr.f32.mxu0 0.0
    %3327 = vmatmul.mubr.f32.gmra.mxu0 %v3251
    %v3328 = vpop.f32.mrf.mxu0
    %v3329 = vadd.f32 0.0, %v3328
    %v3330 = vpop.f32.mrf.mxu0
    %3331 = vmatprep.mubr.f32.mxu0 0.0
    %3332 = vmatmul.mubr.f32.gmra.mxu0 %v3254
    %v3333 = vpop.f32.mrf.mxu0
    %v3334 = vadd.f32 0.0, %v3333
    %v3335 = vpop.f32.mrf.mxu0
    %3336 = vmatprep.mubr.f32.mxu0 0.0
    %3337 = vmatmul.mubr.f32.gmra.mxu0 %v3257
    %v3338 = vpop.f32.mrf.mxu0
    %v3339 = vadd.f32 0.0, %v3338
    %v3340 = vpop.f32.mrf.mxu0
    %3341 = vmatprep.mubr.f32.mxu0 0.0
    %3342 = vmatmul.mubr.f32.gmra.mxu0 %v3260
    %v3343 = vpop.f32.mrf.mxu0
    %v3344 = vadd.f32 0.0, %v3343
    %v3345 = vpop.f32.mrf.mxu0
    %3346 = vdwg.mxu0
    %s3347 = scalar_lea.vmem [#allocation7], 128
    %v3348 = vld [vmem:[%s3347] sm:$0xff]
    %v3349 = vld [vmem:[%s3347 + $0x8] sm:$0xff]
    %v3350 = vld [vmem:[%s3347 + $0x10] sm:$0xff]
    %v3351 = vld [vmem:[%s3347 + $0x18] sm:$0xff]
    %v3353 = vsel %vm737, %v3348, 0
    %v3356 = vsel %vm737, %v3349, 0
    %v3359 = vsel %vm737, %v3350, 0
    %v3362 = vsel %vm737, %v3351, 0
    %3364 = vmatprep.subr.mxu0 0.0
    %3365 = vmatpush1.msra.mxu0 0.0
    %3366 = vmatprep.subr.mxu0 0.0
    %3367 = vmatpush1.msra.mxu0 0.0
    %3368 = vmatprep.subr.mxu0 0.0
    %3369 = vmatpush1.msra.mxu0 0.0
    %3370 = vmatprep.subr.mxu0 0.0
    %3371 = vmatpush1.msra.mxu0 0.0
    %3372 = vmatprep.subr.mxu0 0.0
    %3373 = vmatpush1.msra.mxu0 0.0
    %3374 = vmatprep.subr.mxu0 0.0
    %3375 = vmatpush1.msra.mxu0 0.0
    %3376 = vmatprep.subr.mxu0 0.0
    %3377 = vmatpush1.msra.mxu0 0.0
    %3378 = vmatprep.subr.mxu0 0.0
    %3379 = vmatpush1.msra.mxu0 0.0
    %3380 = vmatprep.subr.mxu0 0.0
    %3381 = vmatpush1.msra.mxu0 0.0
    %3382 = vmatprep.subr.mxu0 0.0
    %3383 = vmatpush1.msra.mxu0 0.0
    %3384 = vmatprep.subr.mxu0 0.0
    %3385 = vmatpush1.msra.mxu0 0.0
    %3386 = vmatprep.subr.mxu0 0.0
    %3387 = vmatpush1.msra.mxu0 0.0
    %3388 = vmatprep.subr.mxu0 0.0
    %3389 = vmatpush1.msra.mxu0 %v3244
    %3390 = vmatprep.subr.mxu0 0.0
    %3391 = vmatpush1.msra.mxu0 %v3243
    %3392 = vmatprep.subr.mxu0 0.0
    %3393 = vmatpush1.msra.mxu0 %v3242
    %3394 = vmatprep.subr.mxu0 0.0
    %3395 = vmatpush1.msra.mxu0 %v3241
    %3396 = vmatprep.subr.mxu0 0.0
    %3397 = vmatpush2.msra.mxu0 0.0
    %3398 = vmatprep.subr.mxu0 0.0
    %3399 = vmatpush2.msra.mxu0 0.0
    %3400 = vmatprep.subr.mxu0 0.0
    %3401 = vmatpush2.msra.mxu0 0.0
    %3402 = vmatprep.subr.mxu0 0.0
    %3403 = vmatpush2.msra.mxu0 0.0
    %3404 = vmatprep.subr.mxu0 0.0
    %3405 = vmatpush2.msra.mxu0 0.0
    %3406 = vmatprep.subr.mxu0 0.0
    %3407 = vmatpush2.msra.mxu0 0.0
    %3408 = vmatprep.subr.mxu0 0.0
    %3409 = vmatpush2.msra.mxu0 0.0
    %3410 = vmatprep.subr.mxu0 0.0
    %3411 = vmatpush2.msra.mxu0 0.0
    %3412 = vmatprep.subr.mxu0 0.0
    %3413 = vmatpush2.msra.mxu0 0.0
    %3414 = vmatprep.subr.mxu0 0.0
    %3415 = vmatpush2.msra.mxu0 0.0
    %3416 = vmatprep.subr.mxu0 0.0
    %3417 = vmatpush2.msra.mxu0 0.0
    %3418 = vmatprep.subr.mxu0 0.0
    %3419 = vmatpush2.msra.mxu0 0.0
    %3420 = vmatprep.subr.mxu0 0.0
    %3421 = vmatpush2.msra.mxu0 0.0
    %3422 = vmatprep.subr.mxu0 0.0
    %3423 = vmatpush2.msra.mxu0 0.0
    %3424 = vmatprep.subr.mxu0 0.0
    %3425 = vmatpush2.msra.mxu0 0.0
    %3426 = vmatprep.subr.mxu0 0.0
    %3427 = vmatpush2.msra.mxu0 0.0
    %3428 = vmatprep.mubr.f32.mxu0 0.0
    %3429 = vmatmul.mubr.f32.gmra.mxu0 %v3353
    %v3430 = vpop.f32.mrf.mxu0
    %v3431 = vadd.f32 0.0, %v3430
    %v3432 = vpop.f32.mrf.mxu0
    %3433 = vmatprep.mubr.f32.mxu0 0.0
    %3434 = vmatmul.mubr.f32.gmra.mxu0 %v3356
    %v3435 = vpop.f32.mrf.mxu0
    %v3436 = vadd.f32 0.0, %v3435
    %v3437 = vpop.f32.mrf.mxu0
    %3438 = vmatprep.mubr.f32.mxu0 0.0
    %3439 = vmatmul.mubr.f32.gmra.mxu0 %v3359
    %v3440 = vpop.f32.mrf.mxu0
    %v3441 = vadd.f32 0.0, %v3440
    %v3442 = vpop.f32.mrf.mxu0
    %3443 = vmatprep.mubr.f32.mxu0 0.0
    %3444 = vmatmul.mubr.f32.gmra.mxu0 %v3362
    %v3445 = vpop.f32.mrf.mxu0
    %v3446 = vadd.f32 0.0, %v3445
    %v3447 = vpop.f32.mrf.mxu0
    %3448 = vdwg.mxu0
    %v3449 = vlaneseq
    %v3450 = vshrl.u32 %v3449, 7
    %v3451 = vsub.s32 3, %v3450
    %v3452 = vrot.slane %v399, %v3451
    %v3453 = vmul.f32 %v3452, %v3329
    %v3454 = vmul.f32 %v3452, %v3334
    %v3455 = vmul.f32 %v3452, %v3339
    %v3456 = vmul.f32 %v3452, %v3344
    %v3457 = vlaneseq
    %v3458 = vshrl.u32 %v3457, 7
    %v3459 = vsub.s32 3, %v3458
    %v3460 = vrot.slane %v711, %v3459
    %v3461 = vmul.f32 %v3460, %v3431
    %v3462 = vmul.f32 %v3460, %v3436
    %v3463 = vmul.f32 %v3460, %v3441
    %v3464 = vmul.f32 %v3460, %v3446
    %v3465 = vadd.f32 %v3453, %v3461
    %v3466 = vadd.f32 %v3454, %v3462
    %v3467 = vadd.f32 %v3455, %v3463
    %v3468 = vadd.f32 %v3456, %v3464
    %v3469 = vld [vmem:[%s5] sm:$0xff]
    %v3470 = vld [vmem:[%s5 + $0x8] sm:$0xff]
    %v3471 = vld [vmem:[%s5 + $0x10] sm:$0xff]
    %v3472 = vld [vmem:[%s5 + $0x18] sm:$0xff]
    %v3473 = vld [vmem:[%s5 + $0x20] sm:$0xff]
    %v3474 = vld [vmem:[%s5 + $0x28] sm:$0xff]
    %v3475 = vld [vmem:[%s5 + $0x30] sm:$0xff]
    %v3476 = vld [vmem:[%s5 + $0x38] sm:$0xff]
    %v3477 = vld [vmem:[%s5 + $0x40] sm:$0xff]
    %v3478 = vld [vmem:[%s5 + $0x48] sm:$0xff]
    %v3479 = vld [vmem:[%s5 + $0x50] sm:$0xff]
    %v3480 = vld [vmem:[%s5 + $0x58] sm:$0xff]
    %v3481 = vld [vmem:[%s5 + $0x60] sm:$0xff]
    %v3482 = vld [vmem:[%s5 + $0x68] sm:$0xff]
    %v3483 = vld [vmem:[%s5 + $0x70] sm:$0xff]
    %v3484 = vld [vmem:[%s5 + $0x78] sm:$0xff]
    %v3485 = vmul.f32 %v3465, %v3465
    %v3486 = vmul.f32 %v3466, %v3466
    %v3487 = vmul.f32 %v3467, %v3467
    %v3488 = vmul.f32 %v3468, %v3468
    %v3490 = vsel %vm737, %v3469, 0
    %v3493 = vsel %vm737, %v3470, 0
    %v3496 = vsel %vm737, %v3471, 0
    %v3499 = vsel %vm737, %v3472, 0
    %v3502 = vsel %vm737, %v3473, 0
    %v3505 = vsel %vm737, %v3474, 0
    %v3508 = vsel %vm737, %v3475, 0
    %v3511 = vsel %vm737, %v3476, 0
    %v3514 = vsel %vm737, %v3477, 0
    %v3517 = vsel %vm737, %v3478, 0
    %v3520 = vsel %vm737, %v3479, 0
    %v3523 = vsel %vm737, %v3480, 0
    %v3526 = vsel %vm737, %v3481, 0
    %v3529 = vsel %vm737, %v3482, 0
    %v3532 = vsel %vm737, %v3483, 0
    %v3535 = vsel %vm737, %v3484, 0
    %3537 = vmatprep.subr.mxu0 0.0
    %3538 = vmatpush1.msra.mxu0 0.0
    %3539 = vmatprep.subr.mxu0 0.0
    %3540 = vmatpush1.msra.mxu0 0.0
    %3541 = vmatprep.subr.mxu0 0.0
    %3542 = vmatpush1.msra.mxu0 0.0
    %3543 = vmatprep.subr.mxu0 0.0
    %3544 = vmatpush1.msra.mxu0 0.0
    %3545 = vmatprep.subr.mxu0 0.0
    %3546 = vmatpush1.msra.mxu0 0.0
    %3547 = vmatprep.subr.mxu0 0.0
    %3548 = vmatpush1.msra.mxu0 0.0
    %3549 = vmatprep.subr.mxu0 0.0
    %3550 = vmatpush1.msra.mxu0 0.0
    %3551 = vmatprep.subr.mxu0 0.0
    %3552 = vmatpush1.msra.mxu0 0.0
    %3553 = vmatprep.subr.mxu0 0.0
    %3554 = vmatpush1.msra.mxu0 0.0
    %3555 = vmatprep.subr.mxu0 0.0
    %3556 = vmatpush1.msra.mxu0 0.0
    %3557 = vmatprep.subr.mxu0 0.0
    %3558 = vmatpush1.msra.mxu0 0.0
    %3559 = vmatprep.subr.mxu0 0.0
    %3560 = vmatpush1.msra.mxu0 0.0
    %3561 = vmatprep.subr.mxu0 0.0
    %3562 = vmatpush1.msra.mxu0 %v3488
    %3563 = vmatprep.subr.mxu0 0.0
    %3564 = vmatpush1.msra.mxu0 %v3487
    %3565 = vmatprep.subr.mxu0 0.0
    %3566 = vmatpush1.msra.mxu0 %v3486
    %3567 = vmatprep.subr.mxu0 0.0
    %3568 = vmatpush1.msra.mxu0 %v3485
    %3569 = vmatprep.subr.mxu0 0.0
    %3570 = vmatpush2.msra.mxu0 0.0
    %3571 = vmatprep.subr.mxu0 0.0
    %3572 = vmatpush2.msra.mxu0 0.0
    %3573 = vmatprep.subr.mxu0 0.0
    %3574 = vmatpush2.msra.mxu0 0.0
    %3575 = vmatprep.subr.mxu0 0.0
    %3576 = vmatpush2.msra.mxu0 0.0
    %3577 = vmatprep.subr.mxu0 0.0
    %3578 = vmatpush2.msra.mxu0 0.0
    %3579 = vmatprep.subr.mxu0 0.0
    %3580 = vmatpush2.msra.mxu0 0.0
    %3581 = vmatprep.subr.mxu0 0.0
    %3582 = vmatpush2.msra.mxu0 0.0
    %3583 = vmatprep.subr.mxu0 0.0
    %3584 = vmatpush2.msra.mxu0 0.0
    %3585 = vmatprep.subr.mxu0 0.0
    %3586 = vmatpush2.msra.mxu0 0.0
    %3587 = vmatprep.subr.mxu0 0.0
    %3588 = vmatpush2.msra.mxu0 0.0
    %3589 = vmatprep.subr.mxu0 0.0
    %3590 = vmatpush2.msra.mxu0 0.0
    %3591 = vmatprep.subr.mxu0 0.0
    %3592 = vmatpush2.msra.mxu0 0.0
    %3593 = vmatprep.subr.mxu0 0.0
    %3594 = vmatpush2.msra.mxu0 0.0
    %3595 = vmatprep.subr.mxu0 0.0
    %3596 = vmatpush2.msra.mxu0 0.0
    %3597 = vmatprep.subr.mxu0 0.0
    %3598 = vmatpush2.msra.mxu0 0.0
    %3599 = vmatprep.subr.mxu0 0.0
    %3600 = vmatpush2.msra.mxu0 0.0
    %3601 = vmatprep.mubr.f32.mxu0 0.0
    %3602 = vmatmul.mubr.f32.gmra.mxu0 %v3490
    %v3603 = vpop.f32.mrf.mxu0
    %v3604 = vadd.f32 0.0, %v3603
    %v3605 = vpop.f32.mrf.mxu0
    %3606 = vmatprep.mubr.f32.mxu0 0.0
    %3607 = vmatmul.mubr.f32.gmra.mxu0 %v3493
    %v3608 = vpop.f32.mrf.mxu0
    %v3609 = vadd.f32 0.0, %v3608
    %v3610 = vpop.f32.mrf.mxu0
    %3611 = vmatprep.mubr.f32.mxu0 0.0
    %3612 = vmatmul.mubr.f32.gmra.mxu0 %v3496
    %v3613 = vpop.f32.mrf.mxu0
    %v3614 = vadd.f32 0.0, %v3613
    %v3615 = vpop.f32.mrf.mxu0
    %3616 = vmatprep.mubr.f32.mxu0 0.0
    %3617 = vmatmul.mubr.f32.gmra.mxu0 %v3499
    %v3618 = vpop.f32.mrf.mxu0
    %v3619 = vadd.f32 0.0, %v3618
    %v3620 = vpop.f32.mrf.mxu0
    %3621 = vmatprep.mubr.f32.mxu0 0.0
    %3622 = vmatmul.mubr.f32.gmra.mxu0 %v3502
    %v3623 = vpop.f32.mrf.mxu0
    %v3624 = vadd.f32 0.0, %v3623
    %v3625 = vpop.f32.mrf.mxu0
    %3626 = vmatprep.mubr.f32.mxu0 0.0
    %3627 = vmatmul.mubr.f32.gmra.mxu0 %v3505
    %v3628 = vpop.f32.mrf.mxu0
    %v3629 = vadd.f32 0.0, %v3628
    %v3630 = vpop.f32.mrf.mxu0
    %3631 = vmatprep.mubr.f32.mxu0 0.0
    %3632 = vmatmul.mubr.f32.gmra.mxu0 %v3508
    %v3633 = vpop.f32.mrf.mxu0
    %v3634 = vadd.f32 0.0, %v3633
    %v3635 = vpop.f32.mrf.mxu0
    %3636 = vmatprep.mubr.f32.mxu0 0.0
    %3637 = vmatmul.mubr.f32.gmra.mxu0 %v3511
    %v3638 = vpop.f32.mrf.mxu0
    %v3639 = vadd.f32 0.0, %v3638
    %v3640 = vpop.f32.mrf.mxu0
    %3641 = vmatprep.mubr.f32.mxu0 0.0
    %3642 = vmatmul.mubr.f32.gmra.mxu0 %v3514
    %v3643 = vpop.f32.mrf.mxu0
    %v3644 = vadd.f32 0.0, %v3643
    %v3645 = vpop.f32.mrf.mxu0
    %3646 = vmatprep.mubr.f32.mxu0 0.0
    %3647 = vmatmul.mubr.f32.gmra.mxu0 %v3517
    %v3648 = vpop.f32.mrf.mxu0
    %v3649 = vadd.f32 0.0, %v3648
    %v3650 = vpop.f32.mrf.mxu0
    %3651 = vmatprep.mubr.f32.mxu0 0.0
    %3652 = vmatmul.mubr.f32.gmra.mxu0 %v3520
    %v3653 = vpop.f32.mrf.mxu0
    %v3654 = vadd.f32 0.0, %v3653
    %v3655 = vpop.f32.mrf.mxu0
    %3656 = vmatprep.mubr.f32.mxu0 0.0
    %3657 = vmatmul.mubr.f32.gmra.mxu0 %v3523
    %v3658 = vpop.f32.mrf.mxu0
    %v3659 = vadd.f32 0.0, %v3658
    %v3660 = vpop.f32.mrf.mxu0
    %3661 = vmatprep.mubr.f32.mxu0 0.0
    %3662 = vmatmul.mubr.f32.gmra.mxu0 %v3526
    %v3663 = vpop.f32.mrf.mxu0
    %v3664 = vadd.f32 0.0, %v3663
    %v3665 = vpop.f32.mrf.mxu0
    %3666 = vmatprep.mubr.f32.mxu0 0.0
    %3667 = vmatmul.mubr.f32.gmra.mxu0 %v3529
    %v3668 = vpop.f32.mrf.mxu0
    %v3669 = vadd.f32 0.0, %v3668
    %v3670 = vpop.f32.mrf.mxu0
    %3671 = vmatprep.mubr.f32.mxu0 0.0
    %3672 = vmatmul.mubr.f32.gmra.mxu0 %v3532
    %v3673 = vpop.f32.mrf.mxu0
    %v3674 = vadd.f32 0.0, %v3673
    %v3675 = vpop.f32.mrf.mxu0
    %3676 = vmatprep.mubr.f32.mxu0 0.0
    %3677 = vmatmul.mubr.f32.gmra.mxu0 %v3535
    %v3678 = vpop.f32.mrf.mxu0
    %v3679 = vadd.f32 0.0, %v3678
    %v3680 = vpop.f32.mrf.mxu0
    %3681 = vdwg.mxu0
    %3682 = vst [vmem:[#allocation8] sm:$0xff] %v3604
    %3683 = vst [vmem:[#allocation8 + $0x8] sm:$0xff] %v3609
    %3684 = vst [vmem:[#allocation8 + $0x10] sm:$0xff] %v3614
    %3685 = vst [vmem:[#allocation8 + $0x18] sm:$0xff] %v3619
    %3686 = vst [vmem:[#allocation8 + $0x20] sm:$0xff] %v3624
    %3687 = vst [vmem:[#allocation8 + $0x28] sm:$0xff] %v3629
    %3688 = vst [vmem:[#allocation8 + $0x30] sm:$0xff] %v3634
    %3689 = vst [vmem:[#allocation8 + $0x38] sm:$0xff] %v3639
    %3690 = vst [vmem:[#allocation8 + $0x40] sm:$0xff] %v3644
    %3691 = vst [vmem:[#allocation8 + $0x48] sm:$0xff] %v3649
    %3692 = vst [vmem:[#allocation8 + $0x50] sm:$0xff] %v3654
    %3693 = vst [vmem:[#allocation8 + $0x58] sm:$0xff] %v3659
    %3694 = vst [vmem:[#allocation8 + $0x60] sm:$0xff] %v3664
    %3695 = vst [vmem:[#allocation8 + $0x68] sm:$0xff] %v3669
    %3696 = vst [vmem:[#allocation8 + $0x70] sm:$0xff] %v3674
    %3697 = vst [vmem:[#allocation8 + $0x78] sm:$0xff] %v3679
    // Predicated region
    $region38: #{tpu_custom_call.1} parent=1 // pred_check
      _
    $region39: #{tpu_custom_call.1} parent=1 // pred_check_branch
      %3699 = sbr.rel (0) target = $region41
    $region40: #{tpu_custom_call.1} parent=1 // pred_region
      %s3701 = ssub.s32 2048, 2048
      %3702 = vsyncadd [#allocation4], %s3701
      %s3703 = sshll.u32 [#allocation8], 4
      %s3704 = int_to_ptr.vmem [resolvable:$true] %s3703
      %3709 = dma.vmem_to_hbm [thread:$0]  %s3704, 2048, %s6, [#allocation4], 128, 128, 8
    $region41: #{tpu_custom_call.1} parent=1 // pred_fallthru
      _
    // Predicated region
    $region42: #{tpu_custom_call.1} parent=1 // pred_check
      _
    $region43: #{tpu_custom_call.1} parent=1 // pred_check_branch
      %3711 = sbr.rel (0) target = $region45
    $region44: #{tpu_custom_call.1} parent=1 // pred_region
      %3712 = dma.done [#allocation4], 2048
    $region45: #{tpu_custom_call.1} parent=1 // pred_fallthru
      _
    %3713 = vsyncpa [#allocation3], 1
    %3714 = vsyncpa [#allocation6], 1
    %3715 = vsyncpa [#allocation4], 1

</llo_original>
